<compile_context>
chip_gen: v5e
topology: v5e:2x2
jax: 0.10.0
libtpu: 0.0.40
codegen_flags: <defaults>
</compile_context>

<pallas_src>
import functools

import jax
import jax.numpy as jnp
from jax import lax
from jax.experimental import pallas as pl
from jax.experimental.pallas import tpu as pltpu


# ----------------------------------------------------------------------------
# In-kernel helpers
# ----------------------------------------------------------------------------

def _conv3x3_im2col(x, w9, n, h, w, c):
    """3x3 reflect-padded conv as ONE MXU dot with K = 9*C.

    x:  (n, h, w, c) f32 value
    w9: (9*c, c) f32 folded weights, reduction order (kh, kw, cin)
    returns (n*h*w, c) f32
    """
    # Reflection pad along H as a value (major-axis concat; no masked stores).
    hp = jnp.concatenate([x[:, 1:2], x, x[:, h - 2:h - 1]], axis=1)  # (n,h+2,w,c)

    # Pre-build the three w-shifted slabs ONCE per conv (reflection folded in).
    # Value-level slice + concat (sublane shift work overlaps the MXU), not
    # nine per-tap ref-slice + reshape copies.
    left = jnp.concatenate([hp[:, :, 1:2], hp[:, :, :w - 1]], axis=2)        # x-1
    center = hp                                                              # x
    right = jnp.concatenate([hp[:, :, 1:], hp[:, :, w - 2:w - 1]], axis=2)   # x+1

    # im2col patch (n*h*w, 9c): kh slices are along a major axis (cheap), the
    # tap order (kh, kw, cin) matches the weight folding in prepare_params.
    taps = []
    for kh in range(3):
        for slab in (left, center, right):
            taps.append(slab[:, kh:kh + h])
    patch = jnp.concatenate(taps, axis=-1).reshape(n * h * w, 9 * c)

    return jnp.dot(patch, w9, preferred_element_type=jnp.float32)


def _batch_norm(y, gamma, beta, eps):
    """One-pass training-mode BatchNorm2d on an (M, C) tile (batch stats)."""
    inv_m = 1.0 / y.shape[0]
    mean = jnp.sum(y, axis=0, keepdims=True) * inv_m
    var = jnp.sum(y * y, axis=0, keepdims=True) * inv_m - mean * mean
    scale = gamma * lax.rsqrt(var + eps)
    shift = beta - mean * scale
    return y * scale + shift


# ----------------------------------------------------------------------------
# Fused ResnetBlock kernel
# ----------------------------------------------------------------------------

def _resnet_block_kernel(x_ref, w1_ref, g1_ref, b1_ref, w2_ref, g2_ref, b2_ref,
                         o_ref, *, n, h, w, c, eps):
    x = x_ref[...]                                                # (n,h,w,c) f32

    # conv1 (single K=9C dot) -> BN1 (one-pass stats) -> ReLU
    h1 = _conv3x3_im2col(x, w1_ref[...], n, h, w, c)              # (n*h*w, c)
    h1 = jnp.maximum(_batch_norm(h1, g1_ref[...], b1_ref[...], eps), 0.0)

    # conv2 -> BN2
    h2 = _conv3x3_im2col(h1.reshape(n, h, w, c), w2_ref[...], n, h, w, c)
    h2 = _batch_norm(h2, g2_ref[...], b2_ref[...], eps)

    # residual add; single HBM writeback
    o_ref[...] = x + h2.reshape(n, h, w, c)


def resnet_block_nhwc(x, params, eps=1e-5):
    """x: (N, H, W, C) float32. params: pre-folded (see prepare_params)."""
    n, h, w, c = x.shape
    kernel = functools.partial(_resnet_block_kernel, n=n, h=h, w=w, c=c, eps=eps)
    f4 = lambda i: (0, 0, 0, 0)
    f2 = lambda i: (0, 0)
    return pl.pallas_call(
        kernel,
        out_shape=jax.ShapeDtypeStruct((n, h, w, c), jnp.float32),
        grid=(1,),
        in_specs=[
            pl.BlockSpec((n, h, w, c), f4),   # activations
            pl.BlockSpec((9 * c, c), f2),     # conv1 weight, K-folded (9C, C)
            pl.BlockSpec((1, c), f2),         # bn1 gamma
            pl.BlockSpec((1, c), f2),         # bn1 beta
            pl.BlockSpec((9 * c, c), f2),     # conv2 weight, K-folded (9C, C)
            pl.BlockSpec((1, c), f2),         # bn2 gamma
            pl.BlockSpec((1, c), f2),         # bn2 beta
        ],
        out_specs=pl.BlockSpec((n, h, w, c), f4),
        compiler_params=pltpu.CompilerParams(
            dimension_semantics=("arbitrary",),
            # Explicit scoped-VMEM budget sized well above this block's
            # footprint (few MiB); raises the v5e 16 MiB default.
            vmem_limit_bytes=32 * 1024 * 1024),
    )(x, params["w1"], params["g1"], params["b1"],
      params["w2"], params["g2"], params["b2"])


# ----------------------------------------------------------------------------
# Public interface (PyTorch layouts at the boundary)
# ----------------------------------------------------------------------------

def prepare_params(torch_params):
    """One-time weight transform (outside the forward; not repeated per call).

    PyTorch Conv2d weight (Cout, Cin, kH, kW) -> K-folded (kH*kW*Cin, Cout)
    MXU matrix (reduction order kh, kw, cin, matching the in-kernel im2col);
    BN gamma/beta -> (1, C) rows for 2D broadcasting.
    """
    c = torch_params["g1"].shape[0]

    def fold(w_oihw):
        return (jnp.transpose(w_oihw, (2, 3, 1, 0))       # (kH, kW, Cin, Cout)
                .reshape(9 * c, c).astype(jnp.float32))

    row = lambda v: v.reshape(1, c).astype(jnp.float32)
    return {
        "w1": fold(torch_params["w1"]), "w2": fold(torch_params["w2"]),
        "g1": row(torch_params["g1"]), "b1": row(torch_params["b1"]),
        "g2": row(torch_params["g2"]), "b2": row(torch_params["b2"]),
    }


def resnet_block_forward(params, x_nchw):
    """PyTorch-convention NCHW in / NCHW out; NHWC (channels on lanes) inside."""
    x = jnp.transpose(x_nchw, (0, 2, 3, 1)).astype(jnp.float32)
    y = resnet_block_nhwc(x, params)
    return jnp.transpose(y, (0, 3, 1, 2))


# ----------------------------------------------------------------------------
# Pure-JAX reference (XLA ops) for correctness checking
# ----------------------------------------------------------------------------

def _reference_forward(torch_params, x_nchw, eps=1e-5):
    x = jnp.transpose(x_nchw, (0, 2, 3, 1)).astype(jnp.float32)

    def conv(t, w_oihw):
        tp = jnp.pad(t, ((0, 0), (1, 1), (1, 1), (0, 0)), mode="reflect")
        w_hwio = jnp.transpose(w_oihw, (2, 3, 1, 0))
        return lax.conv_general_dilated(
            tp, w_hwio, window_strides=(1, 1), padding="VALID",
            dimension_numbers=("NHWC", "HWIO", "NHWC"),
            precision=lax.Precision.HIGHEST)

    def bn(t, g, b):
        mean = jnp.mean(t, axis=(0, 1, 2), keepdims=True)
        var = jnp.mean(jnp.square(t - mean), axis=(0, 1, 2), keepdims=True)
        return (t - mean) * lax.rsqrt(var + eps) * g + b

    h = jnp.maximum(bn(conv(x, torch_params["w1"]),
                       torch_params["g1"], torch_params["b1"]), 0.0)
    h = bn(conv(h, torch_params["w2"]), torch_params["g2"], torch_params["b2"])
    return jnp.transpose(x + h, (0, 3, 1, 2))


# ----------------------------------------------------------------------------
# Main
# ----------------------------------------------------------------------------

if __name__ == "__main__":
    key = jax.random.PRNGKey(0)
    kx, k1, k2, k3, k4 = jax.random.split(key, 5)

    dim, batch, hw = 32, 2, 16   # ResnetBlock(32) as used in netG

    # weights_init-style params: conv ~ N(0, 0.02), BN gamma ~ N(1, 0.02), beta = 0
    torch_params = {
        "w1": 0.02 * jax.random.normal(k1, (dim, dim, 3, 3), jnp.float32),
        "w2": 0.02 * jax.random.normal(k2, (dim, dim, 3, 3), jnp.float32),
        "g1": 1.0 + 0.02 * jax.random.normal(k3, (dim,), jnp.float32),
        "b1": jnp.zeros((dim,), jnp.float32),
        "g2": 1.0 + 0.02 * jax.random.normal(k4, (dim,), jnp.float32),
        "b2": jnp.zeros((dim,), jnp.float32),
    }
    params = prepare_params(torch_params)   # one-time transform, outside forward

    x = jax.random.normal(kx, (batch, dim, hw, hw), jnp.float32)  # NCHW

    fwd = jax.jit(resnet_block_forward)
    out = jax.block_until_ready(fwd(params, x))

    assert out.shape == (batch, dim, hw, hw), out.shape
    assert bool(jnp.all(jnp.isfinite(out)))

    ref = _reference_forward(torch_params, x)
    max_err = float(jnp.max(jnp.abs(out - ref)))
    assert max_err < 1e-4, f"max abs error vs XLA reference: {max_err}"

    print("KERNEL_OK")
</pallas_src>

<mosaic_0001>
module attributes {stable_mosaic.version = 11 : i64} {
  func.func @_resnet_block_kernel(%arg0: i32, %arg1: memref<2x16x16x32xf32, #tpu.memory_space<vmem>>, %arg2: memref<288x32xf32, #tpu.memory_space<vmem>>, %arg3: memref<1x32xf32, #tpu.memory_space<vmem>>, %arg4: memref<1x32xf32, #tpu.memory_space<vmem>>, %arg5: memref<288x32xf32, #tpu.memory_space<vmem>>, %arg6: memref<1x32xf32, #tpu.memory_space<vmem>>, %arg7: memref<1x32xf32, #tpu.memory_space<vmem>>, %arg8: memref<2x16x16x32xf32, #tpu.memory_space<vmem>>) attributes {dimension_semantics = [#tpu.dimension_semantics<arbitrary>], iteration_bounds = array<i64: 1>, scalar_prefetch = 0 : i64, scratch_operands = 0 : i64, tpu.core_type = #tpu.core_type<tc>, window_params = [{pipeline_mode = #tpu.pipeline_mode<synchronous>, transform_indices = @transform_0, window_bounds = array<i64: 2, 16, 16, 32>}, {pipeline_mode = #tpu.pipeline_mode<synchronous>, transform_indices = @transform_1, window_bounds = array<i64: 288, 32>}, {pipeline_mode = #tpu.pipeline_mode<synchronous>, transform_indices = @transform_2, window_bounds = array<i64: 1, 32>}, {pipeline_mode = #tpu.pipeline_mode<synchronous>, transform_indices = @transform_3, window_bounds = array<i64: 1, 32>}, {pipeline_mode = #tpu.pipeline_mode<synchronous>, transform_indices = @transform_4, window_bounds = array<i64: 288, 32>}, {pipeline_mode = #tpu.pipeline_mode<synchronous>, transform_indices = @transform_5, window_bounds = array<i64: 1, 32>}, {pipeline_mode = #tpu.pipeline_mode<synchronous>, transform_indices = @transform_6, window_bounds = array<i64: 1, 32>}, {pipeline_mode = #tpu.pipeline_mode<synchronous>, transform_indices = @transform_7, window_bounds = array<i64: 2, 16, 16, 32>}]} {
    %c0 = arith.constant 0 : index
    %c0_0 = arith.constant 0 : index
    %c0_1 = arith.constant 0 : index
    %c0_2 = arith.constant 0 : index
    %0 = vector.load %arg1[%c0, %c0_0, %c0_1, %c0_2] : memref<2x16x16x32xf32, #tpu.memory_space<vmem>>, vector<2x16x16x32xf32>
    %c0_3 = arith.constant 0 : index
    %c0_4 = arith.constant 0 : index
    %1 = vector.load %arg2[%c0_3, %c0_4] : memref<288x32xf32, #tpu.memory_space<vmem>>, vector<288x32xf32>
    %2 = vector.extract_strided_slice %0 {offsets = [0, 1, 0, 0], sizes = [2, 1, 16, 32], strides = [1, 1, 1, 1]} : vector<2x16x16x32xf32> to vector<2x1x16x32xf32>
    %3 = vector.extract_strided_slice %0 {offsets = [0, 14, 0, 0], sizes = [2, 1, 16, 32], strides = [1, 1, 1, 1]} : vector<2x16x16x32xf32> to vector<2x1x16x32xf32>
    %4 = tpu.concatenate %2, %0, %3 in 1 : vector<2x1x16x32xf32>, vector<2x16x16x32xf32>, vector<2x1x16x32xf32> -> vector<2x18x16x32xf32>
    %5 = vector.extract_strided_slice %4 {offsets = [0, 0, 1, 0], sizes = [2, 18, 1, 32], strides = [1, 1, 1, 1]} : vector<2x18x16x32xf32> to vector<2x18x1x32xf32>
    %6 = vector.extract_strided_slice %4 {offsets = [0, 0, 0, 0], sizes = [2, 18, 15, 32], strides = [1, 1, 1, 1]} : vector<2x18x16x32xf32> to vector<2x18x15x32xf32>
    %7 = tpu.concatenate %5, %6 in 2 : vector<2x18x1x32xf32>, vector<2x18x15x32xf32> -> vector<2x18x16x32xf32>
    %8 = vector.extract_strided_slice %4 {offsets = [0, 0, 1, 0], sizes = [2, 18, 15, 32], strides = [1, 1, 1, 1]} : vector<2x18x16x32xf32> to vector<2x18x15x32xf32>
    %9 = vector.extract_strided_slice %4 {offsets = [0, 0, 14, 0], sizes = [2, 18, 1, 32], strides = [1, 1, 1, 1]} : vector<2x18x16x32xf32> to vector<2x18x1x32xf32>
    %10 = tpu.concatenate %8, %9 in 2 : vector<2x18x15x32xf32>, vector<2x18x1x32xf32> -> vector<2x18x16x32xf32>
    %11 = vector.extract_strided_slice %7 {offsets = [0, 0, 0, 0], sizes = [2, 16, 16, 32], strides = [1, 1, 1, 1]} : vector<2x18x16x32xf32> to vector<2x16x16x32xf32>
    %12 = vector.extract_strided_slice %4 {offsets = [0, 0, 0, 0], sizes = [2, 16, 16, 32], strides = [1, 1, 1, 1]} : vector<2x18x16x32xf32> to vector<2x16x16x32xf32>
    %13 = vector.extract_strided_slice %10 {offsets = [0, 0, 0, 0], sizes = [2, 16, 16, 32], strides = [1, 1, 1, 1]} : vector<2x18x16x32xf32> to vector<2x16x16x32xf32>
    %14 = vector.extract_strided_slice %7 {offsets = [0, 1, 0, 0], sizes = [2, 16, 16, 32], strides = [1, 1, 1, 1]} : vector<2x18x16x32xf32> to vector<2x16x16x32xf32>
    %15 = vector.extract_strided_slice %4 {offsets = [0, 1, 0, 0], sizes = [2, 16, 16, 32], strides = [1, 1, 1, 1]} : vector<2x18x16x32xf32> to vector<2x16x16x32xf32>
    %16 = vector.extract_strided_slice %10 {offsets = [0, 1, 0, 0], sizes = [2, 16, 16, 32], strides = [1, 1, 1, 1]} : vector<2x18x16x32xf32> to vector<2x16x16x32xf32>
    %17 = vector.extract_strided_slice %7 {offsets = [0, 2, 0, 0], sizes = [2, 16, 16, 32], strides = [1, 1, 1, 1]} : vector<2x18x16x32xf32> to vector<2x16x16x32xf32>
    %18 = vector.extract_strided_slice %4 {offsets = [0, 2, 0, 0], sizes = [2, 16, 16, 32], strides = [1, 1, 1, 1]} : vector<2x18x16x32xf32> to vector<2x16x16x32xf32>
    %19 = vector.extract_strided_slice %10 {offsets = [0, 2, 0, 0], sizes = [2, 16, 16, 32], strides = [1, 1, 1, 1]} : vector<2x18x16x32xf32> to vector<2x16x16x32xf32>
    %20 = tpu.concatenate %11, %12, %13, %14, %15, %16, %17, %18, %19 in 3 : vector<2x16x16x32xf32>, vector<2x16x16x32xf32>, vector<2x16x16x32xf32>, vector<2x16x16x32xf32>, vector<2x16x16x32xf32>, vector<2x16x16x32xf32>, vector<2x16x16x32xf32>, vector<2x16x16x32xf32>, vector<2x16x16x32xf32> -> vector<2x16x16x288xf32>
    %21 = vector.shape_cast %20 : vector<2x16x16x288xf32> to vector<512x288xf32>
    %cst = arith.constant dense<0.000000e+00> : vector<512x32xf32>
    %22 = tpu.matmul %21, %1, %cst {dimension_numbers = #tpu.dot_dimension_numbers<[1], [0], [0], [1], [0, 0, 1, 1], [], []>} : vector<512x288xf32>, vector<288x32xf32>, vector<512x32xf32> -> vector<512x32xf32>
    %c0_5 = arith.constant 0 : index
    %c0_6 = arith.constant 0 : index
    %23 = vector.load %arg3[%c0_5, %c0_6] : memref<1x32xf32, #tpu.memory_space<vmem>>, vector<1x32xf32>
    %c0_7 = arith.constant 0 : index
    %c0_8 = arith.constant 0 : index
    %24 = vector.load %arg4[%c0_7, %c0_8] : memref<1x32xf32, #tpu.memory_space<vmem>>, vector<1x32xf32>
    %cst_9 = arith.constant dense<0.000000e+00> : vector<32xf32>
    %25 = vector.multi_reduction <add>, %22, %cst_9 [0] : vector<512x32xf32> to vector<32xf32>
    %26 = vector.shape_cast %25 : vector<32xf32> to vector<1x32xf32>
    %cst_10 = arith.constant 0.001953125 : f32
    %27 = vector.broadcast %cst_10 : f32 to vector<1x32xf32>
    %28 = arith.mulf %26, %27 : vector<1x32xf32>
    %29 = arith.mulf %22, %22 : vector<512x32xf32>
    %cst_11 = arith.constant dense<0.000000e+00> : vector<32xf32>
    %30 = vector.multi_reduction <add>, %29, %cst_11 [0] : vector<512x32xf32> to vector<32xf32>
    %31 = vector.shape_cast %30 : vector<32xf32> to vector<1x32xf32>
    %cst_12 = arith.constant 0.001953125 : f32
    %32 = vector.broadcast %cst_12 : f32 to vector<1x32xf32>
    %33 = arith.mulf %31, %32 : vector<1x32xf32>
    %34 = arith.mulf %28, %28 : vector<1x32xf32>
    %35 = arith.subf %33, %34 : vector<1x32xf32>
    %cst_13 = arith.constant 9.99999974E-6 : f32
    %36 = vector.broadcast %cst_13 : f32 to vector<1x32xf32>
    %37 = arith.addf %35, %36 : vector<1x32xf32>
    %38 = math.rsqrt %37 : vector<1x32xf32>
    %39 = arith.mulf %23, %38 : vector<1x32xf32>
    %40 = arith.mulf %28, %39 : vector<1x32xf32>
    %41 = arith.subf %24, %40 : vector<1x32xf32>
    %42 = vector.broadcast %39 : vector<1x32xf32> to vector<512x32xf32>
    %43 = arith.mulf %22, %42 : vector<512x32xf32>
    %44 = vector.broadcast %41 : vector<1x32xf32> to vector<512x32xf32>
    %45 = arith.addf %43, %44 : vector<512x32xf32>
    %cst_14 = arith.constant 0.000000e+00 : f32
    %46 = vector.broadcast %cst_14 : f32 to vector<512x32xf32>
    %47 = arith.maximumf %45, %46 : vector<512x32xf32>
    %48 = vector.shape_cast %47 : vector<512x32xf32> to vector<2x16x16x32xf32>
    %c0_15 = arith.constant 0 : index
    %c0_16 = arith.constant 0 : index
    %49 = vector.load %arg5[%c0_15, %c0_16] : memref<288x32xf32, #tpu.memory_space<vmem>>, vector<288x32xf32>
    %50 = vector.extract_strided_slice %48 {offsets = [0, 1, 0, 0], sizes = [2, 1, 16, 32], strides = [1, 1, 1, 1]} : vector<2x16x16x32xf32> to vector<2x1x16x32xf32>
    %51 = vector.extract_strided_slice %48 {offsets = [0, 14, 0, 0], sizes = [2, 1, 16, 32], strides = [1, 1, 1, 1]} : vector<2x16x16x32xf32> to vector<2x1x16x32xf32>
    %52 = tpu.concatenate %50, %48, %51 in 1 : vector<2x1x16x32xf32>, vector<2x16x16x32xf32>, vector<2x1x16x32xf32> -> vector<2x18x16x32xf32>
    %53 = vector.extract_strided_slice %52 {offsets = [0, 0, 1, 0], sizes = [2, 18, 1, 32], strides = [1, 1, 1, 1]} : vector<2x18x16x32xf32> to vector<2x18x1x32xf32>
    %54 = vector.extract_strided_slice %52 {offsets = [0, 0, 0, 0], sizes = [2, 18, 15, 32], strides = [1, 1, 1, 1]} : vector<2x18x16x32xf32> to vector<2x18x15x32xf32>
    %55 = tpu.concatenate %53, %54 in 2 : vector<2x18x1x32xf32>, vector<2x18x15x32xf32> -> vector<2x18x16x32xf32>
    %56 = vector.extract_strided_slice %52 {offsets = [0, 0, 1, 0], sizes = [2, 18, 15, 32], strides = [1, 1, 1, 1]} : vector<2x18x16x32xf32> to vector<2x18x15x32xf32>
    %57 = vector.extract_strided_slice %52 {offsets = [0, 0, 14, 0], sizes = [2, 18, 1, 32], strides = [1, 1, 1, 1]} : vector<2x18x16x32xf32> to vector<2x18x1x32xf32>
    %58 = tpu.concatenate %56, %57 in 2 : vector<2x18x15x32xf32>, vector<2x18x1x32xf32> -> vector<2x18x16x32xf32>
    %59 = vector.extract_strided_slice %55 {offsets = [0, 0, 0, 0], sizes = [2, 16, 16, 32], strides = [1, 1, 1, 1]} : vector<2x18x16x32xf32> to vector<2x16x16x32xf32>
    %60 = vector.extract_strided_slice %52 {offsets = [0, 0, 0, 0], sizes = [2, 16, 16, 32], strides = [1, 1, 1, 1]} : vector<2x18x16x32xf32> to vector<2x16x16x32xf32>
    %61 = vector.extract_strided_slice %58 {offsets = [0, 0, 0, 0], sizes = [2, 16, 16, 32], strides = [1, 1, 1, 1]} : vector<2x18x16x32xf32> to vector<2x16x16x32xf32>
    %62 = vector.extract_strided_slice %55 {offsets = [0, 1, 0, 0], sizes = [2, 16, 16, 32], strides = [1, 1, 1, 1]} : vector<2x18x16x32xf32> to vector<2x16x16x32xf32>
    %63 = vector.extract_strided_slice %52 {offsets = [0, 1, 0, 0], sizes = [2, 16, 16, 32], strides = [1, 1, 1, 1]} : vector<2x18x16x32xf32> to vector<2x16x16x32xf32>
    %64 = vector.extract_strided_slice %58 {offsets = [0, 1, 0, 0], sizes = [2, 16, 16, 32], strides = [1, 1, 1, 1]} : vector<2x18x16x32xf32> to vector<2x16x16x32xf32>
    %65 = vector.extract_strided_slice %55 {offsets = [0, 2, 0, 0], sizes = [2, 16, 16, 32], strides = [1, 1, 1, 1]} : vector<2x18x16x32xf32> to vector<2x16x16x32xf32>
    %66 = vector.extract_strided_slice %52 {offsets = [0, 2, 0, 0], sizes = [2, 16, 16, 32], strides = [1, 1, 1, 1]} : vector<2x18x16x32xf32> to vector<2x16x16x32xf32>
    %67 = vector.extract_strided_slice %58 {offsets = [0, 2, 0, 0], sizes = [2, 16, 16, 32], strides = [1, 1, 1, 1]} : vector<2x18x16x32xf32> to vector<2x16x16x32xf32>
    %68 = tpu.concatenate %59, %60, %61, %62, %63, %64, %65, %66, %67 in 3 : vector<2x16x16x32xf32>, vector<2x16x16x32xf32>, vector<2x16x16x32xf32>, vector<2x16x16x32xf32>, vector<2x16x16x32xf32>, vector<2x16x16x32xf32>, vector<2x16x16x32xf32>, vector<2x16x16x32xf32>, vector<2x16x16x32xf32> -> vector<2x16x16x288xf32>
    %69 = vector.shape_cast %68 : vector<2x16x16x288xf32> to vector<512x288xf32>
    %cst_17 = arith.constant dense<0.000000e+00> : vector<512x32xf32>
    %70 = tpu.matmul %69, %49, %cst_17 {dimension_numbers = #tpu.dot_dimension_numbers<[1], [0], [0], [1], [0, 0, 1, 1], [], []>} : vector<512x288xf32>, vector<288x32xf32>, vector<512x32xf32> -> vector<512x32xf32>
    %c0_18 = arith.constant 0 : index
    %c0_19 = arith.constant 0 : index
    %71 = vector.load %arg6[%c0_18, %c0_19] : memref<1x32xf32, #tpu.memory_space<vmem>>, vector<1x32xf32>
    %c0_20 = arith.constant 0 : index
    %c0_21 = arith.constant 0 : index
    %72 = vector.load %arg7[%c0_20, %c0_21] : memref<1x32xf32, #tpu.memory_space<vmem>>, vector<1x32xf32>
    %cst_22 = arith.constant dense<0.000000e+00> : vector<32xf32>
    %73 = vector.multi_reduction <add>, %70, %cst_22 [0] : vector<512x32xf32> to vector<32xf32>
    %74 = vector.shape_cast %73 : vector<32xf32> to vector<1x32xf32>
    %cst_23 = arith.constant 0.001953125 : f32
    %75 = vector.broadcast %cst_23 : f32 to vector<1x32xf32>
    %76 = arith.mulf %74, %75 : vector<1x32xf32>
    %77 = arith.mulf %70, %70 : vector<512x32xf32>
    %cst_24 = arith.constant dense<0.000000e+00> : vector<32xf32>
    %78 = vector.multi_reduction <add>, %77, %cst_24 [0] : vector<512x32xf32> to vector<32xf32>
    %79 = vector.shape_cast %78 : vector<32xf32> to vector<1x32xf32>
    %cst_25 = arith.constant 0.001953125 : f32
    %80 = vector.broadcast %cst_25 : f32 to vector<1x32xf32>
    %81 = arith.mulf %79, %80 : vector<1x32xf32>
    %82 = arith.mulf %76, %76 : vector<1x32xf32>
    %83 = arith.subf %81, %82 : vector<1x32xf32>
    %cst_26 = arith.constant 9.99999974E-6 : f32
    %84 = vector.broadcast %cst_26 : f32 to vector<1x32xf32>
    %85 = arith.addf %83, %84 : vector<1x32xf32>
    %86 = math.rsqrt %85 : vector<1x32xf32>
    %87 = arith.mulf %71, %86 : vector<1x32xf32>
    %88 = arith.mulf %76, %87 : vector<1x32xf32>
    %89 = arith.subf %72, %88 : vector<1x32xf32>
    %90 = vector.broadcast %87 : vector<1x32xf32> to vector<512x32xf32>
    %91 = arith.mulf %70, %90 : vector<512x32xf32>
    %92 = vector.broadcast %89 : vector<1x32xf32> to vector<512x32xf32>
    %93 = arith.addf %91, %92 : vector<512x32xf32>
    %94 = vector.shape_cast %93 : vector<512x32xf32> to vector<2x16x16x32xf32>
    %95 = arith.addf %0, %94 : vector<2x16x16x32xf32>
    %c0_27 = arith.constant 0 : index
    %c0_28 = arith.constant 0 : index
    %c0_29 = arith.constant 0 : index
    %c0_30 = arith.constant 0 : index
    %96 = vector.load %arg8[%c0_27, %c0_28, %c0_29, %c0_30] : memref<2x16x16x32xf32, #tpu.memory_space<vmem>>, vector<2x16x16x32xf32>
    tpu.vector_store %arg8[%c0_27, %c0_28, %c0_29, %c0_30], %95 {strides = array<i32>} : memref<2x16x16x32xf32, #tpu.memory_space<vmem>>, vector<2x16x16x32xf32>,
    return
  }
  func.func @transform_0(%arg0: i32) -> (i32, i32, i32, i32) {
    %c0_i32 = arith.constant 0 : i32
    %c0_i32_0 = arith.constant 0 : i32
    %c0_i32_1 = arith.constant 0 : i32
    %c0_i32_2 = arith.constant 0 : i32
    %c0_i32_3 = arith.constant 0 : i32
    return %c0_i32, %c0_i32_0, %c0_i32_1, %c0_i32_2 : i32, i32, i32, i32
  }
  func.func @transform_1(%arg0: i32) -> (i32, i32) {
    %c0_i32 = arith.constant 0 : i32
    %c0_i32_0 = arith.constant 0 : i32
    %c0_i32_1 = arith.constant 0 : i32
    return %c0_i32, %c0_i32_0 : i32, i32
  }
  func.func @transform_2(%arg0: i32) -> (i32, i32) {
    %c0_i32 = arith.constant 0 : i32
    %c0_i32_0 = arith.constant 0 : i32
    %c0_i32_1 = arith.constant 0 : i32
    return %c0_i32, %c0_i32_0 : i32, i32
  }
  func.func @transform_3(%arg0: i32) -> (i32, i32) {
    %c0_i32 = arith.constant 0 : i32
    %c0_i32_0 = arith.constant 0 : i32
    %c0_i32_1 = arith.constant 0 : i32
    return %c0_i32, %c0_i32_0 : i32, i32
  }
  func.func @transform_4(%arg0: i32) -> (i32, i32) {
    %c0_i32 = arith.constant 0 : i32
    %c0_i32_0 = arith.constant 0 : i32
    %c0_i32_1 = arith.constant 0 : i32
    return %c0_i32, %c0_i32_0 : i32, i32
  }
  func.func @transform_5(%arg0: i32) -> (i32, i32) {
    %c0_i32 = arith.constant 0 : i32
    %c0_i32_0 = arith.constant 0 : i32
    %c0_i32_1 = arith.constant 0 : i32
    return %c0_i32, %c0_i32_0 : i32, i32
  }
  func.func @transform_6(%arg0: i32) -> (i32, i32) {
    %c0_i32 = arith.constant 0 : i32
    %c0_i32_0 = arith.constant 0 : i32
    %c0_i32_1 = arith.constant 0 : i32
    return %c0_i32, %c0_i32_0 : i32, i32
  }
  func.func @transform_7(%arg0: i32) -> (i32, i32, i32, i32) {
    %c0_i32 = arith.constant 0 : i32
    %c0_i32_0 = arith.constant 0 : i32
    %c0_i32_1 = arith.constant 0 : i32
    %c0_i32_2 = arith.constant 0 : i32
    %c0_i32_3 = arith.constant 0 : i32
    return %c0_i32, %c0_i32_0, %c0_i32_1, %c0_i32_2 : i32, i32, i32, i32
  }
}

</mosaic_0001>

<llo_original>
// kernel: resnet_block_forward.1
$region0: #{resnet_block_forward.1}
  #allocation0 [shape = 'u32[]', space=smem, size = 0x4, offset = 0x4, fixed_abs, tag = 'smem constant byte address 0x4 - core index']
  #allocation1 [shape = 'u32[72,128]{1,0:T(1,128)}', space=vmem, size = 0x9000, scoped, tag = 'internal scratch']
  %s0 = inlined_call_operand.vmem [shape: f32[2,16,16,32], index: 0, kind: input, shape index: {}]
  %s1 = inlined_call_operand.vmem [shape: f32[288,32], index: 1, kind: input, shape index: {}]
  %s2 = inlined_call_operand.vmem [shape: f32[1,32], index: 2, kind: input, shape index: {}]
  %s3 = inlined_call_operand.vmem [shape: f32[1,32], index: 3, kind: input, shape index: {}]
  %s4 = inlined_call_operand.vmem [shape: f32[288,32], index: 4, kind: input, shape index: {}]
  %s5 = inlined_call_operand.vmem [shape: f32[1,32], index: 5, kind: input, shape index: {}]
  %s6 = inlined_call_operand.vmem [shape: f32[1,32], index: 6, kind: input, shape index: {}]
  %s7 = inlined_call_operand.hbm [shape: f32[2,16,16,32], index: 7, kind: output, shape index: {}]
  %s8 = sld [smem:[#allocation0]]
  $region38: #{resnet_block_forward.1} parent=0
    _
  %s10 = ssub.s32 1, %s8
  %s11 = scalar_select 0, %s10, %s8
  $region1: #{resnet_block_forward.1} parent=0
    #allocation2 [shape = 'u8[262144]{0}', space=vmem, size = 0x40000, scoped, tag = 'output window, operand 0, single buffered']
    #allocation3 [shape = 's32[1]{0}', space=sflag, size = 0x4, scoped, tag = 'scoped memory for resnet_block_forward.1']
    %12 = vsyncpa [#allocation3], 0
    // Predicated region
    $region2: #{resnet_block_forward.1} parent=1 // pred_check
      _
    $region3: #{resnet_block_forward.1} parent=1 // pred_check_branch
      %14 = sbr.rel (0) target = $region5
    $region4: #{resnet_block_forward.1} parent=1 // pred_region
      _
    $region5: #{resnet_block_forward.1} parent=1 // pred_fallthru
      _
    // Predicated region
    $region6: #{resnet_block_forward.1} parent=1 // pred_check
      _
    $region7: #{resnet_block_forward.1} parent=1 // pred_check_branch
      %16 = sbr.rel (0) target = $region9
    $region8: #{resnet_block_forward.1} parent=1 // pred_region
      _
    $region9: #{resnet_block_forward.1} parent=1 // pred_fallthru
      _
    // Predicated region
    $region10: #{resnet_block_forward.1} parent=1 // pred_check
      _
    $region11: #{resnet_block_forward.1} parent=1 // pred_check_branch
      %18 = sbr.rel (0) target = $region13
    $region12: #{resnet_block_forward.1} parent=1 // pred_region
      _
    $region13: #{resnet_block_forward.1} parent=1 // pred_fallthru
      _
    // Predicated region
    $region14: #{resnet_block_forward.1} parent=1 // pred_check
      _
    $region15: #{resnet_block_forward.1} parent=1 // pred_check_branch
      %20 = sbr.rel (0) target = $region17
    $region16: #{resnet_block_forward.1} parent=1 // pred_region
      _
    $region17: #{resnet_block_forward.1} parent=1 // pred_fallthru
      _
    // Predicated region
    $region18: #{resnet_block_forward.1} parent=1 // pred_check
      _
    $region19: #{resnet_block_forward.1} parent=1 // pred_check_branch
      %22 = sbr.rel (0) target = $region21
    $region20: #{resnet_block_forward.1} parent=1 // pred_region
      _
    $region21: #{resnet_block_forward.1} parent=1 // pred_fallthru
      _
    // Predicated region
    $region22: #{resnet_block_forward.1} parent=1 // pred_check
      _
    $region23: #{resnet_block_forward.1} parent=1 // pred_check_branch
      %24 = sbr.rel (0) target = $region25
    $region24: #{resnet_block_forward.1} parent=1 // pred_region
      _
    $region25: #{resnet_block_forward.1} parent=1 // pred_fallthru
      _
    // Predicated region
    $region26: #{resnet_block_forward.1} parent=1 // pred_check
      _
    $region27: #{resnet_block_forward.1} parent=1 // pred_check_branch
      %26 = sbr.rel (0) target = $region29
    $region28: #{resnet_block_forward.1} parent=1 // pred_region
      _
    $region29: #{resnet_block_forward.1} parent=1 // pred_fallthru
      _
    %v27 = vld [vmem:[%s0] sm:$0xff]
    %v28 = vld [vmem:[%s0 + $0x8] sm:$0xff]
    %v29 = vld [vmem:[%s0 + $0x10] sm:$0xff]
    %v30 = vld [vmem:[%s0 + $0x18] sm:$0xff]
    %v31 = vld [vmem:[%s0 + $0x20] sm:$0xff]
    %v32 = vld [vmem:[%s0 + $0x28] sm:$0xff]
    %v33 = vld [vmem:[%s0 + $0x30] sm:$0xff]
    %v34 = vld [vmem:[%s0 + $0x38] sm:$0xff]
    %v35 = vld [vmem:[%s0 + $0x40] sm:$0xff]
    %v36 = vld [vmem:[%s0 + $0x48] sm:$0xff]
    %v37 = vld [vmem:[%s0 + $0x50] sm:$0xff]
    %v38 = vld [vmem:[%s0 + $0x58] sm:$0xff]
    %v39 = vld [vmem:[%s0 + $0x60] sm:$0xff]
    %v40 = vld [vmem:[%s0 + $0x68] sm:$0xff]
    %v41 = vld [vmem:[%s0 + $0x70] sm:$0xff]
    %v42 = vld [vmem:[%s0 + $0x78] sm:$0xff]
    %v43 = vld [vmem:[%s0 + $0x80] sm:$0xff]
    %v44 = vld [vmem:[%s0 + $0x88] sm:$0xff]
    %v45 = vld [vmem:[%s0 + $0x90] sm:$0xff]
    %v46 = vld [vmem:[%s0 + $0x98] sm:$0xff]
    %v47 = vld [vmem:[%s0 + $0xa0] sm:$0xff]
    %v48 = vld [vmem:[%s0 + $0xa8] sm:$0xff]
    %v49 = vld [vmem:[%s0 + $0xb0] sm:$0xff]
    %v50 = vld [vmem:[%s0 + $0xb8] sm:$0xff]
    %v51 = vld [vmem:[%s0 + $0xc0] sm:$0xff]
    %v52 = vld [vmem:[%s0 + $0xc8] sm:$0xff]
    %v53 = vld [vmem:[%s0 + $0xd0] sm:$0xff]
    %v54 = vld [vmem:[%s0 + $0xd8] sm:$0xff]
    %v55 = vld [vmem:[%s0 + $0xe0] sm:$0xff]
    %v56 = vld [vmem:[%s0 + $0xe8] sm:$0xff]
    %v57 = vld [vmem:[%s0 + $0xf0] sm:$0xff]
    %v58 = vld [vmem:[%s0 + $0xf8] sm:$0xff]
    %v59 = vld [vmem:[%s0 + $0x100] sm:$0xff]
    %v60 = vld [vmem:[%s0 + $0x108] sm:$0xff]
    %v61 = vld [vmem:[%s0 + $0x110] sm:$0xff]
    %v62 = vld [vmem:[%s0 + $0x118] sm:$0xff]
    %v63 = vld [vmem:[%s0 + $0x120] sm:$0xff]
    %v64 = vld [vmem:[%s0 + $0x128] sm:$0xff]
    %v65 = vld [vmem:[%s0 + $0x130] sm:$0xff]
    %v66 = vld [vmem:[%s0 + $0x138] sm:$0xff]
    %v67 = vld [vmem:[%s0 + $0x140] sm:$0xff]
    %v68 = vld [vmem:[%s0 + $0x148] sm:$0xff]
    %v69 = vld [vmem:[%s0 + $0x150] sm:$0xff]
    %v70 = vld [vmem:[%s0 + $0x158] sm:$0xff]
    %v71 = vld [vmem:[%s0 + $0x160] sm:$0xff]
    %v72 = vld [vmem:[%s0 + $0x168] sm:$0xff]
    %v73 = vld [vmem:[%s0 + $0x170] sm:$0xff]
    %v74 = vld [vmem:[%s0 + $0x178] sm:$0xff]
    %v75 = vld [vmem:[%s0 + $0x180] sm:$0xff]
    %v76 = vld [vmem:[%s0 + $0x188] sm:$0xff]
    %v77 = vld [vmem:[%s0 + $0x190] sm:$0xff]
    %v78 = vld [vmem:[%s0 + $0x198] sm:$0xff]
    %v79 = vld [vmem:[%s0 + $0x1a0] sm:$0xff]
    %v80 = vld [vmem:[%s0 + $0x1a8] sm:$0xff]
    %v81 = vld [vmem:[%s0 + $0x1b0] sm:$0xff]
    %v82 = vld [vmem:[%s0 + $0x1b8] sm:$0xff]
    %v83 = vld [vmem:[%s0 + $0x1c0] sm:$0xff]
    %v84 = vld [vmem:[%s0 + $0x1c8] sm:$0xff]
    %v85 = vld [vmem:[%s0 + $0x1d0] sm:$0xff]
    %v86 = vld [vmem:[%s0 + $0x1d8] sm:$0xff]
    %v87 = vld [vmem:[%s0 + $0x1e0] sm:$0xff]
    %v88 = vld [vmem:[%s0 + $0x1e8] sm:$0xff]
    %v89 = vld [vmem:[%s0 + $0x1f0] sm:$0xff]
    %v90 = vld [vmem:[%s0 + $0x1f8] sm:$0xff]
    %v91 = vld [vmem:[%s1] sm:$0xff]
    %v92 = vld [vmem:[%s1 + $0x8] sm:$0xff]
    %v93 = vld [vmem:[%s1 + $0x10] sm:$0xff]
    %v94 = vld [vmem:[%s1 + $0x18] sm:$0xff]
    %v95 = vld [vmem:[%s1 + $0x20] sm:$0xff]
    %v96 = vld [vmem:[%s1 + $0x28] sm:$0xff]
    %v97 = vld [vmem:[%s1 + $0x30] sm:$0xff]
    %v98 = vld [vmem:[%s1 + $0x38] sm:$0xff]
    %v99 = vld [vmem:[%s1 + $0x40] sm:$0xff]
    %v100 = vld [vmem:[%s1 + $0x48] sm:$0xff]
    %v101 = vld [vmem:[%s1 + $0x50] sm:$0xff]
    %v102 = vld [vmem:[%s1 + $0x58] sm:$0xff]
    %v103 = vld [vmem:[%s1 + $0x60] sm:$0xff]
    %v104 = vld [vmem:[%s1 + $0x68] sm:$0xff]
    %v105 = vld [vmem:[%s1 + $0x70] sm:$0xff]
    %v106 = vld [vmem:[%s1 + $0x78] sm:$0xff]
    %v107 = vld [vmem:[%s1 + $0x80] sm:$0xff]
    %v108 = vld [vmem:[%s1 + $0x88] sm:$0xff]
    %v109 = vld [vmem:[%s1 + $0x90] sm:$0xff]
    %v110 = vld [vmem:[%s1 + $0x98] sm:$0xff]
    %v111 = vld [vmem:[%s1 + $0xa0] sm:$0xff]
    %v112 = vld [vmem:[%s1 + $0xa8] sm:$0xff]
    %v113 = vld [vmem:[%s1 + $0xb0] sm:$0xff]
    %v114 = vld [vmem:[%s1 + $0xb8] sm:$0xff]
    %v115 = vld [vmem:[%s1 + $0xc0] sm:$0xff]
    %v116 = vld [vmem:[%s1 + $0xc8] sm:$0xff]
    %v117 = vld [vmem:[%s1 + $0xd0] sm:$0xff]
    %v118 = vld [vmem:[%s1 + $0xd8] sm:$0xff]
    %v119 = vld [vmem:[%s1 + $0xe0] sm:$0xff]
    %v120 = vld [vmem:[%s1 + $0xe8] sm:$0xff]
    %v121 = vld [vmem:[%s1 + $0xf0] sm:$0xff]
    %v122 = vld [vmem:[%s1 + $0xf8] sm:$0xff]
    %v123 = vld [vmem:[%s1 + $0x100] sm:$0xff]
    %v124 = vld [vmem:[%s1 + $0x108] sm:$0xff]
    %v125 = vld [vmem:[%s1 + $0x110] sm:$0xff]
    %v126 = vld [vmem:[%s1 + $0x118] sm:$0xff]
    %v159 = vrot.slane %v29, 1
    %v160 = vrot.slane %v27, 1
    %v161 = vrot.slane %v31, 1
    %v162 = vrot.slane %v33, 1
    %v163 = vrot.slane %v35, 1
    %v164 = vrot.slane %v37, 1
    %v165 = vrot.slane %v39, 1
    %v166 = vrot.slane %v41, 1
    %v167 = vrot.slane %v43, 1
    %v168 = vrot.slane %v45, 1
    %v169 = vrot.slane %v47, 1
    %v170 = vrot.slane %v49, 1
    %v171 = vrot.slane %v51, 1
    %v172 = vrot.slane %v53, 1
    %v173 = vrot.slane %v55, 1
    %v174 = vrot.slane %v57, 1
    %v175 = vrot.slane %v61, 1
    %v176 = vrot.slane %v59, 1
    %v177 = vrot.slane %v63, 1
    %v178 = vrot.slane %v65, 1
    %v179 = vrot.slane %v67, 1
    %v180 = vrot.slane %v69, 1
    %v181 = vrot.slane %v71, 1
    %v182 = vrot.slane %v73, 1
    %v183 = vrot.slane %v75, 1
    %v184 = vrot.slane %v77, 1
    %v185 = vrot.slane %v79, 1
    %v186 = vrot.slane %v81, 1
    %v187 = vrot.slane %v83, 1
    %v188 = vrot.slane %v85, 1
    %v189 = vrot.slane %v87, 1
    %v190 = vrot.slane %v89, 1
    %vm255 = vcmask 1040384
    %v256 = vrot.slane %v29, 7
    %v257 = vrot.slane %v30, 7
    %v258 = vsel %vm255, %v256, %v257
    %v259 = vrot.slane %v27, 7
    %v260 = vrot.slane %v28, 7
    %v261 = vsel %vm255, %v259, %v260
    %v262 = vrot.slane %v31, 7
    %v263 = vrot.slane %v32, 7
    %v264 = vsel %vm255, %v262, %v263
    %v265 = vrot.slane %v33, 7
    %v266 = vrot.slane %v34, 7
    %v267 = vsel %vm255, %v265, %v266
    %v268 = vrot.slane %v35, 7
    %v269 = vrot.slane %v36, 7
    %v270 = vsel %vm255, %v268, %v269
    %v271 = vrot.slane %v37, 7
    %v272 = vrot.slane %v38, 7
    %v273 = vsel %vm255, %v271, %v272
    %v274 = vrot.slane %v39, 7
    %v275 = vrot.slane %v40, 7
    %v276 = vsel %vm255, %v274, %v275
    %v277 = vrot.slane %v41, 7
    %v278 = vrot.slane %v42, 7
    %v279 = vsel %vm255, %v277, %v278
    %v280 = vrot.slane %v43, 7
    %v281 = vrot.slane %v44, 7
    %v282 = vsel %vm255, %v280, %v281
    %v283 = vrot.slane %v45, 7
    %v284 = vrot.slane %v46, 7
    %v285 = vsel %vm255, %v283, %v284
    %v286 = vrot.slane %v47, 7
    %v287 = vrot.slane %v48, 7
    %v288 = vsel %vm255, %v286, %v287
    %v289 = vrot.slane %v49, 7
    %v290 = vrot.slane %v50, 7
    %v291 = vsel %vm255, %v289, %v290
    %v292 = vrot.slane %v51, 7
    %v293 = vrot.slane %v52, 7
    %v294 = vsel %vm255, %v292, %v293
    %v295 = vrot.slane %v53, 7
    %v296 = vrot.slane %v54, 7
    %v297 = vsel %vm255, %v295, %v296
    %v298 = vrot.slane %v55, 7
    %v299 = vrot.slane %v56, 7
    %v300 = vsel %vm255, %v298, %v299
    %v301 = vrot.slane %v57, 7
    %v302 = vrot.slane %v58, 7
    %v303 = vsel %vm255, %v301, %v302
    %v304 = vrot.slane %v61, 7
    %v305 = vrot.slane %v62, 7
    %v306 = vsel %vm255, %v304, %v305
    %v307 = vrot.slane %v59, 7
    %v308 = vrot.slane %v60, 7
    %v309 = vsel %vm255, %v307, %v308
    %v310 = vrot.slane %v63, 7
    %v311 = vrot.slane %v64, 7
    %v312 = vsel %vm255, %v310, %v311
    %v313 = vrot.slane %v65, 7
    %v314 = vrot.slane %v66, 7
    %v315 = vsel %vm255, %v313, %v314
    %v316 = vrot.slane %v67, 7
    %v317 = vrot.slane %v68, 7
    %v318 = vsel %vm255, %v316, %v317
    %v319 = vrot.slane %v69, 7
    %v320 = vrot.slane %v70, 7
    %v321 = vsel %vm255, %v319, %v320
    %v322 = vrot.slane %v71, 7
    %v323 = vrot.slane %v72, 7
    %v324 = vsel %vm255, %v322, %v323
    %v325 = vrot.slane %v73, 7
    %v326 = vrot.slane %v74, 7
    %v327 = vsel %vm255, %v325, %v326
    %v328 = vrot.slane %v75, 7
    %v329 = vrot.slane %v76, 7
    %v330 = vsel %vm255, %v328, %v329
    %v331 = vrot.slane %v77, 7
    %v332 = vrot.slane %v78, 7
    %v333 = vsel %vm255, %v331, %v332
    %v334 = vrot.slane %v79, 7
    %v335 = vrot.slane %v80, 7
    %v336 = vsel %vm255, %v334, %v335
    %v337 = vrot.slane %v81, 7
    %v338 = vrot.slane %v82, 7
    %v339 = vsel %vm255, %v337, %v338
    %v340 = vrot.slane %v83, 7
    %v341 = vrot.slane %v84, 7
    %v342 = vsel %vm255, %v340, %v341
    %v343 = vrot.slane %v85, 7
    %v344 = vrot.slane %v86, 7
    %v345 = vsel %vm255, %v343, %v344
    %v346 = vrot.slane %v87, 7
    %v347 = vrot.slane %v88, 7
    %v348 = vsel %vm255, %v346, %v347
    %v349 = vrot.slane %v89, 7
    %v350 = vrot.slane %v90, 7
    %v351 = vsel %vm255, %v349, %v350
    %v414 = vsel %vm255, %v159, %v256
    %v415 = vsel %vm255, %v160, %v259
    %v416 = vsel %vm255, %v161, %v262
    %v417 = vsel %vm255, %v162, %v265
    %v418 = vsel %vm255, %v163, %v268
    %v419 = vsel %vm255, %v164, %v271
    %v420 = vsel %vm255, %v165, %v274
    %v421 = vsel %vm255, %v166, %v277
    %v422 = vsel %vm255, %v167, %v280
    %v423 = vsel %vm255, %v168, %v283
    %v424 = vsel %vm255, %v169, %v286
    %v425 = vsel %vm255, %v170, %v289
    %v426 = vsel %vm255, %v171, %v292
    %v427 = vsel %vm255, %v172, %v295
    %v428 = vsel %vm255, %v173, %v298
    %v429 = vsel %vm255, %v174, %v301
    %v430 = vsel %vm255, %v175, %v304
    %v431 = vsel %vm255, %v176, %v307
    %v432 = vsel %vm255, %v177, %v310
    %v433 = vsel %vm255, %v178, %v313
    %v434 = vsel %vm255, %v179, %v316
    %v435 = vsel %vm255, %v180, %v319
    %v436 = vsel %vm255, %v181, %v322
    %v437 = vsel %vm255, %v182, %v325
    %v438 = vsel %vm255, %v183, %v328
    %v439 = vsel %vm255, %v184, %v331
    %v440 = vsel %vm255, %v185, %v334
    %v441 = vsel %vm255, %v186, %v337
    %v442 = vsel %vm255, %v187, %v340
    %v443 = vsel %vm255, %v188, %v343
    %v444 = vsel %vm255, %v189, %v346
    %v445 = vsel %vm255, %v190, %v349
    %vm446 = vcmask 1046528
    %v447 = vrot.slane %v30, 1
    %v448 = vsel %vm446, %v159, %v447
    %v449 = vrot.slane %v28, 1
    %v450 = vsel %vm446, %v160, %v449
    %v451 = vrot.slane %v32, 1
    %v452 = vsel %vm446, %v161, %v451
    %v453 = vrot.slane %v34, 1
    %v454 = vsel %vm446, %v162, %v453
    %v455 = vrot.slane %v36, 1
    %v456 = vsel %vm446, %v163, %v455
    %v457 = vrot.slane %v38, 1
    %v458 = vsel %vm446, %v164, %v457
    %v459 = vrot.slane %v40, 1
    %v460 = vsel %vm446, %v165, %v459
    %v461 = vrot.slane %v42, 1
    %v462 = vsel %vm446, %v166, %v461
    %v463 = vrot.slane %v44, 1
    %v464 = vsel %vm446, %v167, %v463
    %v465 = vrot.slane %v46, 1
    %v466 = vsel %vm446, %v168, %v465
    %v467 = vrot.slane %v48, 1
    %v468 = vsel %vm446, %v169, %v467
    %v469 = vrot.slane %v50, 1
    %v470 = vsel %vm446, %v170, %v469
    %v471 = vrot.slane %v52, 1
    %v472 = vsel %vm446, %v171, %v471
    %v473 = vrot.slane %v54, 1
    %v474 = vsel %vm446, %v172, %v473
    %v475 = vrot.slane %v56, 1
    %v476 = vsel %vm446, %v173, %v475
    %v477 = vrot.slane %v58, 1
    %v478 = vsel %vm446, %v174, %v477
    %v479 = vrot.slane %v62, 1
    %v480 = vsel %vm446, %v175, %v479
    %v481 = vrot.slane %v60, 1
    %v482 = vsel %vm446, %v176, %v481
    %v483 = vrot.slane %v64, 1
    %v484 = vsel %vm446, %v177, %v483
    %v485 = vrot.slane %v66, 1
    %v486 = vsel %vm446, %v178, %v485
    %v487 = vrot.slane %v68, 1
    %v488 = vsel %vm446, %v179, %v487
    %v489 = vrot.slane %v70, 1
    %v490 = vsel %vm446, %v180, %v489
    %v491 = vrot.slane %v72, 1
    %v492 = vsel %vm446, %v181, %v491
    %v493 = vrot.slane %v74, 1
    %v494 = vsel %vm446, %v182, %v493
    %v495 = vrot.slane %v76, 1
    %v496 = vsel %vm446, %v183, %v495
    %v497 = vrot.slane %v78, 1
    %v498 = vsel %vm446, %v184, %v497
    %v499 = vrot.slane %v80, 1
    %v500 = vsel %vm446, %v185, %v499
    %v501 = vrot.slane %v82, 1
    %v502 = vsel %vm446, %v186, %v501
    %v503 = vrot.slane %v84, 1
    %v504 = vsel %vm446, %v187, %v503
    %v505 = vrot.slane %v86, 1
    %v506 = vsel %vm446, %v188, %v505
    %v507 = vrot.slane %v88, 1
    %v508 = vsel %vm446, %v189, %v507
    %v509 = vrot.slane %v90, 1
    %v510 = vsel %vm446, %v190, %v509
    %v575 = vsel %vm446, %v447, %v257
    %v576 = vsel %vm446, %v449, %v260
    %v577 = vsel %vm446, %v451, %v263
    %v578 = vsel %vm446, %v453, %v266
    %v579 = vsel %vm446, %v455, %v269
    %v580 = vsel %vm446, %v457, %v272
    %v581 = vsel %vm446, %v459, %v275
    %v582 = vsel %vm446, %v461, %v278
    %v583 = vsel %vm446, %v463, %v281
    %v584 = vsel %vm446, %v465, %v284
    %v585 = vsel %vm446, %v467, %v287
    %v586 = vsel %vm446, %v469, %v290
    %v587 = vsel %vm446, %v471, %v293
    %v588 = vsel %vm446, %v473, %v296
    %v589 = vsel %vm446, %v475, %v299
    %v590 = vsel %vm446, %v477, %v302
    %v591 = vsel %vm446, %v479, %v305
    %v592 = vsel %vm446, %v481, %v308
    %v593 = vsel %vm446, %v483, %v311
    %v594 = vsel %vm446, %v485, %v314
    %v595 = vsel %vm446, %v487, %v317
    %v596 = vsel %vm446, %v489, %v320
    %v597 = vsel %vm446, %v491, %v323
    %v598 = vsel %vm446, %v493, %v326
    %v599 = vsel %vm446, %v495, %v329
    %v600 = vsel %vm446, %v497, %v332
    %v601 = vsel %vm446, %v499, %v335
    %v602 = vsel %vm446, %v501, %v338
    %v603 = vsel %vm446, %v503, %v341
    %v604 = vsel %vm446, %v505, %v344
    %v605 = vsel %vm446, %v507, %v347
    %v606 = vsel %vm446, %v509, %v350
    %607 = vrot.lane.b32.xlu0 %v29, 32
    %v608 = vpop.permute.xlu0 %607
    %609 = vrot.lane.b32.xlu0 %v30, 32
    %v610 = vpop.permute.xlu0 %609
    %611 = vrot.lane.b32.xlu0 %v27, 32
    %v612 = vpop.permute.xlu0 %611
    %613 = vrot.lane.b32.xlu0 %v28, 32
    %v614 = vpop.permute.xlu0 %613
    %615 = vrot.lane.b32.xlu0 %v31, 32
    %v616 = vpop.permute.xlu0 %615
    %617 = vrot.lane.b32.xlu0 %v32, 32
    %v618 = vpop.permute.xlu0 %617
    %619 = vrot.lane.b32.xlu0 %v33, 32
    %v620 = vpop.permute.xlu0 %619
    %621 = vrot.lane.b32.xlu0 %v34, 32
    %v622 = vpop.permute.xlu0 %621
    %623 = vrot.lane.b32.xlu0 %v35, 32
    %v624 = vpop.permute.xlu0 %623
    %625 = vrot.lane.b32.xlu0 %v36, 32
    %v626 = vpop.permute.xlu0 %625
    %627 = vrot.lane.b32.xlu0 %v37, 32
    %v628 = vpop.permute.xlu0 %627
    %629 = vrot.lane.b32.xlu0 %v38, 32
    %v630 = vpop.permute.xlu0 %629
    %631 = vrot.lane.b32.xlu0 %v39, 32
    %v632 = vpop.permute.xlu0 %631
    %633 = vrot.lane.b32.xlu0 %v40, 32
    %v634 = vpop.permute.xlu0 %633
    %635 = vrot.lane.b32.xlu0 %v41, 32
    %v636 = vpop.permute.xlu0 %635
    %637 = vrot.lane.b32.xlu0 %v42, 32
    %v638 = vpop.permute.xlu0 %637
    %639 = vrot.lane.b32.xlu0 %v43, 32
    %v640 = vpop.permute.xlu0 %639
    %641 = vrot.lane.b32.xlu0 %v44, 32
    %v642 = vpop.permute.xlu0 %641
    %643 = vrot.lane.b32.xlu0 %v45, 32
    %v644 = vpop.permute.xlu0 %643
    %645 = vrot.lane.b32.xlu0 %v46, 32
    %v646 = vpop.permute.xlu0 %645
    %647 = vrot.lane.b32.xlu0 %v47, 32
    %v648 = vpop.permute.xlu0 %647
    %649 = vrot.lane.b32.xlu0 %v48, 32
    %v650 = vpop.permute.xlu0 %649
    %651 = vrot.lane.b32.xlu0 %v49, 32
    %v652 = vpop.permute.xlu0 %651
    %653 = vrot.lane.b32.xlu0 %v50, 32
    %v654 = vpop.permute.xlu0 %653
    %655 = vrot.lane.b32.xlu0 %v51, 32
    %v656 = vpop.permute.xlu0 %655
    %657 = vrot.lane.b32.xlu0 %v52, 32
    %v658 = vpop.permute.xlu0 %657
    %659 = vrot.lane.b32.xlu0 %v53, 32
    %v660 = vpop.permute.xlu0 %659
    %661 = vrot.lane.b32.xlu0 %v54, 32
    %v662 = vpop.permute.xlu0 %661
    %663 = vrot.lane.b32.xlu0 %v55, 32
    %v664 = vpop.permute.xlu0 %663
    %665 = vrot.lane.b32.xlu0 %v56, 32
    %v666 = vpop.permute.xlu0 %665
    %667 = vrot.lane.b32.xlu0 %v61, 32
    %v668 = vpop.permute.xlu0 %667
    %669 = vrot.lane.b32.xlu0 %v62, 32
    %v670 = vpop.permute.xlu0 %669
    %671 = vrot.lane.b32.xlu0 %v59, 32
    %v672 = vpop.permute.xlu0 %671
    %673 = vrot.lane.b32.xlu0 %v60, 32
    %v674 = vpop.permute.xlu0 %673
    %675 = vrot.lane.b32.xlu0 %v63, 32
    %v676 = vpop.permute.xlu0 %675
    %677 = vrot.lane.b32.xlu0 %v64, 32
    %v678 = vpop.permute.xlu0 %677
    %679 = vrot.lane.b32.xlu0 %v65, 32
    %v680 = vpop.permute.xlu0 %679
    %681 = vrot.lane.b32.xlu0 %v66, 32
    %v682 = vpop.permute.xlu0 %681
    %683 = vrot.lane.b32.xlu0 %v67, 32
    %v684 = vpop.permute.xlu0 %683
    %685 = vrot.lane.b32.xlu0 %v68, 32
    %v686 = vpop.permute.xlu0 %685
    %687 = vrot.lane.b32.xlu0 %v69, 32
    %v688 = vpop.permute.xlu0 %687
    %689 = vrot.lane.b32.xlu0 %v70, 32
    %v690 = vpop.permute.xlu0 %689
    %691 = vrot.lane.b32.xlu0 %v71, 32
    %v692 = vpop.permute.xlu0 %691
    %693 = vrot.lane.b32.xlu0 %v72, 32
    %v694 = vpop.permute.xlu0 %693
    %695 = vrot.lane.b32.xlu0 %v73, 32
    %v696 = vpop.permute.xlu0 %695
    %697 = vrot.lane.b32.xlu0 %v74, 32
    %v698 = vpop.permute.xlu0 %697
    %699 = vrot.lane.b32.xlu0 %v75, 32
    %v700 = vpop.permute.xlu0 %699
    %701 = vrot.lane.b32.xlu0 %v76, 32
    %v702 = vpop.permute.xlu0 %701
    %703 = vrot.lane.b32.xlu0 %v77, 32
    %v704 = vpop.permute.xlu0 %703
    %705 = vrot.lane.b32.xlu0 %v78, 32
    %v706 = vpop.permute.xlu0 %705
    %707 = vrot.lane.b32.xlu0 %v79, 32
    %v708 = vpop.permute.xlu0 %707
    %709 = vrot.lane.b32.xlu0 %v80, 32
    %v710 = vpop.permute.xlu0 %709
    %711 = vrot.lane.b32.xlu0 %v81, 32
    %v712 = vpop.permute.xlu0 %711
    %713 = vrot.lane.b32.xlu0 %v82, 32
    %v714 = vpop.permute.xlu0 %713
    %715 = vrot.lane.b32.xlu0 %v83, 32
    %v716 = vpop.permute.xlu0 %715
    %717 = vrot.lane.b32.xlu0 %v84, 32
    %v718 = vpop.permute.xlu0 %717
    %719 = vrot.lane.b32.xlu0 %v85, 32
    %v720 = vpop.permute.xlu0 %719
    %721 = vrot.lane.b32.xlu0 %v86, 32
    %v722 = vpop.permute.xlu0 %721
    %723 = vrot.lane.b32.xlu0 %v87, 32
    %v724 = vpop.permute.xlu0 %723
    %725 = vrot.lane.b32.xlu0 %v88, 32
    %v726 = vpop.permute.xlu0 %725
    %817 = vrot.lane.b32.xlu0 %v448, 64
    %v818 = vpop.permute.xlu0 %817
    %819 = vrot.lane.b32.xlu0 %v575, 64
    %v820 = vpop.permute.xlu0 %819
    %821 = vrot.lane.b32.xlu0 %v450, 64
    %v822 = vpop.permute.xlu0 %821
    %823 = vrot.lane.b32.xlu0 %v576, 64
    %v824 = vpop.permute.xlu0 %823
    %825 = vrot.lane.b32.xlu0 %v452, 64
    %v826 = vpop.permute.xlu0 %825
    %827 = vrot.lane.b32.xlu0 %v577, 64
    %v828 = vpop.permute.xlu0 %827
    %829 = vrot.lane.b32.xlu0 %v454, 64
    %v830 = vpop.permute.xlu0 %829
    %831 = vrot.lane.b32.xlu0 %v578, 64
    %v832 = vpop.permute.xlu0 %831
    %833 = vrot.lane.b32.xlu0 %v456, 64
    %v834 = vpop.permute.xlu0 %833
    %835 = vrot.lane.b32.xlu0 %v579, 64
    %v836 = vpop.permute.xlu0 %835
    %837 = vrot.lane.b32.xlu0 %v458, 64
    %v838 = vpop.permute.xlu0 %837
    %839 = vrot.lane.b32.xlu0 %v580, 64
    %v840 = vpop.permute.xlu0 %839
    %841 = vrot.lane.b32.xlu0 %v460, 64
    %v842 = vpop.permute.xlu0 %841
    %843 = vrot.lane.b32.xlu0 %v581, 64
    %v844 = vpop.permute.xlu0 %843
    %845 = vrot.lane.b32.xlu0 %v462, 64
    %v846 = vpop.permute.xlu0 %845
    %847 = vrot.lane.b32.xlu0 %v582, 64
    %v848 = vpop.permute.xlu0 %847
    %849 = vrot.lane.b32.xlu0 %v464, 64
    %v850 = vpop.permute.xlu0 %849
    %851 = vrot.lane.b32.xlu0 %v583, 64
    %v852 = vpop.permute.xlu0 %851
    %853 = vrot.lane.b32.xlu0 %v466, 64
    %v854 = vpop.permute.xlu0 %853
    %855 = vrot.lane.b32.xlu0 %v584, 64
    %v856 = vpop.permute.xlu0 %855
    %857 = vrot.lane.b32.xlu0 %v468, 64
    %v858 = vpop.permute.xlu0 %857
    %859 = vrot.lane.b32.xlu0 %v585, 64
    %v860 = vpop.permute.xlu0 %859
    %861 = vrot.lane.b32.xlu0 %v470, 64
    %v862 = vpop.permute.xlu0 %861
    %863 = vrot.lane.b32.xlu0 %v586, 64
    %v864 = vpop.permute.xlu0 %863
    %865 = vrot.lane.b32.xlu0 %v472, 64
    %v866 = vpop.permute.xlu0 %865
    %867 = vrot.lane.b32.xlu0 %v587, 64
    %v868 = vpop.permute.xlu0 %867
    %869 = vrot.lane.b32.xlu0 %v474, 64
    %v870 = vpop.permute.xlu0 %869
    %871 = vrot.lane.b32.xlu0 %v588, 64
    %v872 = vpop.permute.xlu0 %871
    %873 = vrot.lane.b32.xlu0 %v476, 64
    %v874 = vpop.permute.xlu0 %873
    %875 = vrot.lane.b32.xlu0 %v589, 64
    %v876 = vpop.permute.xlu0 %875
    %877 = vrot.lane.b32.xlu0 %v480, 64
    %v878 = vpop.permute.xlu0 %877
    %879 = vrot.lane.b32.xlu0 %v591, 64
    %v880 = vpop.permute.xlu0 %879
    %881 = vrot.lane.b32.xlu0 %v482, 64
    %v882 = vpop.permute.xlu0 %881
    %883 = vrot.lane.b32.xlu0 %v592, 64
    %v884 = vpop.permute.xlu0 %883
    %885 = vrot.lane.b32.xlu0 %v484, 64
    %v886 = vpop.permute.xlu0 %885
    %887 = vrot.lane.b32.xlu0 %v593, 64
    %v888 = vpop.permute.xlu0 %887
    %889 = vrot.lane.b32.xlu0 %v486, 64
    %v890 = vpop.permute.xlu0 %889
    %891 = vrot.lane.b32.xlu0 %v594, 64
    %v892 = vpop.permute.xlu0 %891
    %893 = vrot.lane.b32.xlu0 %v488, 64
    %v894 = vpop.permute.xlu0 %893
    %895 = vrot.lane.b32.xlu0 %v595, 64
    %v896 = vpop.permute.xlu0 %895
    %897 = vrot.lane.b32.xlu0 %v490, 64
    %v898 = vpop.permute.xlu0 %897
    %899 = vrot.lane.b32.xlu0 %v596, 64
    %v900 = vpop.permute.xlu0 %899
    %901 = vrot.lane.b32.xlu0 %v492, 64
    %v902 = vpop.permute.xlu0 %901
    %903 = vrot.lane.b32.xlu0 %v597, 64
    %v904 = vpop.permute.xlu0 %903
    %905 = vrot.lane.b32.xlu0 %v494, 64
    %v906 = vpop.permute.xlu0 %905
    %907 = vrot.lane.b32.xlu0 %v598, 64
    %v908 = vpop.permute.xlu0 %907
    %909 = vrot.lane.b32.xlu0 %v496, 64
    %v910 = vpop.permute.xlu0 %909
    %911 = vrot.lane.b32.xlu0 %v599, 64
    %v912 = vpop.permute.xlu0 %911
    %913 = vrot.lane.b32.xlu0 %v498, 64
    %v914 = vpop.permute.xlu0 %913
    %915 = vrot.lane.b32.xlu0 %v600, 64
    %v916 = vpop.permute.xlu0 %915
    %917 = vrot.lane.b32.xlu0 %v500, 64
    %v918 = vpop.permute.xlu0 %917
    %919 = vrot.lane.b32.xlu0 %v601, 64
    %v920 = vpop.permute.xlu0 %919
    %921 = vrot.lane.b32.xlu0 %v502, 64
    %v922 = vpop.permute.xlu0 %921
    %923 = vrot.lane.b32.xlu0 %v602, 64
    %v924 = vpop.permute.xlu0 %923
    %925 = vrot.lane.b32.xlu0 %v504, 64
    %v926 = vpop.permute.xlu0 %925
    %927 = vrot.lane.b32.xlu0 %v603, 64
    %v928 = vpop.permute.xlu0 %927
    %929 = vrot.lane.b32.xlu0 %v506, 64
    %v930 = vpop.permute.xlu0 %929
    %931 = vrot.lane.b32.xlu0 %v604, 64
    %v932 = vpop.permute.xlu0 %931
    %933 = vrot.lane.b32.xlu0 %v508, 64
    %v934 = vpop.permute.xlu0 %933
    %935 = vrot.lane.b32.xlu0 %v605, 64
    %v936 = vpop.permute.xlu0 %935
    %1029 = vrot.lane.b32.xlu0 %v415, 96
    %v1030 = vpop.permute.xlu0 %1029
    %1031 = vrot.lane.b32.xlu0 %v261, 96
    %v1032 = vpop.permute.xlu0 %1031
    %1033 = vrot.lane.b32.xlu0 %v414, 96
    %v1034 = vpop.permute.xlu0 %1033
    %1035 = vrot.lane.b32.xlu0 %v258, 96
    %v1036 = vpop.permute.xlu0 %1035
    %1037 = vrot.lane.b32.xlu0 %v416, 96
    %v1038 = vpop.permute.xlu0 %1037
    %1039 = vrot.lane.b32.xlu0 %v264, 96
    %v1040 = vpop.permute.xlu0 %1039
    %1041 = vrot.lane.b32.xlu0 %v417, 96
    %v1042 = vpop.permute.xlu0 %1041
    %1043 = vrot.lane.b32.xlu0 %v267, 96
    %v1044 = vpop.permute.xlu0 %1043
    %1045 = vrot.lane.b32.xlu0 %v418, 96
    %v1046 = vpop.permute.xlu0 %1045
    %1047 = vrot.lane.b32.xlu0 %v270, 96
    %v1048 = vpop.permute.xlu0 %1047
    %1049 = vrot.lane.b32.xlu0 %v419, 96
    %v1050 = vpop.permute.xlu0 %1049
    %1051 = vrot.lane.b32.xlu0 %v273, 96
    %v1052 = vpop.permute.xlu0 %1051
    %1053 = vrot.lane.b32.xlu0 %v420, 96
    %v1054 = vpop.permute.xlu0 %1053
    %1055 = vrot.lane.b32.xlu0 %v276, 96
    %v1056 = vpop.permute.xlu0 %1055
    %1057 = vrot.lane.b32.xlu0 %v421, 96
    %v1058 = vpop.permute.xlu0 %1057
    %1059 = vrot.lane.b32.xlu0 %v279, 96
    %v1060 = vpop.permute.xlu0 %1059
    %1061 = vrot.lane.b32.xlu0 %v422, 96
    %v1062 = vpop.permute.xlu0 %1061
    %1063 = vrot.lane.b32.xlu0 %v282, 96
    %v1064 = vpop.permute.xlu0 %1063
    %1065 = vrot.lane.b32.xlu0 %v423, 96
    %v1066 = vpop.permute.xlu0 %1065
    %1067 = vrot.lane.b32.xlu0 %v285, 96
    %v1068 = vpop.permute.xlu0 %1067
    %1069 = vrot.lane.b32.xlu0 %v424, 96
    %v1070 = vpop.permute.xlu0 %1069
    %1071 = vrot.lane.b32.xlu0 %v288, 96
    %v1072 = vpop.permute.xlu0 %1071
    %1073 = vrot.lane.b32.xlu0 %v425, 96
    %v1074 = vpop.permute.xlu0 %1073
    %1075 = vrot.lane.b32.xlu0 %v291, 96
    %v1076 = vpop.permute.xlu0 %1075
    %1077 = vrot.lane.b32.xlu0 %v426, 96
    %v1078 = vpop.permute.xlu0 %1077
    %1079 = vrot.lane.b32.xlu0 %v294, 96
    %v1080 = vpop.permute.xlu0 %1079
    %1081 = vrot.lane.b32.xlu0 %v427, 96
    %v1082 = vpop.permute.xlu0 %1081
    %1083 = vrot.lane.b32.xlu0 %v297, 96
    %v1084 = vpop.permute.xlu0 %1083
    %1085 = vrot.lane.b32.xlu0 %v428, 96
    %v1086 = vpop.permute.xlu0 %1085
    %1087 = vrot.lane.b32.xlu0 %v300, 96
    %v1088 = vpop.permute.xlu0 %1087
    %1089 = vrot.lane.b32.xlu0 %v429, 96
    %v1090 = vpop.permute.xlu0 %1089
    %1091 = vrot.lane.b32.xlu0 %v303, 96
    %v1092 = vpop.permute.xlu0 %1091
    %1093 = vrot.lane.b32.xlu0 %v431, 96
    %v1094 = vpop.permute.xlu0 %1093
    %1095 = vrot.lane.b32.xlu0 %v309, 96
    %v1096 = vpop.permute.xlu0 %1095
    %1097 = vrot.lane.b32.xlu0 %v430, 96
    %v1098 = vpop.permute.xlu0 %1097
    %1099 = vrot.lane.b32.xlu0 %v306, 96
    %v1100 = vpop.permute.xlu0 %1099
    %1101 = vrot.lane.b32.xlu0 %v432, 96
    %v1102 = vpop.permute.xlu0 %1101
    %1103 = vrot.lane.b32.xlu0 %v312, 96
    %v1104 = vpop.permute.xlu0 %1103
    %1105 = vrot.lane.b32.xlu0 %v433, 96
    %v1106 = vpop.permute.xlu0 %1105
    %1107 = vrot.lane.b32.xlu0 %v315, 96
    %v1108 = vpop.permute.xlu0 %1107
    %1109 = vrot.lane.b32.xlu0 %v434, 96
    %v1110 = vpop.permute.xlu0 %1109
    %1111 = vrot.lane.b32.xlu0 %v318, 96
    %v1112 = vpop.permute.xlu0 %1111
    %1113 = vrot.lane.b32.xlu0 %v435, 96
    %v1114 = vpop.permute.xlu0 %1113
    %1115 = vrot.lane.b32.xlu0 %v321, 96
    %v1116 = vpop.permute.xlu0 %1115
    %1117 = vrot.lane.b32.xlu0 %v436, 96
    %v1118 = vpop.permute.xlu0 %1117
    %1119 = vrot.lane.b32.xlu0 %v324, 96
    %v1120 = vpop.permute.xlu0 %1119
    %1121 = vrot.lane.b32.xlu0 %v437, 96
    %v1122 = vpop.permute.xlu0 %1121
    %1123 = vrot.lane.b32.xlu0 %v327, 96
    %v1124 = vpop.permute.xlu0 %1123
    %1125 = vrot.lane.b32.xlu0 %v438, 96
    %v1126 = vpop.permute.xlu0 %1125
    %1127 = vrot.lane.b32.xlu0 %v330, 96
    %v1128 = vpop.permute.xlu0 %1127
    %1129 = vrot.lane.b32.xlu0 %v439, 96
    %v1130 = vpop.permute.xlu0 %1129
    %1131 = vrot.lane.b32.xlu0 %v333, 96
    %v1132 = vpop.permute.xlu0 %1131
    %1133 = vrot.lane.b32.xlu0 %v440, 96
    %v1134 = vpop.permute.xlu0 %1133
    %1135 = vrot.lane.b32.xlu0 %v336, 96
    %v1136 = vpop.permute.xlu0 %1135
    %1137 = vrot.lane.b32.xlu0 %v441, 96
    %v1138 = vpop.permute.xlu0 %1137
    %1139 = vrot.lane.b32.xlu0 %v339, 96
    %v1140 = vpop.permute.xlu0 %1139
    %1141 = vrot.lane.b32.xlu0 %v442, 96
    %v1142 = vpop.permute.xlu0 %1141
    %1143 = vrot.lane.b32.xlu0 %v342, 96
    %v1144 = vpop.permute.xlu0 %1143
    %1145 = vrot.lane.b32.xlu0 %v443, 96
    %v1146 = vpop.permute.xlu0 %1145
    %1147 = vrot.lane.b32.xlu0 %v345, 96
    %v1148 = vpop.permute.xlu0 %1147
    %1149 = vrot.lane.b32.xlu0 %v444, 96
    %v1150 = vpop.permute.xlu0 %1149
    %1151 = vrot.lane.b32.xlu0 %v348, 96
    %v1152 = vpop.permute.xlu0 %1151
    %1153 = vrot.lane.b32.xlu0 %v445, 96
    %v1154 = vpop.permute.xlu0 %1153
    %1155 = vrot.lane.b32.xlu0 %v351, 96
    %v1156 = vpop.permute.xlu0 %1155
    %1223 = vrot.lane.b32.xlu0 %v450, 32
    %v1224 = vpop.permute.xlu0 %1223
    %1225 = vrot.lane.b32.xlu0 %v576, 32
    %v1226 = vpop.permute.xlu0 %1225
    %1227 = vrot.lane.b32.xlu0 %v448, 32
    %v1228 = vpop.permute.xlu0 %1227
    %1229 = vrot.lane.b32.xlu0 %v575, 32
    %v1230 = vpop.permute.xlu0 %1229
    %1231 = vrot.lane.b32.xlu0 %v452, 32
    %v1232 = vpop.permute.xlu0 %1231
    %1233 = vrot.lane.b32.xlu0 %v577, 32
    %v1234 = vpop.permute.xlu0 %1233
    %1235 = vrot.lane.b32.xlu0 %v454, 32
    %v1236 = vpop.permute.xlu0 %1235
    %1237 = vrot.lane.b32.xlu0 %v578, 32
    %v1238 = vpop.permute.xlu0 %1237
    %1239 = vrot.lane.b32.xlu0 %v456, 32
    %v1240 = vpop.permute.xlu0 %1239
    %1241 = vrot.lane.b32.xlu0 %v579, 32
    %v1242 = vpop.permute.xlu0 %1241
    %1243 = vrot.lane.b32.xlu0 %v458, 32
    %v1244 = vpop.permute.xlu0 %1243
    %1245 = vrot.lane.b32.xlu0 %v580, 32
    %v1246 = vpop.permute.xlu0 %1245
    %1247 = vrot.lane.b32.xlu0 %v460, 32
    %v1248 = vpop.permute.xlu0 %1247
    %1249 = vrot.lane.b32.xlu0 %v581, 32
    %v1250 = vpop.permute.xlu0 %1249
    %1251 = vrot.lane.b32.xlu0 %v462, 32
    %v1252 = vpop.permute.xlu0 %1251
    %1253 = vrot.lane.b32.xlu0 %v582, 32
    %v1254 = vpop.permute.xlu0 %1253
    %1255 = vrot.lane.b32.xlu0 %v464, 32
    %v1256 = vpop.permute.xlu0 %1255
    %1257 = vrot.lane.b32.xlu0 %v583, 32
    %v1258 = vpop.permute.xlu0 %1257
    %1259 = vrot.lane.b32.xlu0 %v466, 32
    %v1260 = vpop.permute.xlu0 %1259
    %1261 = vrot.lane.b32.xlu0 %v584, 32
    %v1262 = vpop.permute.xlu0 %1261
    %1263 = vrot.lane.b32.xlu0 %v468, 32
    %v1264 = vpop.permute.xlu0 %1263
    %1265 = vrot.lane.b32.xlu0 %v585, 32
    %v1266 = vpop.permute.xlu0 %1265
    %1267 = vrot.lane.b32.xlu0 %v470, 32
    %v1268 = vpop.permute.xlu0 %1267
    %1269 = vrot.lane.b32.xlu0 %v586, 32
    %v1270 = vpop.permute.xlu0 %1269
    %1271 = vrot.lane.b32.xlu0 %v472, 32
    %v1272 = vpop.permute.xlu0 %1271
    %1273 = vrot.lane.b32.xlu0 %v587, 32
    %v1274 = vpop.permute.xlu0 %1273
    %1275 = vrot.lane.b32.xlu0 %v474, 32
    %v1276 = vpop.permute.xlu0 %1275
    %1277 = vrot.lane.b32.xlu0 %v588, 32
    %v1278 = vpop.permute.xlu0 %1277
    %1279 = vrot.lane.b32.xlu0 %v476, 32
    %v1280 = vpop.permute.xlu0 %1279
    %1281 = vrot.lane.b32.xlu0 %v589, 32
    %v1282 = vpop.permute.xlu0 %1281
    %1283 = vrot.lane.b32.xlu0 %v478, 32
    %v1284 = vpop.permute.xlu0 %1283
    %1285 = vrot.lane.b32.xlu0 %v590, 32
    %v1286 = vpop.permute.xlu0 %1285
    %1287 = vrot.lane.b32.xlu0 %v482, 32
    %v1288 = vpop.permute.xlu0 %1287
    %1289 = vrot.lane.b32.xlu0 %v592, 32
    %v1290 = vpop.permute.xlu0 %1289
    %1291 = vrot.lane.b32.xlu0 %v480, 32
    %v1292 = vpop.permute.xlu0 %1291
    %1293 = vrot.lane.b32.xlu0 %v591, 32
    %v1294 = vpop.permute.xlu0 %1293
    %1295 = vrot.lane.b32.xlu0 %v484, 32
    %v1296 = vpop.permute.xlu0 %1295
    %1297 = vrot.lane.b32.xlu0 %v593, 32
    %v1298 = vpop.permute.xlu0 %1297
    %1299 = vrot.lane.b32.xlu0 %v486, 32
    %v1300 = vpop.permute.xlu0 %1299
    %1301 = vrot.lane.b32.xlu0 %v594, 32
    %v1302 = vpop.permute.xlu0 %1301
    %1303 = vrot.lane.b32.xlu0 %v488, 32
    %v1304 = vpop.permute.xlu0 %1303
    %1305 = vrot.lane.b32.xlu0 %v595, 32
    %v1306 = vpop.permute.xlu0 %1305
    %1307 = vrot.lane.b32.xlu0 %v490, 32
    %v1308 = vpop.permute.xlu0 %1307
    %1309 = vrot.lane.b32.xlu0 %v596, 32
    %v1310 = vpop.permute.xlu0 %1309
    %1311 = vrot.lane.b32.xlu0 %v492, 32
    %v1312 = vpop.permute.xlu0 %1311
    %1313 = vrot.lane.b32.xlu0 %v597, 32
    %v1314 = vpop.permute.xlu0 %1313
    %1315 = vrot.lane.b32.xlu0 %v494, 32
    %v1316 = vpop.permute.xlu0 %1315
    %1317 = vrot.lane.b32.xlu0 %v598, 32
    %v1318 = vpop.permute.xlu0 %1317
    %1319 = vrot.lane.b32.xlu0 %v496, 32
    %v1320 = vpop.permute.xlu0 %1319
    %1321 = vrot.lane.b32.xlu0 %v599, 32
    %v1322 = vpop.permute.xlu0 %1321
    %1323 = vrot.lane.b32.xlu0 %v498, 32
    %v1324 = vpop.permute.xlu0 %1323
    %1325 = vrot.lane.b32.xlu0 %v600, 32
    %v1326 = vpop.permute.xlu0 %1325
    %1327 = vrot.lane.b32.xlu0 %v500, 32
    %v1328 = vpop.permute.xlu0 %1327
    %1329 = vrot.lane.b32.xlu0 %v601, 32
    %v1330 = vpop.permute.xlu0 %1329
    %1331 = vrot.lane.b32.xlu0 %v502, 32
    %v1332 = vpop.permute.xlu0 %1331
    %1333 = vrot.lane.b32.xlu0 %v602, 32
    %v1334 = vpop.permute.xlu0 %1333
    %1335 = vrot.lane.b32.xlu0 %v504, 32
    %v1336 = vpop.permute.xlu0 %1335
    %1337 = vrot.lane.b32.xlu0 %v603, 32
    %v1338 = vpop.permute.xlu0 %1337
    %1339 = vrot.lane.b32.xlu0 %v506, 32
    %v1340 = vpop.permute.xlu0 %1339
    %1341 = vrot.lane.b32.xlu0 %v604, 32
    %v1342 = vpop.permute.xlu0 %1341
    %1343 = vrot.lane.b32.xlu0 %v508, 32
    %v1344 = vpop.permute.xlu0 %1343
    %1345 = vrot.lane.b32.xlu0 %v605, 32
    %v1346 = vpop.permute.xlu0 %1345
    %1347 = vrot.lane.b32.xlu0 %v510, 32
    %v1348 = vpop.permute.xlu0 %1347
    %1349 = vrot.lane.b32.xlu0 %v606, 32
    %v1350 = vpop.permute.xlu0 %1349
    %1415 = vrot.lane.b32.xlu0 %v414, 64
    %v1416 = vpop.permute.xlu0 %1415
    %1417 = vrot.lane.b32.xlu0 %v258, 64
    %v1418 = vpop.permute.xlu0 %1417
    %1419 = vrot.lane.b32.xlu0 %v416, 64
    %v1420 = vpop.permute.xlu0 %1419
    %1421 = vrot.lane.b32.xlu0 %v264, 64
    %v1422 = vpop.permute.xlu0 %1421
    %1423 = vrot.lane.b32.xlu0 %v417, 64
    %v1424 = vpop.permute.xlu0 %1423
    %1425 = vrot.lane.b32.xlu0 %v267, 64
    %v1426 = vpop.permute.xlu0 %1425
    %1427 = vrot.lane.b32.xlu0 %v418, 64
    %v1428 = vpop.permute.xlu0 %1427
    %1429 = vrot.lane.b32.xlu0 %v270, 64
    %v1430 = vpop.permute.xlu0 %1429
    %1431 = vrot.lane.b32.xlu0 %v419, 64
    %v1432 = vpop.permute.xlu0 %1431
    %1433 = vrot.lane.b32.xlu0 %v273, 64
    %v1434 = vpop.permute.xlu0 %1433
    %1435 = vrot.lane.b32.xlu0 %v420, 64
    %v1436 = vpop.permute.xlu0 %1435
    %1437 = vrot.lane.b32.xlu0 %v276, 64
    %v1438 = vpop.permute.xlu0 %1437
    %1439 = vrot.lane.b32.xlu0 %v421, 64
    %v1440 = vpop.permute.xlu0 %1439
    %1441 = vrot.lane.b32.xlu0 %v279, 64
    %v1442 = vpop.permute.xlu0 %1441
    %1443 = vrot.lane.b32.xlu0 %v422, 64
    %v1444 = vpop.permute.xlu0 %1443
    %1445 = vrot.lane.b32.xlu0 %v282, 64
    %v1446 = vpop.permute.xlu0 %1445
    %1447 = vrot.lane.b32.xlu0 %v423, 64
    %v1448 = vpop.permute.xlu0 %1447
    %1449 = vrot.lane.b32.xlu0 %v285, 64
    %v1450 = vpop.permute.xlu0 %1449
    %1451 = vrot.lane.b32.xlu0 %v424, 64
    %v1452 = vpop.permute.xlu0 %1451
    %1453 = vrot.lane.b32.xlu0 %v288, 64
    %v1454 = vpop.permute.xlu0 %1453
    %1455 = vrot.lane.b32.xlu0 %v425, 64
    %v1456 = vpop.permute.xlu0 %1455
    %1457 = vrot.lane.b32.xlu0 %v291, 64
    %v1458 = vpop.permute.xlu0 %1457
    %1459 = vrot.lane.b32.xlu0 %v426, 64
    %v1460 = vpop.permute.xlu0 %1459
    %1461 = vrot.lane.b32.xlu0 %v294, 64
    %v1462 = vpop.permute.xlu0 %1461
    %1463 = vrot.lane.b32.xlu0 %v427, 64
    %v1464 = vpop.permute.xlu0 %1463
    %1465 = vrot.lane.b32.xlu0 %v297, 64
    %v1466 = vpop.permute.xlu0 %1465
    %1467 = vrot.lane.b32.xlu0 %v428, 64
    %v1468 = vpop.permute.xlu0 %1467
    %1469 = vrot.lane.b32.xlu0 %v300, 64
    %v1470 = vpop.permute.xlu0 %1469
    %1471 = vrot.lane.b32.xlu0 %v429, 64
    %v1472 = vpop.permute.xlu0 %1471
    %1473 = vrot.lane.b32.xlu0 %v303, 64
    %v1474 = vpop.permute.xlu0 %1473
    %1475 = vrot.lane.b32.xlu0 %v430, 64
    %v1476 = vpop.permute.xlu0 %1475
    %1477 = vrot.lane.b32.xlu0 %v306, 64
    %v1478 = vpop.permute.xlu0 %1477
    %1479 = vrot.lane.b32.xlu0 %v432, 64
    %v1480 = vpop.permute.xlu0 %1479
    %1481 = vrot.lane.b32.xlu0 %v312, 64
    %v1482 = vpop.permute.xlu0 %1481
    %1483 = vrot.lane.b32.xlu0 %v433, 64
    %v1484 = vpop.permute.xlu0 %1483
    %1485 = vrot.lane.b32.xlu0 %v315, 64
    %v1486 = vpop.permute.xlu0 %1485
    %1487 = vrot.lane.b32.xlu0 %v434, 64
    %v1488 = vpop.permute.xlu0 %1487
    %1489 = vrot.lane.b32.xlu0 %v318, 64
    %v1490 = vpop.permute.xlu0 %1489
    %1491 = vrot.lane.b32.xlu0 %v435, 64
    %v1492 = vpop.permute.xlu0 %1491
    %1493 = vrot.lane.b32.xlu0 %v321, 64
    %v1494 = vpop.permute.xlu0 %1493
    %1495 = vrot.lane.b32.xlu0 %v436, 64
    %v1496 = vpop.permute.xlu0 %1495
    %1497 = vrot.lane.b32.xlu0 %v324, 64
    %v1498 = vpop.permute.xlu0 %1497
    %1499 = vrot.lane.b32.xlu0 %v437, 64
    %v1500 = vpop.permute.xlu0 %1499
    %1501 = vrot.lane.b32.xlu0 %v327, 64
    %v1502 = vpop.permute.xlu0 %1501
    %1503 = vrot.lane.b32.xlu0 %v438, 64
    %v1504 = vpop.permute.xlu0 %1503
    %1505 = vrot.lane.b32.xlu0 %v330, 64
    %v1506 = vpop.permute.xlu0 %1505
    %1507 = vrot.lane.b32.xlu0 %v439, 64
    %v1508 = vpop.permute.xlu0 %1507
    %1509 = vrot.lane.b32.xlu0 %v333, 64
    %v1510 = vpop.permute.xlu0 %1509
    %1511 = vrot.lane.b32.xlu0 %v440, 64
    %v1512 = vpop.permute.xlu0 %1511
    %1513 = vrot.lane.b32.xlu0 %v336, 64
    %v1514 = vpop.permute.xlu0 %1513
    %1515 = vrot.lane.b32.xlu0 %v441, 64
    %v1516 = vpop.permute.xlu0 %1515
    %1517 = vrot.lane.b32.xlu0 %v339, 64
    %v1518 = vpop.permute.xlu0 %1517
    %1519 = vrot.lane.b32.xlu0 %v442, 64
    %v1520 = vpop.permute.xlu0 %1519
    %1521 = vrot.lane.b32.xlu0 %v342, 64
    %v1522 = vpop.permute.xlu0 %1521
    %1523 = vrot.lane.b32.xlu0 %v443, 64
    %v1524 = vpop.permute.xlu0 %1523
    %1525 = vrot.lane.b32.xlu0 %v345, 64
    %v1526 = vpop.permute.xlu0 %1525
    %1527 = vrot.lane.b32.xlu0 %v444, 64
    %v1528 = vpop.permute.xlu0 %1527
    %1529 = vrot.lane.b32.xlu0 %v348, 64
    %v1530 = vpop.permute.xlu0 %1529
    %1531 = vrot.lane.b32.xlu0 %v445, 64
    %v1532 = vpop.permute.xlu0 %1531
    %1533 = vrot.lane.b32.xlu0 %v351, 64
    %v1534 = vpop.permute.xlu0 %1533
    %1595 = vrot.lane.b32.xlu0 %v29, 96
    %v1596 = vpop.permute.xlu0 %1595
    %1597 = vrot.lane.b32.xlu0 %v30, 96
    %v1598 = vpop.permute.xlu0 %1597
    %1599 = vrot.lane.b32.xlu0 %v31, 96
    %v1600 = vpop.permute.xlu0 %1599
    %1601 = vrot.lane.b32.xlu0 %v32, 96
    %v1602 = vpop.permute.xlu0 %1601
    %1603 = vrot.lane.b32.xlu0 %v33, 96
    %v1604 = vpop.permute.xlu0 %1603
    %1605 = vrot.lane.b32.xlu0 %v34, 96
    %v1606 = vpop.permute.xlu0 %1605
    %1607 = vrot.lane.b32.xlu0 %v35, 96
    %v1608 = vpop.permute.xlu0 %1607
    %1609 = vrot.lane.b32.xlu0 %v36, 96
    %v1610 = vpop.permute.xlu0 %1609
    %1611 = vrot.lane.b32.xlu0 %v37, 96
    %v1612 = vpop.permute.xlu0 %1611
    %1613 = vrot.lane.b32.xlu0 %v38, 96
    %v1614 = vpop.permute.xlu0 %1613
    %1615 = vrot.lane.b32.xlu0 %v39, 96
    %v1616 = vpop.permute.xlu0 %1615
    %1617 = vrot.lane.b32.xlu0 %v40, 96
    %v1618 = vpop.permute.xlu0 %1617
    %1619 = vrot.lane.b32.xlu0 %v41, 96
    %v1620 = vpop.permute.xlu0 %1619
    %1621 = vrot.lane.b32.xlu0 %v42, 96
    %v1622 = vpop.permute.xlu0 %1621
    %1623 = vrot.lane.b32.xlu0 %v43, 96
    %v1624 = vpop.permute.xlu0 %1623
    %1625 = vrot.lane.b32.xlu0 %v44, 96
    %v1626 = vpop.permute.xlu0 %1625
    %1627 = vrot.lane.b32.xlu0 %v45, 96
    %v1628 = vpop.permute.xlu0 %1627
    %1629 = vrot.lane.b32.xlu0 %v46, 96
    %v1630 = vpop.permute.xlu0 %1629
    %1631 = vrot.lane.b32.xlu0 %v47, 96
    %v1632 = vpop.permute.xlu0 %1631
    %1633 = vrot.lane.b32.xlu0 %v48, 96
    %v1634 = vpop.permute.xlu0 %1633
    %1635 = vrot.lane.b32.xlu0 %v49, 96
    %v1636 = vpop.permute.xlu0 %1635
    %1637 = vrot.lane.b32.xlu0 %v50, 96
    %v1638 = vpop.permute.xlu0 %1637
    %1639 = vrot.lane.b32.xlu0 %v51, 96
    %v1640 = vpop.permute.xlu0 %1639
    %1641 = vrot.lane.b32.xlu0 %v52, 96
    %v1642 = vpop.permute.xlu0 %1641
    %1643 = vrot.lane.b32.xlu0 %v53, 96
    %v1644 = vpop.permute.xlu0 %1643
    %1645 = vrot.lane.b32.xlu0 %v54, 96
    %v1646 = vpop.permute.xlu0 %1645
    %1647 = vrot.lane.b32.xlu0 %v55, 96
    %v1648 = vpop.permute.xlu0 %1647
    %1649 = vrot.lane.b32.xlu0 %v56, 96
    %v1650 = vpop.permute.xlu0 %1649
    %1651 = vrot.lane.b32.xlu0 %v57, 96
    %v1652 = vpop.permute.xlu0 %1651
    %1653 = vrot.lane.b32.xlu0 %v58, 96
    %v1654 = vpop.permute.xlu0 %1653
    %1655 = vrot.lane.b32.xlu0 %v61, 96
    %v1656 = vpop.permute.xlu0 %1655
    %1657 = vrot.lane.b32.xlu0 %v62, 96
    %v1658 = vpop.permute.xlu0 %1657
    %1659 = vrot.lane.b32.xlu0 %v63, 96
    %v1660 = vpop.permute.xlu0 %1659
    %1661 = vrot.lane.b32.xlu0 %v64, 96
    %v1662 = vpop.permute.xlu0 %1661
    %1663 = vrot.lane.b32.xlu0 %v65, 96
    %v1664 = vpop.permute.xlu0 %1663
    %1665 = vrot.lane.b32.xlu0 %v66, 96
    %v1666 = vpop.permute.xlu0 %1665
    %1667 = vrot.lane.b32.xlu0 %v67, 96
    %v1668 = vpop.permute.xlu0 %1667
    %1669 = vrot.lane.b32.xlu0 %v68, 96
    %v1670 = vpop.permute.xlu0 %1669
    %1671 = vrot.lane.b32.xlu0 %v69, 96
    %v1672 = vpop.permute.xlu0 %1671
    %1673 = vrot.lane.b32.xlu0 %v70, 96
    %v1674 = vpop.permute.xlu0 %1673
    %1675 = vrot.lane.b32.xlu0 %v71, 96
    %v1676 = vpop.permute.xlu0 %1675
    %1677 = vrot.lane.b32.xlu0 %v72, 96
    %v1678 = vpop.permute.xlu0 %1677
    %1679 = vrot.lane.b32.xlu0 %v73, 96
    %v1680 = vpop.permute.xlu0 %1679
    %1681 = vrot.lane.b32.xlu0 %v74, 96
    %v1682 = vpop.permute.xlu0 %1681
    %1683 = vrot.lane.b32.xlu0 %v75, 96
    %v1684 = vpop.permute.xlu0 %1683
    %1685 = vrot.lane.b32.xlu0 %v76, 96
    %v1686 = vpop.permute.xlu0 %1685
    %1687 = vrot.lane.b32.xlu0 %v77, 96
    %v1688 = vpop.permute.xlu0 %1687
    %1689 = vrot.lane.b32.xlu0 %v78, 96
    %v1690 = vpop.permute.xlu0 %1689
    %1691 = vrot.lane.b32.xlu0 %v79, 96
    %v1692 = vpop.permute.xlu0 %1691
    %1693 = vrot.lane.b32.xlu0 %v80, 96
    %v1694 = vpop.permute.xlu0 %1693
    %1695 = vrot.lane.b32.xlu0 %v81, 96
    %v1696 = vpop.permute.xlu0 %1695
    %1697 = vrot.lane.b32.xlu0 %v82, 96
    %v1698 = vpop.permute.xlu0 %1697
    %1699 = vrot.lane.b32.xlu0 %v83, 96
    %v1700 = vpop.permute.xlu0 %1699
    %1701 = vrot.lane.b32.xlu0 %v84, 96
    %v1702 = vpop.permute.xlu0 %1701
    %1703 = vrot.lane.b32.xlu0 %v85, 96
    %v1704 = vpop.permute.xlu0 %1703
    %1705 = vrot.lane.b32.xlu0 %v86, 96
    %v1706 = vpop.permute.xlu0 %1705
    %1707 = vrot.lane.b32.xlu0 %v87, 96
    %v1708 = vpop.permute.xlu0 %1707
    %1709 = vrot.lane.b32.xlu0 %v88, 96
    %v1710 = vpop.permute.xlu0 %1709
    %1711 = vrot.lane.b32.xlu0 %v89, 96
    %v1712 = vpop.permute.xlu0 %1711
    %1713 = vrot.lane.b32.xlu0 %v90, 96
    %v1714 = vpop.permute.xlu0 %1713
    %vm1775 = vcmask 261120
    %v1776 = vsel %vm1775, %v414, %v608
    %v1777 = vsel %vm1775, %v258, %v610
    %v1778 = vsel %vm1775, %v415, %v612
    %v1779 = vsel %vm1775, %v261, %v614
    %v1780 = vsel %vm1775, %v416, %v616
    %v1781 = vsel %vm1775, %v264, %v618
    %v1782 = vsel %vm1775, %v417, %v620
    %v1783 = vsel %vm1775, %v267, %v622
    %v1784 = vsel %vm1775, %v418, %v624
    %v1785 = vsel %vm1775, %v270, %v626
    %v1786 = vsel %vm1775, %v419, %v628
    %v1787 = vsel %vm1775, %v273, %v630
    %v1788 = vsel %vm1775, %v420, %v632
    %v1789 = vsel %vm1775, %v276, %v634
    %v1790 = vsel %vm1775, %v421, %v636
    %v1791 = vsel %vm1775, %v279, %v638
    %v1792 = vsel %vm1775, %v422, %v640
    %v1793 = vsel %vm1775, %v282, %v642
    %v1794 = vsel %vm1775, %v423, %v644
    %v1795 = vsel %vm1775, %v285, %v646
    %v1796 = vsel %vm1775, %v424, %v648
    %v1797 = vsel %vm1775, %v288, %v650
    %v1798 = vsel %vm1775, %v425, %v652
    %v1799 = vsel %vm1775, %v291, %v654
    %v1800 = vsel %vm1775, %v426, %v656
    %v1801 = vsel %vm1775, %v294, %v658
    %v1802 = vsel %vm1775, %v427, %v660
    %v1803 = vsel %vm1775, %v297, %v662
    %v1804 = vsel %vm1775, %v428, %v664
    %v1805 = vsel %vm1775, %v300, %v666
    %v1806 = vsel %vm1775, %v430, %v668
    %v1807 = vsel %vm1775, %v306, %v670
    %v1808 = vsel %vm1775, %v431, %v672
    %v1809 = vsel %vm1775, %v309, %v674
    %v1810 = vsel %vm1775, %v432, %v676
    %v1811 = vsel %vm1775, %v312, %v678
    %v1812 = vsel %vm1775, %v433, %v680
    %v1813 = vsel %vm1775, %v315, %v682
    %v1814 = vsel %vm1775, %v434, %v684
    %v1815 = vsel %vm1775, %v318, %v686
    %v1816 = vsel %vm1775, %v435, %v688
    %v1817 = vsel %vm1775, %v321, %v690
    %v1818 = vsel %vm1775, %v436, %v692
    %v1819 = vsel %vm1775, %v324, %v694
    %v1820 = vsel %vm1775, %v437, %v696
    %v1821 = vsel %vm1775, %v327, %v698
    %v1822 = vsel %vm1775, %v438, %v700
    %v1823 = vsel %vm1775, %v330, %v702
    %v1824 = vsel %vm1775, %v439, %v704
    %v1825 = vsel %vm1775, %v333, %v706
    %v1826 = vsel %vm1775, %v440, %v708
    %v1827 = vsel %vm1775, %v336, %v710
    %v1828 = vsel %vm1775, %v441, %v712
    %v1829 = vsel %vm1775, %v339, %v714
    %v1830 = vsel %vm1775, %v442, %v716
    %v1831 = vsel %vm1775, %v342, %v718
    %v1832 = vsel %vm1775, %v443, %v720
    %v1833 = vsel %vm1775, %v345, %v722
    %v1834 = vsel %vm1775, %v444, %v724
    %v1835 = vsel %vm1775, %v348, %v726
    %vm1836 = vcmask 523264
    %v1837 = vsel %vm1836, %v1776, %v818
    %v1838 = vsel %vm1836, %v1777, %v820
    %v1839 = vsel %vm1836, %v1778, %v822
    %v1840 = vsel %vm1836, %v1779, %v824
    %v1841 = vsel %vm1836, %v1780, %v826
    %v1842 = vsel %vm1836, %v1781, %v828
    %v1843 = vsel %vm1836, %v1782, %v830
    %v1844 = vsel %vm1836, %v1783, %v832
    %v1845 = vsel %vm1836, %v1784, %v834
    %v1846 = vsel %vm1836, %v1785, %v836
    %v1847 = vsel %vm1836, %v1786, %v838
    %v1848 = vsel %vm1836, %v1787, %v840
    %v1849 = vsel %vm1836, %v1788, %v842
    %v1850 = vsel %vm1836, %v1789, %v844
    %v1851 = vsel %vm1836, %v1790, %v846
    %v1852 = vsel %vm1836, %v1791, %v848
    %v1853 = vsel %vm1836, %v1792, %v850
    %v1854 = vsel %vm1836, %v1793, %v852
    %v1855 = vsel %vm1836, %v1794, %v854
    %v1856 = vsel %vm1836, %v1795, %v856
    %v1857 = vsel %vm1836, %v1796, %v858
    %v1858 = vsel %vm1836, %v1797, %v860
    %v1859 = vsel %vm1836, %v1798, %v862
    %v1860 = vsel %vm1836, %v1799, %v864
    %v1861 = vsel %vm1836, %v1800, %v866
    %v1862 = vsel %vm1836, %v1801, %v868
    %v1863 = vsel %vm1836, %v1802, %v870
    %v1864 = vsel %vm1836, %v1803, %v872
    %v1865 = vsel %vm1836, %v1804, %v874
    %v1866 = vsel %vm1836, %v1805, %v876
    %v1867 = vsel %vm1836, %v1806, %v878
    %v1868 = vsel %vm1836, %v1807, %v880
    %v1869 = vsel %vm1836, %v1808, %v882
    %v1870 = vsel %vm1836, %v1809, %v884
    %v1871 = vsel %vm1836, %v1810, %v886
    %v1872 = vsel %vm1836, %v1811, %v888
    %v1873 = vsel %vm1836, %v1812, %v890
    %v1874 = vsel %vm1836, %v1813, %v892
    %v1875 = vsel %vm1836, %v1814, %v894
    %v1876 = vsel %vm1836, %v1815, %v896
    %v1877 = vsel %vm1836, %v1816, %v898
    %v1878 = vsel %vm1836, %v1817, %v900
    %v1879 = vsel %vm1836, %v1818, %v902
    %v1880 = vsel %vm1836, %v1819, %v904
    %v1881 = vsel %vm1836, %v1820, %v906
    %v1882 = vsel %vm1836, %v1821, %v908
    %v1883 = vsel %vm1836, %v1822, %v910
    %v1884 = vsel %vm1836, %v1823, %v912
    %v1885 = vsel %vm1836, %v1824, %v914
    %v1886 = vsel %vm1836, %v1825, %v916
    %v1887 = vsel %vm1836, %v1826, %v918
    %v1888 = vsel %vm1836, %v1827, %v920
    %v1889 = vsel %vm1836, %v1828, %v922
    %v1890 = vsel %vm1836, %v1829, %v924
    %v1891 = vsel %vm1836, %v1830, %v926
    %v1892 = vsel %vm1836, %v1831, %v928
    %v1893 = vsel %vm1836, %v1832, %v930
    %v1894 = vsel %vm1836, %v1833, %v932
    %v1895 = vsel %vm1836, %v1834, %v934
    %v1896 = vsel %vm1836, %v1835, %v936
    %vm1897 = vcmask 785408
    %v1898 = vsel %vm1897, %v1837, %v1030
    %v1899 = vsel %vm1897, %v1838, %v1032
    %v1900 = vsel %vm1897, %v1839, %v1034
    %v1901 = vsel %vm1897, %v1840, %v1036
    %v1902 = vsel %vm1897, %v1837, %v1038
    %v1903 = vsel %vm1897, %v1838, %v1040
    %v1904 = vsel %vm1897, %v1841, %v1042
    %v1905 = vsel %vm1897, %v1842, %v1044
    %v1906 = vsel %vm1897, %v1843, %v1046
    %v1907 = vsel %vm1897, %v1844, %v1048
    %v1908 = vsel %vm1897, %v1845, %v1050
    %v1909 = vsel %vm1897, %v1846, %v1052
    %v1910 = vsel %vm1897, %v1847, %v1054
    %v1911 = vsel %vm1897, %v1848, %v1056
    %v1912 = vsel %vm1897, %v1849, %v1058
    %v1913 = vsel %vm1897, %v1850, %v1060
    %v1914 = vsel %vm1897, %v1851, %v1062
    %v1915 = vsel %vm1897, %v1852, %v1064
    %v1916 = vsel %vm1897, %v1853, %v1066
    %v1917 = vsel %vm1897, %v1854, %v1068
    %v1918 = vsel %vm1897, %v1855, %v1070
    %v1919 = vsel %vm1897, %v1856, %v1072
    %v1920 = vsel %vm1897, %v1857, %v1074
    %v1921 = vsel %vm1897, %v1858, %v1076
    %v1922 = vsel %vm1897, %v1859, %v1078
    %v1923 = vsel %vm1897, %v1860, %v1080
    %v1924 = vsel %vm1897, %v1861, %v1082
    %v1925 = vsel %vm1897, %v1862, %v1084
    %v1926 = vsel %vm1897, %v1863, %v1086
    %v1927 = vsel %vm1897, %v1864, %v1088
    %v1928 = vsel %vm1897, %v1865, %v1090
    %v1929 = vsel %vm1897, %v1866, %v1092
    %v1930 = vsel %vm1897, %v1867, %v1094
    %v1931 = vsel %vm1897, %v1868, %v1096
    %v1932 = vsel %vm1897, %v1869, %v1098
    %v1933 = vsel %vm1897, %v1870, %v1100
    %v1934 = vsel %vm1897, %v1867, %v1102
    %v1935 = vsel %vm1897, %v1868, %v1104
    %v1936 = vsel %vm1897, %v1871, %v1106
    %v1937 = vsel %vm1897, %v1872, %v1108
    %v1938 = vsel %vm1897, %v1873, %v1110
    %v1939 = vsel %vm1897, %v1874, %v1112
    %v1940 = vsel %vm1897, %v1875, %v1114
    %v1941 = vsel %vm1897, %v1876, %v1116
    %v1942 = vsel %vm1897, %v1877, %v1118
    %v1943 = vsel %vm1897, %v1878, %v1120
    %v1944 = vsel %vm1897, %v1879, %v1122
    %v1945 = vsel %vm1897, %v1880, %v1124
    %v1946 = vsel %vm1897, %v1881, %v1126
    %v1947 = vsel %vm1897, %v1882, %v1128
    %v1948 = vsel %vm1897, %v1883, %v1130
    %v1949 = vsel %vm1897, %v1884, %v1132
    %v1950 = vsel %vm1897, %v1885, %v1134
    %v1951 = vsel %vm1897, %v1886, %v1136
    %v1952 = vsel %vm1897, %v1887, %v1138
    %v1953 = vsel %vm1897, %v1888, %v1140
    %v1954 = vsel %vm1897, %v1889, %v1142
    %v1955 = vsel %vm1897, %v1890, %v1144
    %v1956 = vsel %vm1897, %v1891, %v1146
    %v1957 = vsel %vm1897, %v1892, %v1148
    %v1958 = vsel %vm1897, %v1893, %v1150
    %v1959 = vsel %vm1897, %v1894, %v1152
    %v1960 = vsel %vm1897, %v1895, %v1154
    %v1961 = vsel %vm1897, %v1896, %v1156
    %v1962 = vsel %vm1775, %v27, %v1224
    %v1963 = vsel %vm1775, %v28, %v1226
    %v1964 = vsel %vm1775, %v29, %v1228
    %v1965 = vsel %vm1775, %v30, %v1230
    %v1966 = vsel %vm1775, %v31, %v1232
    %v1967 = vsel %vm1775, %v32, %v1234
    %v1968 = vsel %vm1775, %v33, %v1236
    %v1969 = vsel %vm1775, %v34, %v1238
    %v1970 = vsel %vm1775, %v35, %v1240
    %v1971 = vsel %vm1775, %v36, %v1242
    %v1972 = vsel %vm1775, %v37, %v1244
    %v1973 = vsel %vm1775, %v38, %v1246
    %v1974 = vsel %vm1775, %v39, %v1248
    %v1975 = vsel %vm1775, %v40, %v1250
    %v1976 = vsel %vm1775, %v41, %v1252
    %v1977 = vsel %vm1775, %v42, %v1254
    %v1978 = vsel %vm1775, %v43, %v1256
    %v1979 = vsel %vm1775, %v44, %v1258
    %v1980 = vsel %vm1775, %v45, %v1260
    %v1981 = vsel %vm1775, %v46, %v1262
    %v1982 = vsel %vm1775, %v47, %v1264
    %v1983 = vsel %vm1775, %v48, %v1266
    %v1984 = vsel %vm1775, %v49, %v1268
    %v1985 = vsel %vm1775, %v50, %v1270
    %v1986 = vsel %vm1775, %v51, %v1272
    %v1987 = vsel %vm1775, %v52, %v1274
    %v1988 = vsel %vm1775, %v53, %v1276
    %v1989 = vsel %vm1775, %v54, %v1278
    %v1990 = vsel %vm1775, %v55, %v1280
    %v1991 = vsel %vm1775, %v56, %v1282
    %v1992 = vsel %vm1775, %v57, %v1284
    %v1993 = vsel %vm1775, %v58, %v1286
    %v1994 = vsel %vm1775, %v59, %v1288
    %v1995 = vsel %vm1775, %v60, %v1290
    %v1996 = vsel %vm1775, %v61, %v1292
    %v1997 = vsel %vm1775, %v62, %v1294
    %v1998 = vsel %vm1775, %v63, %v1296
    %v1999 = vsel %vm1775, %v64, %v1298
    %v2000 = vsel %vm1775, %v65, %v1300
    %v2001 = vsel %vm1775, %v66, %v1302
    %v2002 = vsel %vm1775, %v67, %v1304
    %v2003 = vsel %vm1775, %v68, %v1306
    %v2004 = vsel %vm1775, %v69, %v1308
    %v2005 = vsel %vm1775, %v70, %v1310
    %v2006 = vsel %vm1775, %v71, %v1312
    %v2007 = vsel %vm1775, %v72, %v1314
    %v2008 = vsel %vm1775, %v73, %v1316
    %v2009 = vsel %vm1775, %v74, %v1318
    %v2010 = vsel %vm1775, %v75, %v1320
    %v2011 = vsel %vm1775, %v76, %v1322
    %v2012 = vsel %vm1775, %v77, %v1324
    %v2013 = vsel %vm1775, %v78, %v1326
    %v2014 = vsel %vm1775, %v79, %v1328
    %v2015 = vsel %vm1775, %v80, %v1330
    %v2016 = vsel %vm1775, %v81, %v1332
    %v2017 = vsel %vm1775, %v82, %v1334
    %v2018 = vsel %vm1775, %v83, %v1336
    %v2019 = vsel %vm1775, %v84, %v1338
    %v2020 = vsel %vm1775, %v85, %v1340
    %v2021 = vsel %vm1775, %v86, %v1342
    %v2022 = vsel %vm1775, %v87, %v1344
    %v2023 = vsel %vm1775, %v88, %v1346
    %v2024 = vsel %vm1775, %v89, %v1348
    %v2025 = vsel %vm1775, %v90, %v1350
    %v2026 = vsel %vm1836, %v1962, %v1416
    %v2027 = vsel %vm1836, %v1963, %v1418
    %v2028 = vsel %vm1836, %v1964, %v1420
    %v2029 = vsel %vm1836, %v1965, %v1422
    %v2030 = vsel %vm1836, %v1966, %v1424
    %v2031 = vsel %vm1836, %v1967, %v1426
    %v2032 = vsel %vm1836, %v1968, %v1428
    %v2033 = vsel %vm1836, %v1969, %v1430
    %v2034 = vsel %vm1836, %v1970, %v1432
    %v2035 = vsel %vm1836, %v1971, %v1434
    %v2036 = vsel %vm1836, %v1972, %v1436
    %v2037 = vsel %vm1836, %v1973, %v1438
    %v2038 = vsel %vm1836, %v1974, %v1440
    %v2039 = vsel %vm1836, %v1975, %v1442
    %v2040 = vsel %vm1836, %v1976, %v1444
    %v2041 = vsel %vm1836, %v1977, %v1446
    %v2042 = vsel %vm1836, %v1978, %v1448
    %v2043 = vsel %vm1836, %v1979, %v1450
    %v2044 = vsel %vm1836, %v1980, %v1452
    %v2045 = vsel %vm1836, %v1981, %v1454
    %v2046 = vsel %vm1836, %v1982, %v1456
    %v2047 = vsel %vm1836, %v1983, %v1458
    %v2048 = vsel %vm1836, %v1984, %v1460
    %v2049 = vsel %vm1836, %v1985, %v1462
    %v2050 = vsel %vm1836, %v1986, %v1464
    %v2051 = vsel %vm1836, %v1987, %v1466
    %v2052 = vsel %vm1836, %v1988, %v1468
    %v2053 = vsel %vm1836, %v1989, %v1470
    %v2054 = vsel %vm1836, %v1990, %v1472
    %v2055 = vsel %vm1836, %v1991, %v1474
    %v2056 = vsel %vm1836, %v1992, %v1468
    %v2057 = vsel %vm1836, %v1993, %v1470
    %v2058 = vsel %vm1836, %v1994, %v1476
    %v2059 = vsel %vm1836, %v1995, %v1478
    %v2060 = vsel %vm1836, %v1996, %v1480
    %v2061 = vsel %vm1836, %v1997, %v1482
    %v2062 = vsel %vm1836, %v1998, %v1484
    %v2063 = vsel %vm1836, %v1999, %v1486
    %v2064 = vsel %vm1836, %v2000, %v1488
    %v2065 = vsel %vm1836, %v2001, %v1490
    %v2066 = vsel %vm1836, %v2002, %v1492
    %v2067 = vsel %vm1836, %v2003, %v1494
    %v2068 = vsel %vm1836, %v2004, %v1496
    %v2069 = vsel %vm1836, %v2005, %v1498
    %v2070 = vsel %vm1836, %v2006, %v1500
    %v2071 = vsel %vm1836, %v2007, %v1502
    %v2072 = vsel %vm1836, %v2008, %v1504
    %v2073 = vsel %vm1836, %v2009, %v1506
    %v2074 = vsel %vm1836, %v2010, %v1508
    %v2075 = vsel %vm1836, %v2011, %v1510
    %v2076 = vsel %vm1836, %v2012, %v1512
    %v2077 = vsel %vm1836, %v2013, %v1514
    %v2078 = vsel %vm1836, %v2014, %v1516
    %v2079 = vsel %vm1836, %v2015, %v1518
    %v2080 = vsel %vm1836, %v2016, %v1520
    %v2081 = vsel %vm1836, %v2017, %v1522
    %v2082 = vsel %vm1836, %v2018, %v1524
    %v2083 = vsel %vm1836, %v2019, %v1526
    %v2084 = vsel %vm1836, %v2020, %v1528
    %v2085 = vsel %vm1836, %v2021, %v1530
    %v2086 = vsel %vm1836, %v2022, %v1532
    %v2087 = vsel %vm1836, %v2023, %v1534
    %v2088 = vsel %vm1836, %v2024, %v1528
    %v2089 = vsel %vm1836, %v2025, %v1530
    %v2090 = vsel %vm1897, %v2026, %v1596
    %v2091 = vsel %vm1897, %v2027, %v1598
    %v2092 = vsel %vm1897, %v2028, %v1600
    %v2093 = vsel %vm1897, %v2029, %v1602
    %v2094 = vsel %vm1897, %v2030, %v1604
    %v2095 = vsel %vm1897, %v2031, %v1606
    %v2096 = vsel %vm1897, %v2032, %v1608
    %v2097 = vsel %vm1897, %v2033, %v1610
    %v2098 = vsel %vm1897, %v2034, %v1612
    %v2099 = vsel %vm1897, %v2035, %v1614
    %v2100 = vsel %vm1897, %v2036, %v1616
    %v2101 = vsel %vm1897, %v2037, %v1618
    %v2102 = vsel %vm1897, %v2038, %v1620
    %v2103 = vsel %vm1897, %v2039, %v1622
    %v2104 = vsel %vm1897, %v2040, %v1624
    %v2105 = vsel %vm1897, %v2041, %v1626
    %v2106 = vsel %vm1897, %v2042, %v1628
    %v2107 = vsel %vm1897, %v2043, %v1630
    %v2108 = vsel %vm1897, %v2044, %v1632
    %v2109 = vsel %vm1897, %v2045, %v1634
    %v2110 = vsel %vm1897, %v2046, %v1636
    %v2111 = vsel %vm1897, %v2047, %v1638
    %v2112 = vsel %vm1897, %v2048, %v1640
    %v2113 = vsel %vm1897, %v2049, %v1642
    %v2114 = vsel %vm1897, %v2050, %v1644
    %v2115 = vsel %vm1897, %v2051, %v1646
    %v2116 = vsel %vm1897, %v2052, %v1648
    %v2117 = vsel %vm1897, %v2053, %v1650
    %v2118 = vsel %vm1897, %v2054, %v1652
    %v2119 = vsel %vm1897, %v2055, %v1654
    %v2120 = vsel %vm1897, %v2056, %v1648
    %v2121 = vsel %vm1897, %v2057, %v1650
    %v2122 = vsel %vm1897, %v2058, %v1656
    %v2123 = vsel %vm1897, %v2059, %v1658
    %v2124 = vsel %vm1897, %v2060, %v1660
    %v2125 = vsel %vm1897, %v2061, %v1662
    %v2126 = vsel %vm1897, %v2062, %v1664
    %v2127 = vsel %vm1897, %v2063, %v1666
    %v2128 = vsel %vm1897, %v2064, %v1668
    %v2129 = vsel %vm1897, %v2065, %v1670
    %v2130 = vsel %vm1897, %v2066, %v1672
    %v2131 = vsel %vm1897, %v2067, %v1674
    %v2132 = vsel %vm1897, %v2068, %v1676
    %v2133 = vsel %vm1897, %v2069, %v1678
    %v2134 = vsel %vm1897, %v2070, %v1680
    %v2135 = vsel %vm1897, %v2071, %v1682
    %v2136 = vsel %vm1897, %v2072, %v1684
    %v2137 = vsel %vm1897, %v2073, %v1686
    %v2138 = vsel %vm1897, %v2074, %v1688
    %v2139 = vsel %vm1897, %v2075, %v1690
    %v2140 = vsel %vm1897, %v2076, %v1692
    %v2141 = vsel %vm1897, %v2077, %v1694
    %v2142 = vsel %vm1897, %v2078, %v1696
    %v2143 = vsel %vm1897, %v2079, %v1698
    %v2144 = vsel %vm1897, %v2080, %v1700
    %v2145 = vsel %vm1897, %v2081, %v1702
    %v2146 = vsel %vm1897, %v2082, %v1704
    %v2147 = vsel %vm1897, %v2083, %v1706
    %v2148 = vsel %vm1897, %v2084, %v1708
    %v2149 = vsel %vm1897, %v2085, %v1710
    %v2150 = vsel %vm1897, %v2086, %v1712
    %v2151 = vsel %vm1897, %v2087, %v1714
    %v2152 = vsel %vm1897, %v2088, %v1708
    %v2153 = vsel %vm1897, %v2089, %v1710
    %v2154 = vsel %vm1775, %v448, 0
    %v2156 = vsel %vm1775, %v575, 0
    %v2158 = vsel %vm1775, %v452, 0
    %v2160 = vsel %vm1775, %v577, 0
    %v2162 = vsel %vm1775, %v454, 0
    %v2164 = vsel %vm1775, %v578, 0
    %v2166 = vsel %vm1775, %v456, 0
    %v2168 = vsel %vm1775, %v579, 0
    %v2170 = vsel %vm1775, %v458, 0
    %v2172 = vsel %vm1775, %v580, 0
    %v2174 = vsel %vm1775, %v460, 0
    %v2176 = vsel %vm1775, %v581, 0
    %v2178 = vsel %vm1775, %v462, 0
    %v2180 = vsel %vm1775, %v582, 0
    %v2182 = vsel %vm1775, %v464, 0
    %v2184 = vsel %vm1775, %v583, 0
    %v2186 = vsel %vm1775, %v466, 0
    %v2188 = vsel %vm1775, %v584, 0
    %v2190 = vsel %vm1775, %v468, 0
    %v2192 = vsel %vm1775, %v585, 0
    %v2194 = vsel %vm1775, %v470, 0
    %v2196 = vsel %vm1775, %v586, 0
    %v2198 = vsel %vm1775, %v472, 0
    %v2200 = vsel %vm1775, %v587, 0
    %v2202 = vsel %vm1775, %v474, 0
    %v2204 = vsel %vm1775, %v588, 0
    %v2206 = vsel %vm1775, %v476, 0
    %v2208 = vsel %vm1775, %v589, 0
    %v2210 = vsel %vm1775, %v478, 0
    %v2212 = vsel %vm1775, %v590, 0
    %v2214 = vsel %vm1775, %v480, 0
    %v2216 = vsel %vm1775, %v591, 0
    %v2218 = vsel %vm1775, %v484, 0
    %v2220 = vsel %vm1775, %v593, 0
    %v2222 = vsel %vm1775, %v486, 0
    %v2224 = vsel %vm1775, %v594, 0
    %v2226 = vsel %vm1775, %v488, 0
    %v2228 = vsel %vm1775, %v595, 0
    %v2230 = vsel %vm1775, %v490, 0
    %v2232 = vsel %vm1775, %v596, 0
    %v2234 = vsel %vm1775, %v492, 0
    %v2236 = vsel %vm1775, %v597, 0
    %v2238 = vsel %vm1775, %v494, 0
    %v2240 = vsel %vm1775, %v598, 0
    %v2242 = vsel %vm1775, %v496, 0
    %v2244 = vsel %vm1775, %v599, 0
    %v2246 = vsel %vm1775, %v498, 0
    %v2248 = vsel %vm1775, %v600, 0
    %v2250 = vsel %vm1775, %v500, 0
    %v2252 = vsel %vm1775, %v601, 0
    %v2254 = vsel %vm1775, %v502, 0
    %v2256 = vsel %vm1775, %v602, 0
    %v2258 = vsel %vm1775, %v504, 0
    %v2260 = vsel %vm1775, %v603, 0
    %v2262 = vsel %vm1775, %v506, 0
    %v2264 = vsel %vm1775, %v604, 0
    %v2266 = vsel %vm1775, %v508, 0
    %v2268 = vsel %vm1775, %v605, 0
    %v2270 = vsel %vm1775, %v510, 0
    %v2272 = vsel %vm1775, %v606, 0
    %2274 = vmatpush.msra.mxu0 %v106
    %2275 = vmatpush.msra.mxu0 %v105
    %2276 = vmatpush.msra.mxu0 %v104
    %2277 = vmatpush.msra.mxu0 %v103
    %2278 = vmatpush.msra.mxu0 %v102
    %2279 = vmatpush.msra.mxu0 %v101
    %2280 = vmatpush.msra.mxu0 %v100
    %2281 = vmatpush.msra.mxu0 %v99
    %2282 = vmatpush.msra.mxu0 %v98
    %2283 = vmatpush.msra.mxu0 %v97
    %2284 = vmatpush.msra.mxu0 %v96
    %2285 = vmatpush.msra.mxu0 %v95
    %2286 = vmatpush.msra.mxu0 %v94
    %2287 = vmatpush.msra.mxu0 %v93
    %2288 = vmatpush.msra.mxu0 %v92
    %2289 = vmatpush.msra.mxu0 %v91
    %2290 = vmatmul.f32.gmra.mxu0 %v1898
    %v2291 = vpop.f32.mrf.mxu0
    %v2292 = vadd.f32 0.0, %v2291
    %2293 = vmatmul.f32.gmra.mxu0 %v1899
    %v2294 = vpop.f32.mrf.mxu0
    %v2295 = vadd.f32 0.0, %v2294
    %2296 = vmatmul.f32.gmra.mxu0 %v1900
    %v2297 = vpop.f32.mrf.mxu0
    %v2298 = vadd.f32 0.0, %v2297
    %2299 = vmatmul.f32.gmra.mxu0 %v1901
    %v2300 = vpop.f32.mrf.mxu0
    %v2301 = vadd.f32 0.0, %v2300
    %2302 = vmatmul.f32.gmra.mxu0 %v1902
    %v2303 = vpop.f32.mrf.mxu0
    %v2304 = vadd.f32 0.0, %v2303
    %2305 = vmatmul.f32.gmra.mxu0 %v1903
    %v2306 = vpop.f32.mrf.mxu0
    %v2307 = vadd.f32 0.0, %v2306
    %2308 = vmatmul.f32.gmra.mxu0 %v1904
    %v2309 = vpop.f32.mrf.mxu0
    %v2310 = vadd.f32 0.0, %v2309
    %2311 = vmatmul.f32.gmra.mxu0 %v1905
    %v2312 = vpop.f32.mrf.mxu0
    %v2313 = vadd.f32 0.0, %v2312
    %2314 = vmatmul.f32.gmra.mxu0 %v1906
    %v2315 = vpop.f32.mrf.mxu0
    %v2316 = vadd.f32 0.0, %v2315
    %2317 = vmatmul.f32.gmra.mxu0 %v1907
    %v2318 = vpop.f32.mrf.mxu0
    %v2319 = vadd.f32 0.0, %v2318
    %2320 = vmatmul.f32.gmra.mxu0 %v1908
    %v2321 = vpop.f32.mrf.mxu0
    %v2322 = vadd.f32 0.0, %v2321
    %2323 = vmatmul.f32.gmra.mxu0 %v1909
    %v2324 = vpop.f32.mrf.mxu0
    %v2325 = vadd.f32 0.0, %v2324
    %2326 = vmatmul.f32.gmra.mxu0 %v1910
    %v2327 = vpop.f32.mrf.mxu0
    %v2328 = vadd.f32 0.0, %v2327
    %2329 = vmatmul.f32.gmra.mxu0 %v1911
    %v2330 = vpop.f32.mrf.mxu0
    %v2331 = vadd.f32 0.0, %v2330
    %2332 = vmatmul.f32.gmra.mxu0 %v1912
    %v2333 = vpop.f32.mrf.mxu0
    %v2334 = vadd.f32 0.0, %v2333
    %2335 = vmatmul.f32.gmra.mxu0 %v1913
    %v2336 = vpop.f32.mrf.mxu0
    %v2337 = vadd.f32 0.0, %v2336
    %2338 = vmatmul.f32.gmra.mxu0 %v1914
    %v2339 = vpop.f32.mrf.mxu0
    %v2340 = vadd.f32 0.0, %v2339
    %2341 = vmatmul.f32.gmra.mxu0 %v1915
    %v2342 = vpop.f32.mrf.mxu0
    %v2343 = vadd.f32 0.0, %v2342
    %2344 = vmatmul.f32.gmra.mxu0 %v1916
    %v2345 = vpop.f32.mrf.mxu0
    %v2346 = vadd.f32 0.0, %v2345
    %2347 = vmatmul.f32.gmra.mxu0 %v1917
    %v2348 = vpop.f32.mrf.mxu0
    %v2349 = vadd.f32 0.0, %v2348
    %2350 = vmatmul.f32.gmra.mxu0 %v1918
    %v2351 = vpop.f32.mrf.mxu0
    %v2352 = vadd.f32 0.0, %v2351
    %2353 = vmatmul.f32.gmra.mxu0 %v1919
    %v2354 = vpop.f32.mrf.mxu0
    %v2355 = vadd.f32 0.0, %v2354
    %2356 = vmatmul.f32.gmra.mxu0 %v1920
    %v2357 = vpop.f32.mrf.mxu0
    %v2358 = vadd.f32 0.0, %v2357
    %2359 = vmatmul.f32.gmra.mxu0 %v1921
    %v2360 = vpop.f32.mrf.mxu0
    %v2361 = vadd.f32 0.0, %v2360
    %2362 = vmatmul.f32.gmra.mxu0 %v1922
    %v2363 = vpop.f32.mrf.mxu0
    %v2364 = vadd.f32 0.0, %v2363
    %2365 = vmatmul.f32.gmra.mxu0 %v1923
    %v2366 = vpop.f32.mrf.mxu0
    %v2367 = vadd.f32 0.0, %v2366
    %2368 = vmatmul.f32.gmra.mxu0 %v1924
    %v2369 = vpop.f32.mrf.mxu0
    %v2370 = vadd.f32 0.0, %v2369
    %2371 = vmatmul.f32.gmra.mxu0 %v1925
    %v2372 = vpop.f32.mrf.mxu0
    %v2373 = vadd.f32 0.0, %v2372
    %2374 = vmatmul.f32.gmra.mxu0 %v1926
    %v2375 = vpop.f32.mrf.mxu0
    %v2376 = vadd.f32 0.0, %v2375
    %2377 = vmatmul.f32.gmra.mxu0 %v1927
    %v2378 = vpop.f32.mrf.mxu0
    %v2379 = vadd.f32 0.0, %v2378
    %2380 = vmatmul.f32.gmra.mxu0 %v1928
    %v2381 = vpop.f32.mrf.mxu0
    %v2382 = vadd.f32 0.0, %v2381
    %2383 = vmatmul.f32.gmra.mxu0 %v1929
    %v2384 = vpop.f32.mrf.mxu0
    %v2385 = vadd.f32 0.0, %v2384
    %2386 = vmatmul.f32.gmra.mxu0 %v1930
    %v2387 = vpop.f32.mrf.mxu0
    %v2388 = vadd.f32 0.0, %v2387
    %2389 = vmatmul.f32.gmra.mxu0 %v1931
    %v2390 = vpop.f32.mrf.mxu0
    %v2391 = vadd.f32 0.0, %v2390
    %2392 = vmatmul.f32.gmra.mxu0 %v1932
    %v2393 = vpop.f32.mrf.mxu0
    %v2394 = vadd.f32 0.0, %v2393
    %2395 = vmatmul.f32.gmra.mxu0 %v1933
    %v2396 = vpop.f32.mrf.mxu0
    %v2397 = vadd.f32 0.0, %v2396
    %2398 = vmatmul.f32.gmra.mxu0 %v1934
    %v2399 = vpop.f32.mrf.mxu0
    %v2400 = vadd.f32 0.0, %v2399
    %2401 = vmatmul.f32.gmra.mxu0 %v1935
    %v2402 = vpop.f32.mrf.mxu0
    %v2403 = vadd.f32 0.0, %v2402
    %2404 = vmatmul.f32.gmra.mxu0 %v1936
    %v2405 = vpop.f32.mrf.mxu0
    %v2406 = vadd.f32 0.0, %v2405
    %2407 = vmatmul.f32.gmra.mxu0 %v1937
    %v2408 = vpop.f32.mrf.mxu0
    %v2409 = vadd.f32 0.0, %v2408
    %2410 = vmatmul.f32.gmra.mxu0 %v1938
    %v2411 = vpop.f32.mrf.mxu0
    %v2412 = vadd.f32 0.0, %v2411
    %2413 = vmatmul.f32.gmra.mxu0 %v1939
    %v2414 = vpop.f32.mrf.mxu0
    %v2415 = vadd.f32 0.0, %v2414
    %2416 = vmatmul.f32.gmra.mxu0 %v1940
    %v2417 = vpop.f32.mrf.mxu0
    %v2418 = vadd.f32 0.0, %v2417
    %2419 = vmatmul.f32.gmra.mxu0 %v1941
    %v2420 = vpop.f32.mrf.mxu0
    %v2421 = vadd.f32 0.0, %v2420
    %2422 = vmatmul.f32.gmra.mxu0 %v1942
    %v2423 = vpop.f32.mrf.mxu0
    %v2424 = vadd.f32 0.0, %v2423
    %2425 = vmatmul.f32.gmra.mxu0 %v1943
    %v2426 = vpop.f32.mrf.mxu0
    %v2427 = vadd.f32 0.0, %v2426
    %2428 = vmatmul.f32.gmra.mxu0 %v1944
    %v2429 = vpop.f32.mrf.mxu0
    %v2430 = vadd.f32 0.0, %v2429
    %2431 = vmatmul.f32.gmra.mxu0 %v1945
    %v2432 = vpop.f32.mrf.mxu0
    %v2433 = vadd.f32 0.0, %v2432
    %2434 = vmatmul.f32.gmra.mxu0 %v1946
    %v2435 = vpop.f32.mrf.mxu0
    %v2436 = vadd.f32 0.0, %v2435
    %2437 = vmatmul.f32.gmra.mxu0 %v1947
    %v2438 = vpop.f32.mrf.mxu0
    %v2439 = vadd.f32 0.0, %v2438
    %2440 = vmatmul.f32.gmra.mxu0 %v1948
    %v2441 = vpop.f32.mrf.mxu0
    %v2442 = vadd.f32 0.0, %v2441
    %2443 = vmatmul.f32.gmra.mxu0 %v1949
    %v2444 = vpop.f32.mrf.mxu0
    %v2445 = vadd.f32 0.0, %v2444
    %2446 = vmatmul.f32.gmra.mxu0 %v1950
    %v2447 = vpop.f32.mrf.mxu0
    %v2448 = vadd.f32 0.0, %v2447
    %2449 = vmatmul.f32.gmra.mxu0 %v1951
    %v2450 = vpop.f32.mrf.mxu0
    %v2451 = vadd.f32 0.0, %v2450
    %2452 = vmatmul.f32.gmra.mxu0 %v1952
    %v2453 = vpop.f32.mrf.mxu0
    %v2454 = vadd.f32 0.0, %v2453
    %2455 = vmatmul.f32.gmra.mxu0 %v1953
    %v2456 = vpop.f32.mrf.mxu0
    %v2457 = vadd.f32 0.0, %v2456
    %2458 = vmatmul.f32.gmra.mxu0 %v1954
    %v2459 = vpop.f32.mrf.mxu0
    %v2460 = vadd.f32 0.0, %v2459
    %2461 = vmatmul.f32.gmra.mxu0 %v1955
    %v2462 = vpop.f32.mrf.mxu0
    %v2463 = vadd.f32 0.0, %v2462
    %2464 = vmatmul.f32.gmra.mxu0 %v1956
    %v2465 = vpop.f32.mrf.mxu0
    %v2466 = vadd.f32 0.0, %v2465
    %2467 = vmatmul.f32.gmra.mxu0 %v1957
    %v2468 = vpop.f32.mrf.mxu0
    %v2469 = vadd.f32 0.0, %v2468
    %2470 = vmatmul.f32.gmra.mxu0 %v1958
    %v2471 = vpop.f32.mrf.mxu0
    %v2472 = vadd.f32 0.0, %v2471
    %2473 = vmatmul.f32.gmra.mxu0 %v1959
    %v2474 = vpop.f32.mrf.mxu0
    %v2475 = vadd.f32 0.0, %v2474
    %2476 = vmatmul.f32.gmra.mxu0 %v1960
    %v2477 = vpop.f32.mrf.mxu0
    %v2478 = vadd.f32 0.0, %v2477
    %2479 = vmatmul.f32.gmra.mxu0 %v1961
    %v2480 = vpop.f32.mrf.mxu0
    %v2481 = vadd.f32 0.0, %v2480
    %2482 = vdwg.mxu0
    %2483 = vmatpush.msra.mxu0 %v122
    %2484 = vmatpush.msra.mxu0 %v121
    %2485 = vmatpush.msra.mxu0 %v120
    %2486 = vmatpush.msra.mxu0 %v119
    %2487 = vmatpush.msra.mxu0 %v118
    %2488 = vmatpush.msra.mxu0 %v117
    %2489 = vmatpush.msra.mxu0 %v116
    %2490 = vmatpush.msra.mxu0 %v115
    %2491 = vmatpush.msra.mxu0 %v114
    %2492 = vmatpush.msra.mxu0 %v113
    %2493 = vmatpush.msra.mxu0 %v112
    %2494 = vmatpush.msra.mxu0 %v111
    %2495 = vmatpush.msra.mxu0 %v110
    %2496 = vmatpush.msra.mxu0 %v109
    %2497 = vmatpush.msra.mxu0 %v108
    %2498 = vmatpush.msra.mxu0 %v107
    %2499 = vmatmul.f32.gmra.mxu0 %v2090
    %v2500 = vpop.f32.mrf.mxu0
    %v2501 = vadd.f32 %v2292, %v2500
    %2502 = vmatmul.f32.gmra.mxu0 %v2091
    %v2503 = vpop.f32.mrf.mxu0
    %v2504 = vadd.f32 %v2295, %v2503
    %2505 = vmatmul.f32.gmra.mxu0 %v2092
    %v2506 = vpop.f32.mrf.mxu0
    %v2507 = vadd.f32 %v2298, %v2506
    %2508 = vmatmul.f32.gmra.mxu0 %v2093
    %v2509 = vpop.f32.mrf.mxu0
    %v2510 = vadd.f32 %v2301, %v2509
    %2511 = vmatmul.f32.gmra.mxu0 %v2094
    %v2512 = vpop.f32.mrf.mxu0
    %v2513 = vadd.f32 %v2304, %v2512
    %2514 = vmatmul.f32.gmra.mxu0 %v2095
    %v2515 = vpop.f32.mrf.mxu0
    %v2516 = vadd.f32 %v2307, %v2515
    %2517 = vmatmul.f32.gmra.mxu0 %v2096
    %v2518 = vpop.f32.mrf.mxu0
    %v2519 = vadd.f32 %v2310, %v2518
    %2520 = vmatmul.f32.gmra.mxu0 %v2097
    %v2521 = vpop.f32.mrf.mxu0
    %v2522 = vadd.f32 %v2313, %v2521
    %2523 = vmatmul.f32.gmra.mxu0 %v2098
    %v2524 = vpop.f32.mrf.mxu0
    %v2525 = vadd.f32 %v2316, %v2524
    %2526 = vmatmul.f32.gmra.mxu0 %v2099
    %v2527 = vpop.f32.mrf.mxu0
    %v2528 = vadd.f32 %v2319, %v2527
    %2529 = vmatmul.f32.gmra.mxu0 %v2100
    %v2530 = vpop.f32.mrf.mxu0
    %v2531 = vadd.f32 %v2322, %v2530
    %2532 = vmatmul.f32.gmra.mxu0 %v2101
    %v2533 = vpop.f32.mrf.mxu0
    %v2534 = vadd.f32 %v2325, %v2533
    %2535 = vmatmul.f32.gmra.mxu0 %v2102
    %v2536 = vpop.f32.mrf.mxu0
    %v2537 = vadd.f32 %v2328, %v2536
    %2538 = vmatmul.f32.gmra.mxu0 %v2103
    %v2539 = vpop.f32.mrf.mxu0
    %v2540 = vadd.f32 %v2331, %v2539
    %2541 = vmatmul.f32.gmra.mxu0 %v2104
    %v2542 = vpop.f32.mrf.mxu0
    %v2543 = vadd.f32 %v2334, %v2542
    %2544 = vmatmul.f32.gmra.mxu0 %v2105
    %v2545 = vpop.f32.mrf.mxu0
    %v2546 = vadd.f32 %v2337, %v2545
    %2547 = vmatmul.f32.gmra.mxu0 %v2106
    %v2548 = vpop.f32.mrf.mxu0
    %v2549 = vadd.f32 %v2340, %v2548
    %2550 = vmatmul.f32.gmra.mxu0 %v2107
    %v2551 = vpop.f32.mrf.mxu0
    %v2552 = vadd.f32 %v2343, %v2551
    %2553 = vmatmul.f32.gmra.mxu0 %v2108
    %v2554 = vpop.f32.mrf.mxu0
    %v2555 = vadd.f32 %v2346, %v2554
    %2556 = vmatmul.f32.gmra.mxu0 %v2109
    %v2557 = vpop.f32.mrf.mxu0
    %v2558 = vadd.f32 %v2349, %v2557
    %2559 = vmatmul.f32.gmra.mxu0 %v2110
    %v2560 = vpop.f32.mrf.mxu0
    %v2561 = vadd.f32 %v2352, %v2560
    %2562 = vmatmul.f32.gmra.mxu0 %v2111
    %v2563 = vpop.f32.mrf.mxu0
    %v2564 = vadd.f32 %v2355, %v2563
    %2565 = vmatmul.f32.gmra.mxu0 %v2112
    %v2566 = vpop.f32.mrf.mxu0
    %v2567 = vadd.f32 %v2358, %v2566
    %2568 = vmatmul.f32.gmra.mxu0 %v2113
    %v2569 = vpop.f32.mrf.mxu0
    %v2570 = vadd.f32 %v2361, %v2569
    %2571 = vmatmul.f32.gmra.mxu0 %v2114
    %v2572 = vpop.f32.mrf.mxu0
    %v2573 = vadd.f32 %v2364, %v2572
    %2574 = vmatmul.f32.gmra.mxu0 %v2115
    %v2575 = vpop.f32.mrf.mxu0
    %v2576 = vadd.f32 %v2367, %v2575
    %2577 = vmatmul.f32.gmra.mxu0 %v2116
    %v2578 = vpop.f32.mrf.mxu0
    %v2579 = vadd.f32 %v2370, %v2578
    %2580 = vmatmul.f32.gmra.mxu0 %v2117
    %v2581 = vpop.f32.mrf.mxu0
    %v2582 = vadd.f32 %v2373, %v2581
    %2583 = vmatmul.f32.gmra.mxu0 %v2118
    %v2584 = vpop.f32.mrf.mxu0
    %v2585 = vadd.f32 %v2376, %v2584
    %2586 = vmatmul.f32.gmra.mxu0 %v2119
    %v2587 = vpop.f32.mrf.mxu0
    %v2588 = vadd.f32 %v2379, %v2587
    %2589 = vmatmul.f32.gmra.mxu0 %v2120
    %v2590 = vpop.f32.mrf.mxu0
    %v2591 = vadd.f32 %v2382, %v2590
    %2592 = vmatmul.f32.gmra.mxu0 %v2121
    %v2593 = vpop.f32.mrf.mxu0
    %v2594 = vadd.f32 %v2385, %v2593
    %2595 = vmatmul.f32.gmra.mxu0 %v2122
    %v2596 = vpop.f32.mrf.mxu0
    %v2597 = vadd.f32 %v2388, %v2596
    %2598 = vmatmul.f32.gmra.mxu0 %v2123
    %v2599 = vpop.f32.mrf.mxu0
    %v2600 = vadd.f32 %v2391, %v2599
    %2601 = vmatmul.f32.gmra.mxu0 %v2124
    %v2602 = vpop.f32.mrf.mxu0
    %v2603 = vadd.f32 %v2394, %v2602
    %2604 = vmatmul.f32.gmra.mxu0 %v2125
    %v2605 = vpop.f32.mrf.mxu0
    %v2606 = vadd.f32 %v2397, %v2605
    %2607 = vmatmul.f32.gmra.mxu0 %v2126
    %v2608 = vpop.f32.mrf.mxu0
    %v2609 = vadd.f32 %v2400, %v2608
    %2610 = vmatmul.f32.gmra.mxu0 %v2127
    %v2611 = vpop.f32.mrf.mxu0
    %v2612 = vadd.f32 %v2403, %v2611
    %2613 = vmatmul.f32.gmra.mxu0 %v2128
    %v2614 = vpop.f32.mrf.mxu0
    %v2615 = vadd.f32 %v2406, %v2614
    %2616 = vmatmul.f32.gmra.mxu0 %v2129
    %v2617 = vpop.f32.mrf.mxu0
    %v2618 = vadd.f32 %v2409, %v2617
    %2619 = vmatmul.f32.gmra.mxu0 %v2130
    %v2620 = vpop.f32.mrf.mxu0
    %v2621 = vadd.f32 %v2412, %v2620
    %2622 = vmatmul.f32.gmra.mxu0 %v2131
    %v2623 = vpop.f32.mrf.mxu0
    %v2624 = vadd.f32 %v2415, %v2623
    %2625 = vmatmul.f32.gmra.mxu0 %v2132
    %v2626 = vpop.f32.mrf.mxu0
    %v2627 = vadd.f32 %v2418, %v2626
    %2628 = vmatmul.f32.gmra.mxu0 %v2133
    %v2629 = vpop.f32.mrf.mxu0
    %v2630 = vadd.f32 %v2421, %v2629
    %2631 = vmatmul.f32.gmra.mxu0 %v2134
    %v2632 = vpop.f32.mrf.mxu0
    %v2633 = vadd.f32 %v2424, %v2632
    %2634 = vmatmul.f32.gmra.mxu0 %v2135
    %v2635 = vpop.f32.mrf.mxu0
    %v2636 = vadd.f32 %v2427, %v2635
    %2637 = vmatmul.f32.gmra.mxu0 %v2136
    %v2638 = vpop.f32.mrf.mxu0
    %v2639 = vadd.f32 %v2430, %v2638
    %2640 = vmatmul.f32.gmra.mxu0 %v2137
    %v2641 = vpop.f32.mrf.mxu0
    %v2642 = vadd.f32 %v2433, %v2641
    %2643 = vmatmul.f32.gmra.mxu0 %v2138
    %v2644 = vpop.f32.mrf.mxu0
    %v2645 = vadd.f32 %v2436, %v2644
    %2646 = vmatmul.f32.gmra.mxu0 %v2139
    %v2647 = vpop.f32.mrf.mxu0
    %v2648 = vadd.f32 %v2439, %v2647
    %2649 = vmatmul.f32.gmra.mxu0 %v2140
    %v2650 = vpop.f32.mrf.mxu0
    %v2651 = vadd.f32 %v2442, %v2650
    %2652 = vmatmul.f32.gmra.mxu0 %v2141
    %v2653 = vpop.f32.mrf.mxu0
    %v2654 = vadd.f32 %v2445, %v2653
    %2655 = vmatmul.f32.gmra.mxu0 %v2142
    %v2656 = vpop.f32.mrf.mxu0
    %v2657 = vadd.f32 %v2448, %v2656
    %2658 = vmatmul.f32.gmra.mxu0 %v2143
    %v2659 = vpop.f32.mrf.mxu0
    %v2660 = vadd.f32 %v2451, %v2659
    %2661 = vmatmul.f32.gmra.mxu0 %v2144
    %v2662 = vpop.f32.mrf.mxu0
    %v2663 = vadd.f32 %v2454, %v2662
    %2664 = vmatmul.f32.gmra.mxu0 %v2145
    %v2665 = vpop.f32.mrf.mxu0
    %v2666 = vadd.f32 %v2457, %v2665
    %2667 = vmatmul.f32.gmra.mxu0 %v2146
    %v2668 = vpop.f32.mrf.mxu0
    %v2669 = vadd.f32 %v2460, %v2668
    %2670 = vmatmul.f32.gmra.mxu0 %v2147
    %v2671 = vpop.f32.mrf.mxu0
    %v2672 = vadd.f32 %v2463, %v2671
    %2673 = vmatmul.f32.gmra.mxu0 %v2148
    %v2674 = vpop.f32.mrf.mxu0
    %v2675 = vadd.f32 %v2466, %v2674
    %2676 = vmatmul.f32.gmra.mxu0 %v2149
    %v2677 = vpop.f32.mrf.mxu0
    %v2678 = vadd.f32 %v2469, %v2677
    %2679 = vmatmul.f32.gmra.mxu0 %v2150
    %v2680 = vpop.f32.mrf.mxu0
    %v2681 = vadd.f32 %v2472, %v2680
    %2682 = vmatmul.f32.gmra.mxu0 %v2151
    %v2683 = vpop.f32.mrf.mxu0
    %v2684 = vadd.f32 %v2475, %v2683
    %2685 = vmatmul.f32.gmra.mxu0 %v2152
    %v2686 = vpop.f32.mrf.mxu0
    %v2687 = vadd.f32 %v2478, %v2686
    %2688 = vmatmul.f32.gmra.mxu0 %v2153
    %v2689 = vpop.f32.mrf.mxu0
    %v2690 = vadd.f32 %v2481, %v2689
    %2691 = vdwg.mxu0
    %2692 = vmatpush.msra.mxu0 0.0
    %2693 = vmatpush.msra.mxu0 0.0
    %2694 = vmatpush.msra.mxu0 0.0
    %2695 = vmatpush.msra.mxu0 0.0
    %2696 = vmatpush.msra.mxu0 0.0
    %2697 = vmatpush.msra.mxu0 0.0
    %2698 = vmatpush.msra.mxu0 0.0
    %2699 = vmatpush.msra.mxu0 0.0
    %2700 = vmatpush.msra.mxu0 0.0
    %2701 = vmatpush.msra.mxu0 0.0
    %2702 = vmatpush.msra.mxu0 0.0
    %2703 = vmatpush.msra.mxu0 0.0
    %2704 = vmatpush.msra.mxu0 %v126
    %2705 = vmatpush.msra.mxu0 %v125
    %2706 = vmatpush.msra.mxu0 %v124
    %2707 = vmatpush.msra.mxu0 %v123
    %2708 = vmatmul.f32.gmra.mxu0 %v2154
    %v2709 = vpop.f32.mrf.mxu0
    %v2710 = vadd.f32 %v2501, %v2709
    %2711 = vmatmul.f32.gmra.mxu0 %v2156
    %v2712 = vpop.f32.mrf.mxu0
    %v2713 = vadd.f32 %v2504, %v2712
    %2714 = vmatmul.f32.gmra.mxu0 %v2158
    %v2715 = vpop.f32.mrf.mxu0
    %v2716 = vadd.f32 %v2507, %v2715
    %2717 = vmatmul.f32.gmra.mxu0 %v2160
    %v2718 = vpop.f32.mrf.mxu0
    %v2719 = vadd.f32 %v2510, %v2718
    %2720 = vmatmul.f32.gmra.mxu0 %v2162
    %v2721 = vpop.f32.mrf.mxu0
    %v2722 = vadd.f32 %v2513, %v2721
    %2723 = vmatmul.f32.gmra.mxu0 %v2164
    %v2724 = vpop.f32.mrf.mxu0
    %v2725 = vadd.f32 %v2516, %v2724
    %2726 = vmatmul.f32.gmra.mxu0 %v2166
    %v2727 = vpop.f32.mrf.mxu0
    %v2728 = vadd.f32 %v2519, %v2727
    %2729 = vmatmul.f32.gmra.mxu0 %v2168
    %v2730 = vpop.f32.mrf.mxu0
    %v2731 = vadd.f32 %v2522, %v2730
    %2732 = vmatmul.f32.gmra.mxu0 %v2170
    %v2733 = vpop.f32.mrf.mxu0
    %v2734 = vadd.f32 %v2525, %v2733
    %2735 = vmatmul.f32.gmra.mxu0 %v2172
    %v2736 = vpop.f32.mrf.mxu0
    %v2737 = vadd.f32 %v2528, %v2736
    %2738 = vmatmul.f32.gmra.mxu0 %v2174
    %v2739 = vpop.f32.mrf.mxu0
    %v2740 = vadd.f32 %v2531, %v2739
    %2741 = vmatmul.f32.gmra.mxu0 %v2176
    %v2742 = vpop.f32.mrf.mxu0
    %v2743 = vadd.f32 %v2534, %v2742
    %2744 = vmatmul.f32.gmra.mxu0 %v2178
    %v2745 = vpop.f32.mrf.mxu0
    %v2746 = vadd.f32 %v2537, %v2745
    %2747 = vmatmul.f32.gmra.mxu0 %v2180
    %v2748 = vpop.f32.mrf.mxu0
    %v2749 = vadd.f32 %v2540, %v2748
    %2750 = vmatmul.f32.gmra.mxu0 %v2182
    %v2751 = vpop.f32.mrf.mxu0
    %v2752 = vadd.f32 %v2543, %v2751
    %2753 = vmatmul.f32.gmra.mxu0 %v2184
    %v2754 = vpop.f32.mrf.mxu0
    %v2755 = vadd.f32 %v2546, %v2754
    %2756 = vmatmul.f32.gmra.mxu0 %v2186
    %v2757 = vpop.f32.mrf.mxu0
    %v2758 = vadd.f32 %v2549, %v2757
    %2759 = vmatmul.f32.gmra.mxu0 %v2188
    %v2760 = vpop.f32.mrf.mxu0
    %v2761 = vadd.f32 %v2552, %v2760
    %2762 = vmatmul.f32.gmra.mxu0 %v2190
    %v2763 = vpop.f32.mrf.mxu0
    %v2764 = vadd.f32 %v2555, %v2763
    %2765 = vmatmul.f32.gmra.mxu0 %v2192
    %v2766 = vpop.f32.mrf.mxu0
    %v2767 = vadd.f32 %v2558, %v2766
    %2768 = vmatmul.f32.gmra.mxu0 %v2194
    %v2769 = vpop.f32.mrf.mxu0
    %v2770 = vadd.f32 %v2561, %v2769
    %2771 = vmatmul.f32.gmra.mxu0 %v2196
    %v2772 = vpop.f32.mrf.mxu0
    %v2773 = vadd.f32 %v2564, %v2772
    %2774 = vmatmul.f32.gmra.mxu0 %v2198
    %v2775 = vpop.f32.mrf.mxu0
    %v2776 = vadd.f32 %v2567, %v2775
    %2777 = vmatmul.f32.gmra.mxu0 %v2200
    %v2778 = vpop.f32.mrf.mxu0
    %v2779 = vadd.f32 %v2570, %v2778
    %2780 = vmatmul.f32.gmra.mxu0 %v2202
    %v2781 = vpop.f32.mrf.mxu0
    %v2782 = vadd.f32 %v2573, %v2781
    %2783 = vmatmul.f32.gmra.mxu0 %v2204
    %v2784 = vpop.f32.mrf.mxu0
    %v2785 = vadd.f32 %v2576, %v2784
    %2786 = vmatmul.f32.gmra.mxu0 %v2206
    %v2787 = vpop.f32.mrf.mxu0
    %v2788 = vadd.f32 %v2579, %v2787
    %2789 = vmatmul.f32.gmra.mxu0 %v2208
    %v2790 = vpop.f32.mrf.mxu0
    %v2791 = vadd.f32 %v2582, %v2790
    %2792 = vmatmul.f32.gmra.mxu0 %v2210
    %v2793 = vpop.f32.mrf.mxu0
    %v2794 = vadd.f32 %v2585, %v2793
    %2795 = vmatmul.f32.gmra.mxu0 %v2212
    %v2796 = vpop.f32.mrf.mxu0
    %v2797 = vadd.f32 %v2588, %v2796
    %2798 = vmatmul.f32.gmra.mxu0 %v2206
    %v2799 = vpop.f32.mrf.mxu0
    %v2800 = vadd.f32 %v2591, %v2799
    %2801 = vmatmul.f32.gmra.mxu0 %v2208
    %v2802 = vpop.f32.mrf.mxu0
    %v2803 = vadd.f32 %v2594, %v2802
    %2804 = vmatmul.f32.gmra.mxu0 %v2214
    %v2805 = vpop.f32.mrf.mxu0
    %v2806 = vadd.f32 %v2597, %v2805
    %2807 = vmatmul.f32.gmra.mxu0 %v2216
    %v2808 = vpop.f32.mrf.mxu0
    %v2809 = vadd.f32 %v2600, %v2808
    %2810 = vmatmul.f32.gmra.mxu0 %v2218
    %v2811 = vpop.f32.mrf.mxu0
    %v2812 = vadd.f32 %v2603, %v2811
    %2813 = vmatmul.f32.gmra.mxu0 %v2220
    %v2814 = vpop.f32.mrf.mxu0
    %v2815 = vadd.f32 %v2606, %v2814
    %2816 = vmatmul.f32.gmra.mxu0 %v2222
    %v2817 = vpop.f32.mrf.mxu0
    %v2818 = vadd.f32 %v2609, %v2817
    %2819 = vmatmul.f32.gmra.mxu0 %v2224
    %v2820 = vpop.f32.mrf.mxu0
    %v2821 = vadd.f32 %v2612, %v2820
    %2822 = vmatmul.f32.gmra.mxu0 %v2226
    %v2823 = vpop.f32.mrf.mxu0
    %v2824 = vadd.f32 %v2615, %v2823
    %2825 = vmatmul.f32.gmra.mxu0 %v2228
    %v2826 = vpop.f32.mrf.mxu0
    %v2827 = vadd.f32 %v2618, %v2826
    %2828 = vmatmul.f32.gmra.mxu0 %v2230
    %v2829 = vpop.f32.mrf.mxu0
    %v2830 = vadd.f32 %v2621, %v2829
    %2831 = vmatmul.f32.gmra.mxu0 %v2232
    %v2832 = vpop.f32.mrf.mxu0
    %v2833 = vadd.f32 %v2624, %v2832
    %2834 = vmatmul.f32.gmra.mxu0 %v2234
    %v2835 = vpop.f32.mrf.mxu0
    %v2836 = vadd.f32 %v2627, %v2835
    %2837 = vmatmul.f32.gmra.mxu0 %v2236
    %v2838 = vpop.f32.mrf.mxu0
    %v2839 = vadd.f32 %v2630, %v2838
    %2840 = vmatmul.f32.gmra.mxu0 %v2238
    %v2841 = vpop.f32.mrf.mxu0
    %v2842 = vadd.f32 %v2633, %v2841
    %2843 = vmatmul.f32.gmra.mxu0 %v2240
    %v2844 = vpop.f32.mrf.mxu0
    %v2845 = vadd.f32 %v2636, %v2844
    %2846 = vmatmul.f32.gmra.mxu0 %v2242
    %v2847 = vpop.f32.mrf.mxu0
    %v2848 = vadd.f32 %v2639, %v2847
    %2849 = vmatmul.f32.gmra.mxu0 %v2244
    %v2850 = vpop.f32.mrf.mxu0
    %v2851 = vadd.f32 %v2642, %v2850
    %2852 = vmatmul.f32.gmra.mxu0 %v2246
    %v2853 = vpop.f32.mrf.mxu0
    %v2854 = vadd.f32 %v2645, %v2853
    %2855 = vmatmul.f32.gmra.mxu0 %v2248
    %v2856 = vpop.f32.mrf.mxu0
    %v2857 = vadd.f32 %v2648, %v2856
    %2858 = vmatmul.f32.gmra.mxu0 %v2250
    %v2859 = vpop.f32.mrf.mxu0
    %v2860 = vadd.f32 %v2651, %v2859
    %2861 = vmatmul.f32.gmra.mxu0 %v2252
    %v2862 = vpop.f32.mrf.mxu0
    %v2863 = vadd.f32 %v2654, %v2862
    %2864 = vmatmul.f32.gmra.mxu0 %v2254
    %v2865 = vpop.f32.mrf.mxu0
    %v2866 = vadd.f32 %v2657, %v2865
    %2867 = vmatmul.f32.gmra.mxu0 %v2256
    %v2868 = vpop.f32.mrf.mxu0
    %v2869 = vadd.f32 %v2660, %v2868
    %2870 = vmatmul.f32.gmra.mxu0 %v2258
    %v2871 = vpop.f32.mrf.mxu0
    %v2872 = vadd.f32 %v2663, %v2871
    %2873 = vmatmul.f32.gmra.mxu0 %v2260
    %v2874 = vpop.f32.mrf.mxu0
    %v2875 = vadd.f32 %v2666, %v2874
    %2876 = vmatmul.f32.gmra.mxu0 %v2262
    %v2877 = vpop.f32.mrf.mxu0
    %v2878 = vadd.f32 %v2669, %v2877
    %2879 = vmatmul.f32.gmra.mxu0 %v2264
    %v2880 = vpop.f32.mrf.mxu0
    %v2881 = vadd.f32 %v2672, %v2880
    %2882 = vmatmul.f32.gmra.mxu0 %v2266
    %v2883 = vpop.f32.mrf.mxu0
    %v2884 = vadd.f32 %v2675, %v2883
    %2885 = vmatmul.f32.gmra.mxu0 %v2268
    %v2886 = vpop.f32.mrf.mxu0
    %v2887 = vadd.f32 %v2678, %v2886
    %2888 = vmatmul.f32.gmra.mxu0 %v2270
    %v2889 = vpop.f32.mrf.mxu0
    %v2890 = vadd.f32 %v2681, %v2889
    %2891 = vmatmul.f32.gmra.mxu0 %v2272
    %v2892 = vpop.f32.mrf.mxu0
    %v2893 = vadd.f32 %v2684, %v2892
    %2894 = vmatmul.f32.gmra.mxu0 %v2266
    %v2895 = vpop.f32.mrf.mxu0
    %v2896 = vadd.f32 %v2687, %v2895
    %2897 = vmatmul.f32.gmra.mxu0 %v2268
    %v2898 = vpop.f32.mrf.mxu0
    %v2899 = vadd.f32 %v2690, %v2898
    %2900 = vdwg.mxu0
    %v2901 = vld [vmem:[%s2] sm:$0x1]
    %v2902 = vld [vmem:[%s3] sm:$0x1]
    %v2903 = vsel %vm1775, %v2710, 0.0
    %v2904 = vsel %vm1775, %v2713, 0.0
    %v2905 = vadd.f32 %v2903, %v2904
    %v2906 = vsel %vm1775, %v2716, 0.0
    %v2907 = vadd.f32 %v2905, %v2906
    %v2908 = vsel %vm1775, %v2719, 0.0
    %v2909 = vadd.f32 %v2907, %v2908
    %v2910 = vsel %vm1775, %v2722, 0.0
    %v2911 = vadd.f32 %v2909, %v2910
    %v2912 = vsel %vm1775, %v2725, 0.0
    %v2913 = vadd.f32 %v2911, %v2912
    %v2914 = vsel %vm1775, %v2728, 0.0
    %v2915 = vadd.f32 %v2913, %v2914
    %v2916 = vsel %vm1775, %v2731, 0.0
    %v2917 = vadd.f32 %v2915, %v2916
    %v2918 = vsel %vm1775, %v2734, 0.0
    %v2919 = vadd.f32 %v2917, %v2918
    %v2920 = vsel %vm1775, %v2737, 0.0
    %v2921 = vadd.f32 %v2919, %v2920
    %v2922 = vsel %vm1775, %v2740, 0.0
    %v2923 = vadd.f32 %v2921, %v2922
    %v2924 = vsel %vm1775, %v2743, 0.0
    %v2925 = vadd.f32 %v2923, %v2924
    %v2926 = vsel %vm1775, %v2746, 0.0
    %v2927 = vadd.f32 %v2925, %v2926
    %v2928 = vsel %vm1775, %v2749, 0.0
    %v2929 = vadd.f32 %v2927, %v2928
    %v2930 = vsel %vm1775, %v2752, 0.0
    %v2931 = vadd.f32 %v2929, %v2930
    %v2932 = vsel %vm1775, %v2755, 0.0
    %v2933 = vadd.f32 %v2931, %v2932
    %v2934 = vsel %vm1775, %v2758, 0.0
    %v2935 = vadd.f32 %v2933, %v2934
    %v2936 = vsel %vm1775, %v2761, 0.0
    %v2937 = vadd.f32 %v2935, %v2936
    %v2938 = vsel %vm1775, %v2764, 0.0
    %v2939 = vadd.f32 %v2937, %v2938
    %v2940 = vsel %vm1775, %v2767, 0.0
    %v2941 = vadd.f32 %v2939, %v2940
    %v2942 = vsel %vm1775, %v2770, 0.0
    %v2943 = vadd.f32 %v2941, %v2942
    %v2944 = vsel %vm1775, %v2773, 0.0
    %v2945 = vadd.f32 %v2943, %v2944
    %v2946 = vsel %vm1775, %v2776, 0.0
    %v2947 = vadd.f32 %v2945, %v2946
    %v2948 = vsel %vm1775, %v2779, 0.0
    %v2949 = vadd.f32 %v2947, %v2948
    %v2950 = vsel %vm1775, %v2782, 0.0
    %v2951 = vadd.f32 %v2949, %v2950
    %v2952 = vsel %vm1775, %v2785, 0.0
    %v2953 = vadd.f32 %v2951, %v2952
    %v2954 = vsel %vm1775, %v2788, 0.0
    %v2955 = vadd.f32 %v2953, %v2954
    %v2956 = vsel %vm1775, %v2791, 0.0
    %v2957 = vadd.f32 %v2955, %v2956
    %v2958 = vsel %vm1775, %v2794, 0.0
    %v2959 = vadd.f32 %v2957, %v2958
    %v2960 = vsel %vm1775, %v2797, 0.0
    %v2961 = vadd.f32 %v2959, %v2960
    %v2962 = vsel %vm1775, %v2800, 0.0
    %v2963 = vadd.f32 %v2961, %v2962
    %v2964 = vsel %vm1775, %v2803, 0.0
    %v2965 = vadd.f32 %v2963, %v2964
    %v2966 = vsel %vm1775, %v2806, 0.0
    %v2967 = vadd.f32 %v2965, %v2966
    %v2968 = vsel %vm1775, %v2809, 0.0
    %v2969 = vadd.f32 %v2967, %v2968
    %v2970 = vsel %vm1775, %v2812, 0.0
    %v2971 = vadd.f32 %v2969, %v2970
    %v2972 = vsel %vm1775, %v2815, 0.0
    %v2973 = vadd.f32 %v2971, %v2972
    %v2974 = vsel %vm1775, %v2818, 0.0
    %v2975 = vadd.f32 %v2973, %v2974
    %v2976 = vsel %vm1775, %v2821, 0.0
    %v2977 = vadd.f32 %v2975, %v2976
    %v2978 = vsel %vm1775, %v2824, 0.0
    %v2979 = vadd.f32 %v2977, %v2978
    %v2980 = vsel %vm1775, %v2827, 0.0
    %v2981 = vadd.f32 %v2979, %v2980
    %v2982 = vsel %vm1775, %v2830, 0.0
    %v2983 = vadd.f32 %v2981, %v2982
    %v2984 = vsel %vm1775, %v2833, 0.0
    %v2985 = vadd.f32 %v2983, %v2984
    %v2986 = vsel %vm1775, %v2836, 0.0
    %v2987 = vadd.f32 %v2985, %v2986
    %v2988 = vsel %vm1775, %v2839, 0.0
    %v2989 = vadd.f32 %v2987, %v2988
    %v2990 = vsel %vm1775, %v2842, 0.0
    %v2991 = vadd.f32 %v2989, %v2990
    %v2992 = vsel %vm1775, %v2845, 0.0
    %v2993 = vadd.f32 %v2991, %v2992
    %v2994 = vsel %vm1775, %v2848, 0.0
    %v2995 = vadd.f32 %v2993, %v2994
    %v2996 = vsel %vm1775, %v2851, 0.0
    %v2997 = vadd.f32 %v2995, %v2996
    %v2998 = vsel %vm1775, %v2854, 0.0
    %v2999 = vadd.f32 %v2997, %v2998
    %v3000 = vsel %vm1775, %v2857, 0.0
    %v3001 = vadd.f32 %v2999, %v3000
    %v3002 = vsel %vm1775, %v2860, 0.0
    %v3003 = vadd.f32 %v3001, %v3002
    %v3004 = vsel %vm1775, %v2863, 0.0
    %v3005 = vadd.f32 %v3003, %v3004
    %v3006 = vsel %vm1775, %v2866, 0.0
    %v3007 = vadd.f32 %v3005, %v3006
    %v3008 = vsel %vm1775, %v2869, 0.0
    %v3009 = vadd.f32 %v3007, %v3008
    %v3010 = vsel %vm1775, %v2872, 0.0
    %v3011 = vadd.f32 %v3009, %v3010
    %v3012 = vsel %vm1775, %v2875, 0.0
    %v3013 = vadd.f32 %v3011, %v3012
    %v3014 = vsel %vm1775, %v2878, 0.0
    %v3015 = vadd.f32 %v3013, %v3014
    %v3016 = vsel %vm1775, %v2881, 0.0
    %v3017 = vadd.f32 %v3015, %v3016
    %v3018 = vsel %vm1775, %v2884, 0.0
    %v3019 = vadd.f32 %v3017, %v3018
    %v3020 = vsel %vm1775, %v2887, 0.0
    %v3021 = vadd.f32 %v3019, %v3020
    %v3022 = vsel %vm1775, %v2890, 0.0
    %v3023 = vadd.f32 %v3021, %v3022
    %v3024 = vsel %vm1775, %v2893, 0.0
    %v3025 = vadd.f32 %v3023, %v3024
    %v3026 = vsel %vm1775, %v2896, 0.0
    %v3027 = vadd.f32 %v3025, %v3026
    %v3028 = vsel %vm1775, %v2899, 0.0
    %v3029 = vadd.f32 %v3027, %v3028
    %v3030 = vrot.slane %v3029, 4
    %v3031 = vadd.f32 %v3029, %v3030
    %v3032 = vrot.slane %v3031, 2
    %v3033 = vadd.f32 %v3031, %v3032
    %v3034 = vrot.slane %v3033, 1
    %v3035 = vadd.f32 %v3033, %v3034
    %v3036 = vmul.f32 %v3035, 0.001953125
    %v3037 = vmul.f32 %v2710, %v2710
    %v3038 = vmul.f32 %v2713, %v2713
    %v3039 = vmul.f32 %v2716, %v2716
    %v3040 = vmul.f32 %v2719, %v2719
    %v3041 = vmul.f32 %v2722, %v2722
    %v3042 = vmul.f32 %v2725, %v2725
    %v3043 = vmul.f32 %v2728, %v2728
    %v3044 = vmul.f32 %v2731, %v2731
    %v3045 = vmul.f32 %v2734, %v2734
    %v3046 = vmul.f32 %v2737, %v2737
    %v3047 = vmul.f32 %v2740, %v2740
    %v3048 = vmul.f32 %v2743, %v2743
    %v3049 = vmul.f32 %v2746, %v2746
    %v3050 = vmul.f32 %v2749, %v2749
    %v3051 = vmul.f32 %v2752, %v2752
    %v3052 = vmul.f32 %v2755, %v2755
    %v3053 = vmul.f32 %v2758, %v2758
    %v3054 = vmul.f32 %v2761, %v2761
    %v3055 = vmul.f32 %v2764, %v2764
    %v3056 = vmul.f32 %v2767, %v2767
    %v3057 = vmul.f32 %v2770, %v2770
    %v3058 = vmul.f32 %v2773, %v2773
    %v3059 = vmul.f32 %v2776, %v2776
    %v3060 = vmul.f32 %v2779, %v2779
    %v3061 = vmul.f32 %v2782, %v2782
    %v3062 = vmul.f32 %v2785, %v2785
    %v3063 = vmul.f32 %v2788, %v2788
    %v3064 = vmul.f32 %v2791, %v2791
    %v3065 = vmul.f32 %v2794, %v2794
    %v3066 = vmul.f32 %v2797, %v2797
    %v3067 = vmul.f32 %v2800, %v2800
    %v3068 = vmul.f32 %v2803, %v2803
    %v3069 = vmul.f32 %v2806, %v2806
    %v3070 = vmul.f32 %v2809, %v2809
    %v3071 = vmul.f32 %v2812, %v2812
    %v3072 = vmul.f32 %v2815, %v2815
    %v3073 = vmul.f32 %v2818, %v2818
    %v3074 = vmul.f32 %v2821, %v2821
    %v3075 = vmul.f32 %v2824, %v2824
    %v3076 = vmul.f32 %v2827, %v2827
    %v3077 = vmul.f32 %v2830, %v2830
    %v3078 = vmul.f32 %v2833, %v2833
    %v3079 = vmul.f32 %v2836, %v2836
    %v3080 = vmul.f32 %v2839, %v2839
    %v3081 = vmul.f32 %v2842, %v2842
    %v3082 = vmul.f32 %v2845, %v2845
    %v3083 = vmul.f32 %v2848, %v2848
    %v3084 = vmul.f32 %v2851, %v2851
    %v3085 = vmul.f32 %v2854, %v2854
    %v3086 = vmul.f32 %v2857, %v2857
    %v3087 = vmul.f32 %v2860, %v2860
    %v3088 = vmul.f32 %v2863, %v2863
    %v3089 = vmul.f32 %v2866, %v2866
    %v3090 = vmul.f32 %v2869, %v2869
    %v3091 = vmul.f32 %v2872, %v2872
    %v3092 = vmul.f32 %v2875, %v2875
    %v3093 = vmul.f32 %v2878, %v2878
    %v3094 = vmul.f32 %v2881, %v2881
    %v3095 = vmul.f32 %v2884, %v2884
    %v3096 = vmul.f32 %v2887, %v2887
    %v3097 = vmul.f32 %v2890, %v2890
    %v3098 = vmul.f32 %v2893, %v2893
    %v3099 = vmul.f32 %v2896, %v2896
    %v3100 = vmul.f32 %v2899, %v2899
    %v3101 = vsel %vm1775, %v3037, 0.0
    %v3102 = vsel %vm1775, %v3038, 0.0
    %v3103 = vadd.f32 %v3101, %v3102
    %v3104 = vsel %vm1775, %v3039, 0.0
    %v3105 = vadd.f32 %v3103, %v3104
    %v3106 = vsel %vm1775, %v3040, 0.0
    %v3107 = vadd.f32 %v3105, %v3106
    %v3108 = vsel %vm1775, %v3041, 0.0
    %v3109 = vadd.f32 %v3107, %v3108
    %v3110 = vsel %vm1775, %v3042, 0.0
    %v3111 = vadd.f32 %v3109, %v3110
    %v3112 = vsel %vm1775, %v3043, 0.0
    %v3113 = vadd.f32 %v3111, %v3112
    %v3114 = vsel %vm1775, %v3044, 0.0
    %v3115 = vadd.f32 %v3113, %v3114
    %v3116 = vsel %vm1775, %v3045, 0.0
    %v3117 = vadd.f32 %v3115, %v3116
    %v3118 = vsel %vm1775, %v3046, 0.0
    %v3119 = vadd.f32 %v3117, %v3118
    %v3120 = vsel %vm1775, %v3047, 0.0
    %v3121 = vadd.f32 %v3119, %v3120
    %v3122 = vsel %vm1775, %v3048, 0.0
    %v3123 = vadd.f32 %v3121, %v3122
    %v3124 = vsel %vm1775, %v3049, 0.0
    %v3125 = vadd.f32 %v3123, %v3124
    %v3126 = vsel %vm1775, %v3050, 0.0
    %v3127 = vadd.f32 %v3125, %v3126
    %v3128 = vsel %vm1775, %v3051, 0.0
    %v3129 = vadd.f32 %v3127, %v3128
    %v3130 = vsel %vm1775, %v3052, 0.0
    %v3131 = vadd.f32 %v3129, %v3130
    %v3132 = vsel %vm1775, %v3053, 0.0
    %v3133 = vadd.f32 %v3131, %v3132
    %v3134 = vsel %vm1775, %v3054, 0.0
    %v3135 = vadd.f32 %v3133, %v3134
    %v3136 = vsel %vm1775, %v3055, 0.0
    %v3137 = vadd.f32 %v3135, %v3136
    %v3138 = vsel %vm1775, %v3056, 0.0
    %v3139 = vadd.f32 %v3137, %v3138
    %v3140 = vsel %vm1775, %v3057, 0.0
    %v3141 = vadd.f32 %v3139, %v3140
    %v3142 = vsel %vm1775, %v3058, 0.0
    %v3143 = vadd.f32 %v3141, %v3142
    %v3144 = vsel %vm1775, %v3059, 0.0
    %v3145 = vadd.f32 %v3143, %v3144
    %v3146 = vsel %vm1775, %v3060, 0.0
    %v3147 = vadd.f32 %v3145, %v3146
    %v3148 = vsel %vm1775, %v3061, 0.0
    %v3149 = vadd.f32 %v3147, %v3148
    %v3150 = vsel %vm1775, %v3062, 0.0
    %v3151 = vadd.f32 %v3149, %v3150
    %v3152 = vsel %vm1775, %v3063, 0.0
    %v3153 = vadd.f32 %v3151, %v3152
    %v3154 = vsel %vm1775, %v3064, 0.0
    %v3155 = vadd.f32 %v3153, %v3154
    %v3156 = vsel %vm1775, %v3065, 0.0
    %v3157 = vadd.f32 %v3155, %v3156
    %v3158 = vsel %vm1775, %v3066, 0.0
    %v3159 = vadd.f32 %v3157, %v3158
    %v3160 = vsel %vm1775, %v3067, 0.0
    %v3161 = vadd.f32 %v3159, %v3160
    %v3162 = vsel %vm1775, %v3068, 0.0
    %v3163 = vadd.f32 %v3161, %v3162
    %v3164 = vsel %vm1775, %v3069, 0.0
    %v3165 = vadd.f32 %v3163, %v3164
    %v3166 = vsel %vm1775, %v3070, 0.0
    %v3167 = vadd.f32 %v3165, %v3166
    %v3168 = vsel %vm1775, %v3071, 0.0
    %v3169 = vadd.f32 %v3167, %v3168
    %v3170 = vsel %vm1775, %v3072, 0.0
    %v3171 = vadd.f32 %v3169, %v3170
    %v3172 = vsel %vm1775, %v3073, 0.0
    %v3173 = vadd.f32 %v3171, %v3172
    %v3174 = vsel %vm1775, %v3074, 0.0
    %v3175 = vadd.f32 %v3173, %v3174
    %v3176 = vsel %vm1775, %v3075, 0.0
    %v3177 = vadd.f32 %v3175, %v3176
    %v3178 = vsel %vm1775, %v3076, 0.0
    %v3179 = vadd.f32 %v3177, %v3178
    %v3180 = vsel %vm1775, %v3077, 0.0
    %v3181 = vadd.f32 %v3179, %v3180
    %v3182 = vsel %vm1775, %v3078, 0.0
    %v3183 = vadd.f32 %v3181, %v3182
    %v3184 = vsel %vm1775, %v3079, 0.0
    %v3185 = vadd.f32 %v3183, %v3184
    %v3186 = vsel %vm1775, %v3080, 0.0
    %v3187 = vadd.f32 %v3185, %v3186
    %v3188 = vsel %vm1775, %v3081, 0.0
    %v3189 = vadd.f32 %v3187, %v3188
    %v3190 = vsel %vm1775, %v3082, 0.0
    %v3191 = vadd.f32 %v3189, %v3190
    %v3192 = vsel %vm1775, %v3083, 0.0
    %v3193 = vadd.f32 %v3191, %v3192
    %v3194 = vsel %vm1775, %v3084, 0.0
    %v3195 = vadd.f32 %v3193, %v3194
    %v3196 = vsel %vm1775, %v3085, 0.0
    %v3197 = vadd.f32 %v3195, %v3196
    %v3198 = vsel %vm1775, %v3086, 0.0
    %v3199 = vadd.f32 %v3197, %v3198
    %v3200 = vsel %vm1775, %v3087, 0.0
    %v3201 = vadd.f32 %v3199, %v3200
    %v3202 = vsel %vm1775, %v3088, 0.0
    %v3203 = vadd.f32 %v3201, %v3202
    %v3204 = vsel %vm1775, %v3089, 0.0
    %v3205 = vadd.f32 %v3203, %v3204
    %v3206 = vsel %vm1775, %v3090, 0.0
    %v3207 = vadd.f32 %v3205, %v3206
    %v3208 = vsel %vm1775, %v3091, 0.0
    %v3209 = vadd.f32 %v3207, %v3208
    %v3210 = vsel %vm1775, %v3092, 0.0
    %v3211 = vadd.f32 %v3209, %v3210
    %v3212 = vsel %vm1775, %v3093, 0.0
    %v3213 = vadd.f32 %v3211, %v3212
    %v3214 = vsel %vm1775, %v3094, 0.0
    %v3215 = vadd.f32 %v3213, %v3214
    %v3216 = vsel %vm1775, %v3095, 0.0
    %v3217 = vadd.f32 %v3215, %v3216
    %v3218 = vsel %vm1775, %v3096, 0.0
    %v3219 = vadd.f32 %v3217, %v3218
    %v3220 = vsel %vm1775, %v3097, 0.0
    %v3221 = vadd.f32 %v3219, %v3220
    %v3222 = vsel %vm1775, %v3098, 0.0
    %v3223 = vadd.f32 %v3221, %v3222
    %v3224 = vsel %vm1775, %v3099, 0.0
    %v3225 = vadd.f32 %v3223, %v3224
    %v3226 = vsel %vm1775, %v3100, 0.0
    %v3227 = vadd.f32 %v3225, %v3226
    %v3228 = vrot.slane %v3227, 4
    %v3229 = vadd.f32 %v3227, %v3228
    %v3230 = vrot.slane %v3229, 2
    %v3231 = vadd.f32 %v3229, %v3230
    %v3232 = vrot.slane %v3231, 1
    %v3233 = vadd.f32 %v3231, %v3232
    %v3234 = vmul.f32 %v3233, 0.001953125
    %v3235 = vmul.f32 %v3036, %v3036
    %v3236 = vsub.f32 %v3234, %v3235
    %v3237 = vadd.f32 %v3236, 1e-05
    %v3238 = vrsqrt.pop %v3237
    %v3239 = vmul.f32 %v3238, %v3237
    %v3240 = vmul.f32 %v3239, %v3238
    %v3241 = vmul.f32 0.5, %v3240
    %v3242 = vsub.f32 1.5, %v3241
    %v3243 = vmul.f32 %v3238, %v3242
    %vm3244 = vweird.f32 %v3237
    %vm3245 = vweird.f32 %v3238
    %vm3246 = vmor %vm3244, %vm3245
    %v3247 = vsel %vm3246, %v3238, %v3243
    %v3248 = vmul.f32 %v2901, %v3247
    %v3249 = vmul.f32 %v3036, %v3248
    %v3250 = vsub.f32 %v2902, %v3249
    %v3252 = vperm.slane %v3248, 0
    %v3254 = vmul.f32 %v2710, %v3252
    %v3255 = vmul.f32 %v2713, %v3252
    %v3256 = vmul.f32 %v2716, %v3252
    %v3257 = vmul.f32 %v2719, %v3252
    %v3258 = vmul.f32 %v2722, %v3252
    %v3259 = vmul.f32 %v2725, %v3252
    %v3260 = vmul.f32 %v2728, %v3252
    %v3261 = vmul.f32 %v2731, %v3252
    %v3262 = vmul.f32 %v2734, %v3252
    %v3263 = vmul.f32 %v2737, %v3252
    %v3264 = vmul.f32 %v2740, %v3252
    %v3265 = vmul.f32 %v2743, %v3252
    %v3266 = vmul.f32 %v2746, %v3252
    %v3267 = vmul.f32 %v2749, %v3252
    %v3268 = vmul.f32 %v2752, %v3252
    %v3269 = vmul.f32 %v2755, %v3252
    %v3270 = vmul.f32 %v2758, %v3252
    %v3271 = vmul.f32 %v2761, %v3252
    %v3272 = vmul.f32 %v2764, %v3252
    %v3273 = vmul.f32 %v2767, %v3252
    %v3274 = vmul.f32 %v2770, %v3252
    %v3275 = vmul.f32 %v2773, %v3252
    %v3276 = vmul.f32 %v2776, %v3252
    %v3277 = vmul.f32 %v2779, %v3252
    %v3278 = vmul.f32 %v2782, %v3252
    %v3279 = vmul.f32 %v2785, %v3252
    %v3280 = vmul.f32 %v2788, %v3252
    %v3281 = vmul.f32 %v2791, %v3252
    %v3282 = vmul.f32 %v2794, %v3252
    %v3283 = vmul.f32 %v2797, %v3252
    %v3284 = vmul.f32 %v2800, %v3252
    %v3285 = vmul.f32 %v2803, %v3252
    %v3286 = vmul.f32 %v2806, %v3252
    %v3287 = vmul.f32 %v2809, %v3252
    %v3288 = vmul.f32 %v2812, %v3252
    %v3289 = vmul.f32 %v2815, %v3252
    %v3290 = vmul.f32 %v2818, %v3252
    %v3291 = vmul.f32 %v2821, %v3252
    %v3292 = vmul.f32 %v2824, %v3252
    %v3293 = vmul.f32 %v2827, %v3252
    %v3294 = vmul.f32 %v2830, %v3252
    %v3295 = vmul.f32 %v2833, %v3252
    %v3296 = vmul.f32 %v2836, %v3252
    %v3297 = vmul.f32 %v2839, %v3252
    %v3298 = vmul.f32 %v2842, %v3252
    %v3299 = vmul.f32 %v2845, %v3252
    %v3300 = vmul.f32 %v2848, %v3252
    %v3301 = vmul.f32 %v2851, %v3252
    %v3302 = vmul.f32 %v2854, %v3252
    %v3303 = vmul.f32 %v2857, %v3252
    %v3304 = vmul.f32 %v2860, %v3252
    %v3305 = vmul.f32 %v2863, %v3252
    %v3306 = vmul.f32 %v2866, %v3252
    %v3307 = vmul.f32 %v2869, %v3252
    %v3308 = vmul.f32 %v2872, %v3252
    %v3309 = vmul.f32 %v2875, %v3252
    %v3310 = vmul.f32 %v2878, %v3252
    %v3311 = vmul.f32 %v2881, %v3252
    %v3312 = vmul.f32 %v2884, %v3252
    %v3313 = vmul.f32 %v2887, %v3252
    %v3314 = vmul.f32 %v2890, %v3252
    %v3315 = vmul.f32 %v2893, %v3252
    %v3316 = vmul.f32 %v2896, %v3252
    %v3317 = vmul.f32 %v2899, %v3252
    %v3319 = vperm.slane %v3250, 0
    %v3321 = vadd.f32 %v3254, %v3319
    %v3322 = vadd.f32 %v3255, %v3319
    %v3323 = vadd.f32 %v3256, %v3319
    %v3324 = vadd.f32 %v3257, %v3319
    %v3325 = vadd.f32 %v3258, %v3319
    %v3326 = vadd.f32 %v3259, %v3319
    %v3327 = vadd.f32 %v3260, %v3319
    %v3328 = vadd.f32 %v3261, %v3319
    %v3329 = vadd.f32 %v3262, %v3319
    %v3330 = vadd.f32 %v3263, %v3319
    %v3331 = vadd.f32 %v3264, %v3319
    %v3332 = vadd.f32 %v3265, %v3319
    %v3333 = vadd.f32 %v3266, %v3319
    %v3334 = vadd.f32 %v3267, %v3319
    %v3335 = vadd.f32 %v3268, %v3319
    %v3336 = vadd.f32 %v3269, %v3319
    %v3337 = vadd.f32 %v3270, %v3319
    %v3338 = vadd.f32 %v3271, %v3319
    %v3339 = vadd.f32 %v3272, %v3319
    %v3340 = vadd.f32 %v3273, %v3319
    %v3341 = vadd.f32 %v3274, %v3319
    %v3342 = vadd.f32 %v3275, %v3319
    %v3343 = vadd.f32 %v3276, %v3319
    %v3344 = vadd.f32 %v3277, %v3319
    %v3345 = vadd.f32 %v3278, %v3319
    %v3346 = vadd.f32 %v3279, %v3319
    %v3347 = vadd.f32 %v3280, %v3319
    %v3348 = vadd.f32 %v3281, %v3319
    %v3349 = vadd.f32 %v3282, %v3319
    %v3350 = vadd.f32 %v3283, %v3319
    %v3351 = vadd.f32 %v3284, %v3319
    %v3352 = vadd.f32 %v3285, %v3319
    %v3353 = vadd.f32 %v3286, %v3319
    %v3354 = vadd.f32 %v3287, %v3319
    %v3355 = vadd.f32 %v3288, %v3319
    %v3356 = vadd.f32 %v3289, %v3319
    %v3357 = vadd.f32 %v3290, %v3319
    %v3358 = vadd.f32 %v3291, %v3319
    %v3359 = vadd.f32 %v3292, %v3319
    %v3360 = vadd.f32 %v3293, %v3319
    %v3361 = vadd.f32 %v3294, %v3319
    %v3362 = vadd.f32 %v3295, %v3319
    %v3363 = vadd.f32 %v3296, %v3319
    %v3364 = vadd.f32 %v3297, %v3319
    %v3365 = vadd.f32 %v3298, %v3319
    %v3366 = vadd.f32 %v3299, %v3319
    %v3367 = vadd.f32 %v3300, %v3319
    %v3368 = vadd.f32 %v3301, %v3319
    %v3369 = vadd.f32 %v3302, %v3319
    %v3370 = vadd.f32 %v3303, %v3319
    %v3371 = vadd.f32 %v3304, %v3319
    %v3372 = vadd.f32 %v3305, %v3319
    %v3373 = vadd.f32 %v3306, %v3319
    %v3374 = vadd.f32 %v3307, %v3319
    %v3375 = vadd.f32 %v3308, %v3319
    %v3376 = vadd.f32 %v3309, %v3319
    %v3377 = vadd.f32 %v3310, %v3319
    %v3378 = vadd.f32 %v3311, %v3319
    %v3379 = vadd.f32 %v3312, %v3319
    %v3380 = vadd.f32 %v3313, %v3319
    %v3381 = vadd.f32 %v3314, %v3319
    %v3382 = vadd.f32 %v3315, %v3319
    %v3383 = vadd.f32 %v3316, %v3319
    %v3384 = vadd.f32 %v3317, %v3319
    %v3385 = vmax.f32 %v3321, 0.0
    %v3386 = vmax.f32 %v3322, 0.0
    %v3387 = vmax.f32 %v3323, 0.0
    %v3388 = vmax.f32 %v3324, 0.0
    %v3389 = vmax.f32 %v3325, 0.0
    %v3390 = vmax.f32 %v3326, 0.0
    %v3391 = vmax.f32 %v3327, 0.0
    %v3392 = vmax.f32 %v3328, 0.0
    %v3393 = vmax.f32 %v3329, 0.0
    %v3394 = vmax.f32 %v3330, 0.0
    %v3395 = vmax.f32 %v3331, 0.0
    %v3396 = vmax.f32 %v3332, 0.0
    %v3397 = vmax.f32 %v3333, 0.0
    %v3398 = vmax.f32 %v3334, 0.0
    %v3399 = vmax.f32 %v3335, 0.0
    %v3400 = vmax.f32 %v3336, 0.0
    %v3401 = vmax.f32 %v3337, 0.0
    %v3402 = vmax.f32 %v3338, 0.0
    %v3403 = vmax.f32 %v3339, 0.0
    %v3404 = vmax.f32 %v3340, 0.0
    %v3405 = vmax.f32 %v3341, 0.0
    %v3406 = vmax.f32 %v3342, 0.0
    %v3407 = vmax.f32 %v3343, 0.0
    %v3408 = vmax.f32 %v3344, 0.0
    %v3409 = vmax.f32 %v3345, 0.0
    %v3410 = vmax.f32 %v3346, 0.0
    %v3411 = vmax.f32 %v3347, 0.0
    %v3412 = vmax.f32 %v3348, 0.0
    %v3413 = vmax.f32 %v3349, 0.0
    %v3414 = vmax.f32 %v3350, 0.0
    %v3415 = vmax.f32 %v3351, 0.0
    %v3416 = vmax.f32 %v3352, 0.0
    %v3417 = vmax.f32 %v3353, 0.0
    %v3418 = vmax.f32 %v3354, 0.0
    %v3419 = vmax.f32 %v3355, 0.0
    %v3420 = vmax.f32 %v3356, 0.0
    %v3421 = vmax.f32 %v3357, 0.0
    %v3422 = vmax.f32 %v3358, 0.0
    %v3423 = vmax.f32 %v3359, 0.0
    %v3424 = vmax.f32 %v3360, 0.0
    %v3425 = vmax.f32 %v3361, 0.0
    %v3426 = vmax.f32 %v3362, 0.0
    %v3427 = vmax.f32 %v3363, 0.0
    %v3428 = vmax.f32 %v3364, 0.0
    %v3429 = vmax.f32 %v3365, 0.0
    %v3430 = vmax.f32 %v3366, 0.0
    %v3431 = vmax.f32 %v3367, 0.0
    %v3432 = vmax.f32 %v3368, 0.0
    %v3433 = vmax.f32 %v3369, 0.0
    %v3434 = vmax.f32 %v3370, 0.0
    %v3435 = vmax.f32 %v3371, 0.0
    %v3436 = vmax.f32 %v3372, 0.0
    %v3437 = vmax.f32 %v3373, 0.0
    %v3438 = vmax.f32 %v3374, 0.0
    %v3439 = vmax.f32 %v3375, 0.0
    %v3440 = vmax.f32 %v3376, 0.0
    %v3441 = vmax.f32 %v3377, 0.0
    %v3442 = vmax.f32 %v3378, 0.0
    %v3443 = vmax.f32 %v3379, 0.0
    %v3444 = vmax.f32 %v3380, 0.0
    %v3445 = vmax.f32 %v3381, 0.0
    %v3446 = vmax.f32 %v3382, 0.0
    %v3447 = vmax.f32 %v3383, 0.0
    %v3448 = vmax.f32 %v3384, 0.0
    %v3449 = vld [vmem:[%s4] sm:$0xff]
    %v3450 = vld [vmem:[%s4 + $0x8] sm:$0xff]
    %v3451 = vld [vmem:[%s4 + $0x10] sm:$0xff]
    %v3452 = vld [vmem:[%s4 + $0x18] sm:$0xff]
    %v3453 = vld [vmem:[%s4 + $0x20] sm:$0xff]
    %v3454 = vld [vmem:[%s4 + $0x28] sm:$0xff]
    %v3455 = vld [vmem:[%s4 + $0x30] sm:$0xff]
    %v3456 = vld [vmem:[%s4 + $0x38] sm:$0xff]
    %v3457 = vld [vmem:[%s4 + $0x40] sm:$0xff]
    %v3458 = vld [vmem:[%s4 + $0x48] sm:$0xff]
    %v3459 = vld [vmem:[%s4 + $0x50] sm:$0xff]
    %v3460 = vld [vmem:[%s4 + $0x58] sm:$0xff]
    %v3461 = vld [vmem:[%s4 + $0x60] sm:$0xff]
    %v3462 = vld [vmem:[%s4 + $0x68] sm:$0xff]
    %v3463 = vld [vmem:[%s4 + $0x70] sm:$0xff]
    %v3464 = vld [vmem:[%s4 + $0x78] sm:$0xff]
    %v3465 = vld [vmem:[%s4 + $0x80] sm:$0xff]
    %v3466 = vld [vmem:[%s4 + $0x88] sm:$0xff]
    %v3467 = vld [vmem:[%s4 + $0x90] sm:$0xff]
    %v3468 = vld [vmem:[%s4 + $0x98] sm:$0xff]
    %v3469 = vld [vmem:[%s4 + $0xa0] sm:$0xff]
    %v3470 = vld [vmem:[%s4 + $0xa8] sm:$0xff]
    %v3471 = vld [vmem:[%s4 + $0xb0] sm:$0xff]
    %v3472 = vld [vmem:[%s4 + $0xb8] sm:$0xff]
    %v3473 = vld [vmem:[%s4 + $0xc0] sm:$0xff]
    %v3474 = vld [vmem:[%s4 + $0xc8] sm:$0xff]
    %v3475 = vld [vmem:[%s4 + $0xd0] sm:$0xff]
    %v3476 = vld [vmem:[%s4 + $0xd8] sm:$0xff]
    %v3477 = vld [vmem:[%s4 + $0xe0] sm:$0xff]
    %v3478 = vld [vmem:[%s4 + $0xe8] sm:$0xff]
    %v3479 = vld [vmem:[%s4 + $0xf0] sm:$0xff]
    %v3480 = vld [vmem:[%s4 + $0xf8] sm:$0xff]
    %v3481 = vld [vmem:[%s4 + $0x100] sm:$0xff]
    %v3482 = vld [vmem:[%s4 + $0x108] sm:$0xff]
    %v3483 = vld [vmem:[%s4 + $0x110] sm:$0xff]
    %v3484 = vld [vmem:[%s4 + $0x118] sm:$0xff]
    %v3517 = vrot.slane %v3387, 1
    %v3518 = vrot.slane %v3385, 1
    %v3519 = vrot.slane %v3389, 1
    %v3520 = vrot.slane %v3391, 1
    %v3521 = vrot.slane %v3393, 1
    %v3522 = vrot.slane %v3395, 1
    %v3523 = vrot.slane %v3397, 1
    %v3524 = vrot.slane %v3399, 1
    %v3525 = vrot.slane %v3401, 1
    %v3526 = vrot.slane %v3403, 1
    %v3527 = vrot.slane %v3405, 1
    %v3528 = vrot.slane %v3407, 1
    %v3529 = vrot.slane %v3409, 1
    %v3530 = vrot.slane %v3411, 1
    %v3531 = vrot.slane %v3413, 1
    %v3532 = vrot.slane %v3415, 1
    %v3533 = vrot.slane %v3419, 1
    %v3534 = vrot.slane %v3417, 1
    %v3535 = vrot.slane %v3421, 1
    %v3536 = vrot.slane %v3423, 1
    %v3537 = vrot.slane %v3425, 1
    %v3538 = vrot.slane %v3427, 1
    %v3539 = vrot.slane %v3429, 1
    %v3540 = vrot.slane %v3431, 1
    %v3541 = vrot.slane %v3433, 1
    %v3542 = vrot.slane %v3435, 1
    %v3543 = vrot.slane %v3437, 1
    %v3544 = vrot.slane %v3439, 1
    %v3545 = vrot.slane %v3441, 1
    %v3546 = vrot.slane %v3443, 1
    %v3547 = vrot.slane %v3445, 1
    %v3548 = vrot.slane %v3447, 1
    %v3613 = vrot.slane %v3387, 7
    %v3614 = vrot.slane %v3388, 7
    %v3615 = vsel %vm255, %v3613, %v3614
    %v3616 = vrot.slane %v3385, 7
    %v3617 = vrot.slane %v3386, 7
    %v3618 = vsel %vm255, %v3616, %v3617
    %v3619 = vrot.slane %v3389, 7
    %v3620 = vrot.slane %v3390, 7
    %v3621 = vsel %vm255, %v3619, %v3620
    %v3622 = vrot.slane %v3391, 7
    %v3623 = vrot.slane %v3392, 7
    %v3624 = vsel %vm255, %v3622, %v3623
    %v3625 = vrot.slane %v3393, 7
    %v3626 = vrot.slane %v3394, 7
    %v3627 = vsel %vm255, %v3625, %v3626
    %v3628 = vrot.slane %v3395, 7
    %v3629 = vrot.slane %v3396, 7
    %v3630 = vsel %vm255, %v3628, %v3629
    %v3631 = vrot.slane %v3397, 7
    %v3632 = vrot.slane %v3398, 7
    %v3633 = vsel %vm255, %v3631, %v3632
    %v3634 = vrot.slane %v3399, 7
    %v3635 = vrot.slane %v3400, 7
    %v3636 = vsel %vm255, %v3634, %v3635
    %v3637 = vrot.slane %v3401, 7
    %v3638 = vrot.slane %v3402, 7
    %v3639 = vsel %vm255, %v3637, %v3638
    %v3640 = vrot.slane %v3403, 7
    %v3641 = vrot.slane %v3404, 7
    %v3642 = vsel %vm255, %v3640, %v3641
    %v3643 = vrot.slane %v3405, 7
    %v3644 = vrot.slane %v3406, 7
    %v3645 = vsel %vm255, %v3643, %v3644
    %v3646 = vrot.slane %v3407, 7
    %v3647 = vrot.slane %v3408, 7
    %v3648 = vsel %vm255, %v3646, %v3647
    %v3649 = vrot.slane %v3409, 7
    %v3650 = vrot.slane %v3410, 7
    %v3651 = vsel %vm255, %v3649, %v3650
    %v3652 = vrot.slane %v3411, 7
    %v3653 = vrot.slane %v3412, 7
    %v3654 = vsel %vm255, %v3652, %v3653
    %v3655 = vrot.slane %v3413, 7
    %v3656 = vrot.slane %v3414, 7
    %v3657 = vsel %vm255, %v3655, %v3656
    %v3658 = vrot.slane %v3415, 7
    %v3659 = vrot.slane %v3416, 7
    %v3660 = vsel %vm255, %v3658, %v3659
    %v3661 = vrot.slane %v3419, 7
    %v3662 = vrot.slane %v3420, 7
    %v3663 = vsel %vm255, %v3661, %v3662
    %v3664 = vrot.slane %v3417, 7
    %v3665 = vrot.slane %v3418, 7
    %v3666 = vsel %vm255, %v3664, %v3665
    %v3667 = vrot.slane %v3421, 7
    %v3668 = vrot.slane %v3422, 7
    %v3669 = vsel %vm255, %v3667, %v3668
    %v3670 = vrot.slane %v3423, 7
    %v3671 = vrot.slane %v3424, 7
    %v3672 = vsel %vm255, %v3670, %v3671
    %v3673 = vrot.slane %v3425, 7
    %v3674 = vrot.slane %v3426, 7
    %v3675 = vsel %vm255, %v3673, %v3674
    %v3676 = vrot.slane %v3427, 7
    %v3677 = vrot.slane %v3428, 7
    %v3678 = vsel %vm255, %v3676, %v3677
    %v3679 = vrot.slane %v3429, 7
    %v3680 = vrot.slane %v3430, 7
    %v3681 = vsel %vm255, %v3679, %v3680
    %v3682 = vrot.slane %v3431, 7
    %v3683 = vrot.slane %v3432, 7
    %v3684 = vsel %vm255, %v3682, %v3683
    %v3685 = vrot.slane %v3433, 7
    %v3686 = vrot.slane %v3434, 7
    %v3687 = vsel %vm255, %v3685, %v3686
    %v3688 = vrot.slane %v3435, 7
    %v3689 = vrot.slane %v3436, 7
    %v3690 = vsel %vm255, %v3688, %v3689
    %v3691 = vrot.slane %v3437, 7
    %v3692 = vrot.slane %v3438, 7
    %v3693 = vsel %vm255, %v3691, %v3692
    %v3694 = vrot.slane %v3439, 7
    %v3695 = vrot.slane %v3440, 7
    %v3696 = vsel %vm255, %v3694, %v3695
    %v3697 = vrot.slane %v3441, 7
    %v3698 = vrot.slane %v3442, 7
    %v3699 = vsel %vm255, %v3697, %v3698
    %v3700 = vrot.slane %v3443, 7
    %v3701 = vrot.slane %v3444, 7
    %v3702 = vsel %vm255, %v3700, %v3701
    %v3703 = vrot.slane %v3445, 7
    %v3704 = vrot.slane %v3446, 7
    %v3705 = vsel %vm255, %v3703, %v3704
    %v3706 = vrot.slane %v3447, 7
    %v3707 = vrot.slane %v3448, 7
    %v3708 = vsel %vm255, %v3706, %v3707
    %v3771 = vsel %vm255, %v3517, %v3613
    %v3772 = vsel %vm255, %v3518, %v3616
    %v3773 = vsel %vm255, %v3519, %v3619
    %v3774 = vsel %vm255, %v3520, %v3622
    %v3775 = vsel %vm255, %v3521, %v3625
    %v3776 = vsel %vm255, %v3522, %v3628
    %v3777 = vsel %vm255, %v3523, %v3631
    %v3778 = vsel %vm255, %v3524, %v3634
    %v3779 = vsel %vm255, %v3525, %v3637
    %v3780 = vsel %vm255, %v3526, %v3640
    %v3781 = vsel %vm255, %v3527, %v3643
    %v3782 = vsel %vm255, %v3528, %v3646
    %v3783 = vsel %vm255, %v3529, %v3649
    %v3784 = vsel %vm255, %v3530, %v3652
    %v3785 = vsel %vm255, %v3531, %v3655
    %v3786 = vsel %vm255, %v3532, %v3658
    %v3787 = vsel %vm255, %v3533, %v3661
    %v3788 = vsel %vm255, %v3534, %v3664
    %v3789 = vsel %vm255, %v3535, %v3667
    %v3790 = vsel %vm255, %v3536, %v3670
    %v3791 = vsel %vm255, %v3537, %v3673
    %v3792 = vsel %vm255, %v3538, %v3676
    %v3793 = vsel %vm255, %v3539, %v3679
    %v3794 = vsel %vm255, %v3540, %v3682
    %v3795 = vsel %vm255, %v3541, %v3685
    %v3796 = vsel %vm255, %v3542, %v3688
    %v3797 = vsel %vm255, %v3543, %v3691
    %v3798 = vsel %vm255, %v3544, %v3694
    %v3799 = vsel %vm255, %v3545, %v3697
    %v3800 = vsel %vm255, %v3546, %v3700
    %v3801 = vsel %vm255, %v3547, %v3703
    %v3802 = vsel %vm255, %v3548, %v3706
    %v3803 = vrot.slane %v3388, 1
    %v3804 = vsel %vm446, %v3517, %v3803
    %v3805 = vrot.slane %v3386, 1
    %v3806 = vsel %vm446, %v3518, %v3805
    %v3807 = vrot.slane %v3390, 1
    %v3808 = vsel %vm446, %v3519, %v3807
    %v3809 = vrot.slane %v3392, 1
    %v3810 = vsel %vm446, %v3520, %v3809
    %v3811 = vrot.slane %v3394, 1
    %v3812 = vsel %vm446, %v3521, %v3811
    %v3813 = vrot.slane %v3396, 1
    %v3814 = vsel %vm446, %v3522, %v3813
    %v3815 = vrot.slane %v3398, 1
    %v3816 = vsel %vm446, %v3523, %v3815
    %v3817 = vrot.slane %v3400, 1
    %v3818 = vsel %vm446, %v3524, %v3817
    %v3819 = vrot.slane %v3402, 1
    %v3820 = vsel %vm446, %v3525, %v3819
    %v3821 = vrot.slane %v3404, 1
    %v3822 = vsel %vm446, %v3526, %v3821
    %v3823 = vrot.slane %v3406, 1
    %v3824 = vsel %vm446, %v3527, %v3823
    %v3825 = vrot.slane %v3408, 1
    %v3826 = vsel %vm446, %v3528, %v3825
    %v3827 = vrot.slane %v3410, 1
    %v3828 = vsel %vm446, %v3529, %v3827
    %v3829 = vrot.slane %v3412, 1
    %v3830 = vsel %vm446, %v3530, %v3829
    %v3831 = vrot.slane %v3414, 1
    %v3832 = vsel %vm446, %v3531, %v3831
    %v3833 = vrot.slane %v3416, 1
    %v3834 = vsel %vm446, %v3532, %v3833
    %v3835 = vrot.slane %v3420, 1
    %v3836 = vsel %vm446, %v3533, %v3835
    %v3837 = vrot.slane %v3418, 1
    %v3838 = vsel %vm446, %v3534, %v3837
    %v3839 = vrot.slane %v3422, 1
    %v3840 = vsel %vm446, %v3535, %v3839
    %v3841 = vrot.slane %v3424, 1
    %v3842 = vsel %vm446, %v3536, %v3841
    %v3843 = vrot.slane %v3426, 1
    %v3844 = vsel %vm446, %v3537, %v3843
    %v3845 = vrot.slane %v3428, 1
    %v3846 = vsel %vm446, %v3538, %v3845
    %v3847 = vrot.slane %v3430, 1
    %v3848 = vsel %vm446, %v3539, %v3847
    %v3849 = vrot.slane %v3432, 1
    %v3850 = vsel %vm446, %v3540, %v3849
    %v3851 = vrot.slane %v3434, 1
    %v3852 = vsel %vm446, %v3541, %v3851
    %v3853 = vrot.slane %v3436, 1
    %v3854 = vsel %vm446, %v3542, %v3853
    %v3855 = vrot.slane %v3438, 1
    %v3856 = vsel %vm446, %v3543, %v3855
    %v3857 = vrot.slane %v3440, 1
    %v3858 = vsel %vm446, %v3544, %v3857
    %v3859 = vrot.slane %v3442, 1
    %v3860 = vsel %vm446, %v3545, %v3859
    %v3861 = vrot.slane %v3444, 1
    %v3862 = vsel %vm446, %v3546, %v3861
    %v3863 = vrot.slane %v3446, 1
    %v3864 = vsel %vm446, %v3547, %v3863
    %v3865 = vrot.slane %v3448, 1
    %v3866 = vsel %vm446, %v3548, %v3865
    %v3931 = vsel %vm446, %v3803, %v3614
    %v3932 = vsel %vm446, %v3805, %v3617
    %v3933 = vsel %vm446, %v3807, %v3620
    %v3934 = vsel %vm446, %v3809, %v3623
    %v3935 = vsel %vm446, %v3811, %v3626
    %v3936 = vsel %vm446, %v3813, %v3629
    %v3937 = vsel %vm446, %v3815, %v3632
    %v3938 = vsel %vm446, %v3817, %v3635
    %v3939 = vsel %vm446, %v3819, %v3638
    %v3940 = vsel %vm446, %v3821, %v3641
    %v3941 = vsel %vm446, %v3823, %v3644
    %v3942 = vsel %vm446, %v3825, %v3647
    %v3943 = vsel %vm446, %v3827, %v3650
    %v3944 = vsel %vm446, %v3829, %v3653
    %v3945 = vsel %vm446, %v3831, %v3656
    %v3946 = vsel %vm446, %v3833, %v3659
    %v3947 = vsel %vm446, %v3835, %v3662
    %v3948 = vsel %vm446, %v3837, %v3665
    %v3949 = vsel %vm446, %v3839, %v3668
    %v3950 = vsel %vm446, %v3841, %v3671
    %v3951 = vsel %vm446, %v3843, %v3674
    %v3952 = vsel %vm446, %v3845, %v3677
    %v3953 = vsel %vm446, %v3847, %v3680
    %v3954 = vsel %vm446, %v3849, %v3683
    %v3955 = vsel %vm446, %v3851, %v3686
    %v3956 = vsel %vm446, %v3853, %v3689
    %v3957 = vsel %vm446, %v3855, %v3692
    %v3958 = vsel %vm446, %v3857, %v3695
    %v3959 = vsel %vm446, %v3859, %v3698
    %v3960 = vsel %vm446, %v3861, %v3701
    %v3961 = vsel %vm446, %v3863, %v3704
    %v3962 = vsel %vm446, %v3865, %v3707
    %3963 = vrot.lane.b32.xlu0 %v3387, 32
    %v3964 = vpop.permute.xlu0 %3963
    %3965 = vrot.lane.b32.xlu0 %v3388, 32
    %v3966 = vpop.permute.xlu0 %3965
    %3967 = vrot.lane.b32.xlu0 %v3385, 32
    %v3968 = vpop.permute.xlu0 %3967
    %3969 = vrot.lane.b32.xlu0 %v3386, 32
    %v3970 = vpop.permute.xlu0 %3969
    %3971 = vrot.lane.b32.xlu0 %v3389, 32
    %v3972 = vpop.permute.xlu0 %3971
    %3973 = vrot.lane.b32.xlu0 %v3390, 32
    %v3974 = vpop.permute.xlu0 %3973
    %3975 = vrot.lane.b32.xlu0 %v3391, 32
    %v3976 = vpop.permute.xlu0 %3975
    %3977 = vrot.lane.b32.xlu0 %v3392, 32
    %v3978 = vpop.permute.xlu0 %3977
    %3979 = vrot.lane.b32.xlu0 %v3393, 32
    %v3980 = vpop.permute.xlu0 %3979
    %3981 = vrot.lane.b32.xlu0 %v3394, 32
    %v3982 = vpop.permute.xlu0 %3981
    %3983 = vrot.lane.b32.xlu0 %v3395, 32
    %v3984 = vpop.permute.xlu0 %3983
    %3985 = vrot.lane.b32.xlu0 %v3396, 32
    %v3986 = vpop.permute.xlu0 %3985
    %3987 = vrot.lane.b32.xlu0 %v3397, 32
    %v3988 = vpop.permute.xlu0 %3987
    %3989 = vrot.lane.b32.xlu0 %v3398, 32
    %v3990 = vpop.permute.xlu0 %3989
    %3991 = vrot.lane.b32.xlu0 %v3399, 32
    %v3992 = vpop.permute.xlu0 %3991
    %3993 = vrot.lane.b32.xlu0 %v3400, 32
    %v3994 = vpop.permute.xlu0 %3993
    %3995 = vrot.lane.b32.xlu0 %v3401, 32
    %v3996 = vpop.permute.xlu0 %3995
    %3997 = vrot.lane.b32.xlu0 %v3402, 32
    %v3998 = vpop.permute.xlu0 %3997
    %3999 = vrot.lane.b32.xlu0 %v3403, 32
    %v4000 = vpop.permute.xlu0 %3999
    %4001 = vrot.lane.b32.xlu0 %v3404, 32
    %v4002 = vpop.permute.xlu0 %4001
    %4003 = vrot.lane.b32.xlu0 %v3405, 32
    %v4004 = vpop.permute.xlu0 %4003
    %4005 = vrot.lane.b32.xlu0 %v3406, 32
    %v4006 = vpop.permute.xlu0 %4005
    %4007 = vrot.lane.b32.xlu0 %v3407, 32
    %v4008 = vpop.permute.xlu0 %4007
    %4009 = vrot.lane.b32.xlu0 %v3408, 32
    %v4010 = vpop.permute.xlu0 %4009
    %4011 = vrot.lane.b32.xlu0 %v3409, 32
    %v4012 = vpop.permute.xlu0 %4011
    %4013 = vrot.lane.b32.xlu0 %v3410, 32
    %v4014 = vpop.permute.xlu0 %4013
    %4015 = vrot.lane.b32.xlu0 %v3411, 32
    %v4016 = vpop.permute.xlu0 %4015
    %4017 = vrot.lane.b32.xlu0 %v3412, 32
    %v4018 = vpop.permute.xlu0 %4017
    %4019 = vrot.lane.b32.xlu0 %v3413, 32
    %v4020 = vpop.permute.xlu0 %4019
    %4021 = vrot.lane.b32.xlu0 %v3414, 32
    %v4022 = vpop.permute.xlu0 %4021
    %4023 = vrot.lane.b32.xlu0 %v3419, 32
    %v4024 = vpop.permute.xlu0 %4023
    %4025 = vrot.lane.b32.xlu0 %v3420, 32
    %v4026 = vpop.permute.xlu0 %4025
    %4027 = vrot.lane.b32.xlu0 %v3417, 32
    %v4028 = vpop.permute.xlu0 %4027
    %4029 = vrot.lane.b32.xlu0 %v3418, 32
    %v4030 = vpop.permute.xlu0 %4029
    %4031 = vrot.lane.b32.xlu0 %v3421, 32
    %v4032 = vpop.permute.xlu0 %4031
    %4033 = vrot.lane.b32.xlu0 %v3422, 32
    %v4034 = vpop.permute.xlu0 %4033
    %4035 = vrot.lane.b32.xlu0 %v3423, 32
    %v4036 = vpop.permute.xlu0 %4035
    %4037 = vrot.lane.b32.xlu0 %v3424, 32
    %v4038 = vpop.permute.xlu0 %4037
    %4039 = vrot.lane.b32.xlu0 %v3425, 32
    %v4040 = vpop.permute.xlu0 %4039
    %4041 = vrot.lane.b32.xlu0 %v3426, 32
    %v4042 = vpop.permute.xlu0 %4041
    %4043 = vrot.lane.b32.xlu0 %v3427, 32
    %v4044 = vpop.permute.xlu0 %4043
    %4045 = vrot.lane.b32.xlu0 %v3428, 32
    %v4046 = vpop.permute.xlu0 %4045
    %4047 = vrot.lane.b32.xlu0 %v3429, 32
    %v4048 = vpop.permute.xlu0 %4047
    %4049 = vrot.lane.b32.xlu0 %v3430, 32
    %v4050 = vpop.permute.xlu0 %4049
    %4051 = vrot.lane.b32.xlu0 %v3431, 32
    %v4052 = vpop.permute.xlu0 %4051
    %4053 = vrot.lane.b32.xlu0 %v3432, 32
    %v4054 = vpop.permute.xlu0 %4053
    %4055 = vrot.lane.b32.xlu0 %v3433, 32
    %v4056 = vpop.permute.xlu0 %4055
    %4057 = vrot.lane.b32.xlu0 %v3434, 32
    %v4058 = vpop.permute.xlu0 %4057
    %4059 = vrot.lane.b32.xlu0 %v3435, 32
    %v4060 = vpop.permute.xlu0 %4059
    %4061 = vrot.lane.b32.xlu0 %v3436, 32
    %v4062 = vpop.permute.xlu0 %4061
    %4063 = vrot.lane.b32.xlu0 %v3437, 32
    %v4064 = vpop.permute.xlu0 %4063
    %4065 = vrot.lane.b32.xlu0 %v3438, 32
    %v4066 = vpop.permute.xlu0 %4065
    %4067 = vrot.lane.b32.xlu0 %v3439, 32
    %v4068 = vpop.permute.xlu0 %4067
    %4069 = vrot.lane.b32.xlu0 %v3440, 32
    %v4070 = vpop.permute.xlu0 %4069
    %4071 = vrot.lane.b32.xlu0 %v3441, 32
    %v4072 = vpop.permute.xlu0 %4071
    %4073 = vrot.lane.b32.xlu0 %v3442, 32
    %v4074 = vpop.permute.xlu0 %4073
    %4075 = vrot.lane.b32.xlu0 %v3443, 32
    %v4076 = vpop.permute.xlu0 %4075
    %4077 = vrot.lane.b32.xlu0 %v3444, 32
    %v4078 = vpop.permute.xlu0 %4077
    %4079 = vrot.lane.b32.xlu0 %v3445, 32
    %v4080 = vpop.permute.xlu0 %4079
    %4081 = vrot.lane.b32.xlu0 %v3446, 32
    %v4082 = vpop.permute.xlu0 %4081
    %4173 = vrot.lane.b32.xlu0 %v3804, 64
    %v4174 = vpop.permute.xlu0 %4173
    %4175 = vrot.lane.b32.xlu0 %v3931, 64
    %v4176 = vpop.permute.xlu0 %4175
    %4177 = vrot.lane.b32.xlu0 %v3806, 64
    %v4178 = vpop.permute.xlu0 %4177
    %4179 = vrot.lane.b32.xlu0 %v3932, 64
    %v4180 = vpop.permute.xlu0 %4179
    %4181 = vrot.lane.b32.xlu0 %v3808, 64
    %v4182 = vpop.permute.xlu0 %4181
    %4183 = vrot.lane.b32.xlu0 %v3933, 64
    %v4184 = vpop.permute.xlu0 %4183
    %4185 = vrot.lane.b32.xlu0 %v3810, 64
    %v4186 = vpop.permute.xlu0 %4185
    %4187 = vrot.lane.b32.xlu0 %v3934, 64
    %v4188 = vpop.permute.xlu0 %4187
    %4189 = vrot.lane.b32.xlu0 %v3812, 64
    %v4190 = vpop.permute.xlu0 %4189
    %4191 = vrot.lane.b32.xlu0 %v3935, 64
    %v4192 = vpop.permute.xlu0 %4191
    %4193 = vrot.lane.b32.xlu0 %v3814, 64
    %v4194 = vpop.permute.xlu0 %4193
    %4195 = vrot.lane.b32.xlu0 %v3936, 64
    %v4196 = vpop.permute.xlu0 %4195
    %4197 = vrot.lane.b32.xlu0 %v3816, 64
    %v4198 = vpop.permute.xlu0 %4197
    %4199 = vrot.lane.b32.xlu0 %v3937, 64
    %v4200 = vpop.permute.xlu0 %4199
    %4201 = vrot.lane.b32.xlu0 %v3818, 64
    %v4202 = vpop.permute.xlu0 %4201
    %4203 = vrot.lane.b32.xlu0 %v3938, 64
    %v4204 = vpop.permute.xlu0 %4203
    %4205 = vrot.lane.b32.xlu0 %v3820, 64
    %v4206 = vpop.permute.xlu0 %4205
    %4207 = vrot.lane.b32.xlu0 %v3939, 64
    %v4208 = vpop.permute.xlu0 %4207
    %4209 = vrot.lane.b32.xlu0 %v3822, 64
    %v4210 = vpop.permute.xlu0 %4209
    %4211 = vrot.lane.b32.xlu0 %v3940, 64
    %v4212 = vpop.permute.xlu0 %4211
    %4213 = vrot.lane.b32.xlu0 %v3824, 64
    %v4214 = vpop.permute.xlu0 %4213
    %4215 = vrot.lane.b32.xlu0 %v3941, 64
    %v4216 = vpop.permute.xlu0 %4215
    %4217 = vrot.lane.b32.xlu0 %v3826, 64
    %v4218 = vpop.permute.xlu0 %4217
    %4219 = vrot.lane.b32.xlu0 %v3942, 64
    %v4220 = vpop.permute.xlu0 %4219
    %4221 = vrot.lane.b32.xlu0 %v3828, 64
    %v4222 = vpop.permute.xlu0 %4221
    %4223 = vrot.lane.b32.xlu0 %v3943, 64
    %v4224 = vpop.permute.xlu0 %4223
    %4225 = vrot.lane.b32.xlu0 %v3830, 64
    %v4226 = vpop.permute.xlu0 %4225
    %4227 = vrot.lane.b32.xlu0 %v3944, 64
    %v4228 = vpop.permute.xlu0 %4227
    %4229 = vrot.lane.b32.xlu0 %v3832, 64
    %v4230 = vpop.permute.xlu0 %4229
    %4231 = vrot.lane.b32.xlu0 %v3945, 64
    %v4232 = vpop.permute.xlu0 %4231
    %4233 = vrot.lane.b32.xlu0 %v3836, 64
    %v4234 = vpop.permute.xlu0 %4233
    %4235 = vrot.lane.b32.xlu0 %v3947, 64
    %v4236 = vpop.permute.xlu0 %4235
    %4237 = vrot.lane.b32.xlu0 %v3838, 64
    %v4238 = vpop.permute.xlu0 %4237
    %4239 = vrot.lane.b32.xlu0 %v3948, 64
    %v4240 = vpop.permute.xlu0 %4239
    %4241 = vrot.lane.b32.xlu0 %v3840, 64
    %v4242 = vpop.permute.xlu0 %4241
    %4243 = vrot.lane.b32.xlu0 %v3949, 64
    %v4244 = vpop.permute.xlu0 %4243
    %4245 = vrot.lane.b32.xlu0 %v3842, 64
    %v4246 = vpop.permute.xlu0 %4245
    %4247 = vrot.lane.b32.xlu0 %v3950, 64
    %v4248 = vpop.permute.xlu0 %4247
    %4249 = vrot.lane.b32.xlu0 %v3844, 64
    %v4250 = vpop.permute.xlu0 %4249
    %4251 = vrot.lane.b32.xlu0 %v3951, 64
    %v4252 = vpop.permute.xlu0 %4251
    %4253 = vrot.lane.b32.xlu0 %v3846, 64
    %v4254 = vpop.permute.xlu0 %4253
    %4255 = vrot.lane.b32.xlu0 %v3952, 64
    %v4256 = vpop.permute.xlu0 %4255
    %4257 = vrot.lane.b32.xlu0 %v3848, 64
    %v4258 = vpop.permute.xlu0 %4257
    %4259 = vrot.lane.b32.xlu0 %v3953, 64
    %v4260 = vpop.permute.xlu0 %4259
    %4261 = vrot.lane.b32.xlu0 %v3850, 64
    %v4262 = vpop.permute.xlu0 %4261
    %4263 = vrot.lane.b32.xlu0 %v3954, 64
    %v4264 = vpop.permute.xlu0 %4263
    %4265 = vrot.lane.b32.xlu0 %v3852, 64
    %v4266 = vpop.permute.xlu0 %4265
    %4267 = vrot.lane.b32.xlu0 %v3955, 64
    %v4268 = vpop.permute.xlu0 %4267
    %4269 = vrot.lane.b32.xlu0 %v3854, 64
    %v4270 = vpop.permute.xlu0 %4269
    %4271 = vrot.lane.b32.xlu0 %v3956, 64
    %v4272 = vpop.permute.xlu0 %4271
    %4273 = vrot.lane.b32.xlu0 %v3856, 64
    %v4274 = vpop.permute.xlu0 %4273
    %4275 = vrot.lane.b32.xlu0 %v3957, 64
    %v4276 = vpop.permute.xlu0 %4275
    %4277 = vrot.lane.b32.xlu0 %v3858, 64
    %v4278 = vpop.permute.xlu0 %4277
    %4279 = vrot.lane.b32.xlu0 %v3958, 64
    %v4280 = vpop.permute.xlu0 %4279
    %4281 = vrot.lane.b32.xlu0 %v3860, 64
    %v4282 = vpop.permute.xlu0 %4281
    %4283 = vrot.lane.b32.xlu0 %v3959, 64
    %v4284 = vpop.permute.xlu0 %4283
    %4285 = vrot.lane.b32.xlu0 %v3862, 64
    %v4286 = vpop.permute.xlu0 %4285
    %4287 = vrot.lane.b32.xlu0 %v3960, 64
    %v4288 = vpop.permute.xlu0 %4287
    %4289 = vrot.lane.b32.xlu0 %v3864, 64
    %v4290 = vpop.permute.xlu0 %4289
    %4291 = vrot.lane.b32.xlu0 %v3961, 64
    %v4292 = vpop.permute.xlu0 %4291
    %4385 = vrot.lane.b32.xlu0 %v3772, 96
    %v4386 = vpop.permute.xlu0 %4385
    %4387 = vrot.lane.b32.xlu0 %v3618, 96
    %v4388 = vpop.permute.xlu0 %4387
    %4389 = vrot.lane.b32.xlu0 %v3771, 96
    %v4390 = vpop.permute.xlu0 %4389
    %4391 = vrot.lane.b32.xlu0 %v3615, 96
    %v4392 = vpop.permute.xlu0 %4391
    %4393 = vrot.lane.b32.xlu0 %v3773, 96
    %v4394 = vpop.permute.xlu0 %4393
    %4395 = vrot.lane.b32.xlu0 %v3621, 96
    %v4396 = vpop.permute.xlu0 %4395
    %4397 = vrot.lane.b32.xlu0 %v3774, 96
    %v4398 = vpop.permute.xlu0 %4397
    %4399 = vrot.lane.b32.xlu0 %v3624, 96
    %v4400 = vpop.permute.xlu0 %4399
    %4401 = vrot.lane.b32.xlu0 %v3775, 96
    %v4402 = vpop.permute.xlu0 %4401
    %4403 = vrot.lane.b32.xlu0 %v3627, 96
    %v4404 = vpop.permute.xlu0 %4403
    %4405 = vrot.lane.b32.xlu0 %v3776, 96
    %v4406 = vpop.permute.xlu0 %4405
    %4407 = vrot.lane.b32.xlu0 %v3630, 96
    %v4408 = vpop.permute.xlu0 %4407
    %4409 = vrot.lane.b32.xlu0 %v3777, 96
    %v4410 = vpop.permute.xlu0 %4409
    %4411 = vrot.lane.b32.xlu0 %v3633, 96
    %v4412 = vpop.permute.xlu0 %4411
    %4413 = vrot.lane.b32.xlu0 %v3778, 96
    %v4414 = vpop.permute.xlu0 %4413
    %4415 = vrot.lane.b32.xlu0 %v3636, 96
    %v4416 = vpop.permute.xlu0 %4415
    %4417 = vrot.lane.b32.xlu0 %v3779, 96
    %v4418 = vpop.permute.xlu0 %4417
    %4419 = vrot.lane.b32.xlu0 %v3639, 96
    %v4420 = vpop.permute.xlu0 %4419
    %4421 = vrot.lane.b32.xlu0 %v3780, 96
    %v4422 = vpop.permute.xlu0 %4421
    %4423 = vrot.lane.b32.xlu0 %v3642, 96
    %v4424 = vpop.permute.xlu0 %4423
    %4425 = vrot.lane.b32.xlu0 %v3781, 96
    %v4426 = vpop.permute.xlu0 %4425
    %4427 = vrot.lane.b32.xlu0 %v3645, 96
    %v4428 = vpop.permute.xlu0 %4427
    %4429 = vrot.lane.b32.xlu0 %v3782, 96
    %v4430 = vpop.permute.xlu0 %4429
    %4431 = vrot.lane.b32.xlu0 %v3648, 96
    %v4432 = vpop.permute.xlu0 %4431
    %4433 = vrot.lane.b32.xlu0 %v3783, 96
    %v4434 = vpop.permute.xlu0 %4433
    %4435 = vrot.lane.b32.xlu0 %v3651, 96
    %v4436 = vpop.permute.xlu0 %4435
    %4437 = vrot.lane.b32.xlu0 %v3784, 96
    %v4438 = vpop.permute.xlu0 %4437
    %4439 = vrot.lane.b32.xlu0 %v3654, 96
    %v4440 = vpop.permute.xlu0 %4439
    %4441 = vrot.lane.b32.xlu0 %v3785, 96
    %v4442 = vpop.permute.xlu0 %4441
    %4443 = vrot.lane.b32.xlu0 %v3657, 96
    %v4444 = vpop.permute.xlu0 %4443
    %4445 = vrot.lane.b32.xlu0 %v3786, 96
    %v4446 = vpop.permute.xlu0 %4445
    %4447 = vrot.lane.b32.xlu0 %v3660, 96
    %v4448 = vpop.permute.xlu0 %4447
    %4449 = vrot.lane.b32.xlu0 %v3788, 96
    %v4450 = vpop.permute.xlu0 %4449
    %4451 = vrot.lane.b32.xlu0 %v3666, 96
    %v4452 = vpop.permute.xlu0 %4451
    %4453 = vrot.lane.b32.xlu0 %v3787, 96
    %v4454 = vpop.permute.xlu0 %4453
    %4455 = vrot.lane.b32.xlu0 %v3663, 96
    %v4456 = vpop.permute.xlu0 %4455
    %4457 = vrot.lane.b32.xlu0 %v3789, 96
    %v4458 = vpop.permute.xlu0 %4457
    %4459 = vrot.lane.b32.xlu0 %v3669, 96
    %v4460 = vpop.permute.xlu0 %4459
    %4461 = vrot.lane.b32.xlu0 %v3790, 96
    %v4462 = vpop.permute.xlu0 %4461
    %4463 = vrot.lane.b32.xlu0 %v3672, 96
    %v4464 = vpop.permute.xlu0 %4463
    %4465 = vrot.lane.b32.xlu0 %v3791, 96
    %v4466 = vpop.permute.xlu0 %4465
    %4467 = vrot.lane.b32.xlu0 %v3675, 96
    %v4468 = vpop.permute.xlu0 %4467
    %4469 = vrot.lane.b32.xlu0 %v3792, 96
    %v4470 = vpop.permute.xlu0 %4469
    %4471 = vrot.lane.b32.xlu0 %v3678, 96
    %v4472 = vpop.permute.xlu0 %4471
    %4473 = vrot.lane.b32.xlu0 %v3793, 96
    %v4474 = vpop.permute.xlu0 %4473
    %4475 = vrot.lane.b32.xlu0 %v3681, 96
    %v4476 = vpop.permute.xlu0 %4475
    %4477 = vrot.lane.b32.xlu0 %v3794, 96
    %v4478 = vpop.permute.xlu0 %4477
    %4479 = vrot.lane.b32.xlu0 %v3684, 96
    %v4480 = vpop.permute.xlu0 %4479
    %4481 = vrot.lane.b32.xlu0 %v3795, 96
    %v4482 = vpop.permute.xlu0 %4481
    %4483 = vrot.lane.b32.xlu0 %v3687, 96
    %v4484 = vpop.permute.xlu0 %4483
    %4485 = vrot.lane.b32.xlu0 %v3796, 96
    %v4486 = vpop.permute.xlu0 %4485
    %4487 = vrot.lane.b32.xlu0 %v3690, 96
    %v4488 = vpop.permute.xlu0 %4487
    %4489 = vrot.lane.b32.xlu0 %v3797, 96
    %v4490 = vpop.permute.xlu0 %4489
    %4491 = vrot.lane.b32.xlu0 %v3693, 96
    %v4492 = vpop.permute.xlu0 %4491
    %4493 = vrot.lane.b32.xlu0 %v3798, 96
    %v4494 = vpop.permute.xlu0 %4493
    %4495 = vrot.lane.b32.xlu0 %v3696, 96
    %v4496 = vpop.permute.xlu0 %4495
    %4497 = vrot.lane.b32.xlu0 %v3799, 96
    %v4498 = vpop.permute.xlu0 %4497
    %4499 = vrot.lane.b32.xlu0 %v3699, 96
    %v4500 = vpop.permute.xlu0 %4499
    %4501 = vrot.lane.b32.xlu0 %v3800, 96
    %v4502 = vpop.permute.xlu0 %4501
    %4503 = vrot.lane.b32.xlu0 %v3702, 96
    %v4504 = vpop.permute.xlu0 %4503
    %4505 = vrot.lane.b32.xlu0 %v3801, 96
    %v4506 = vpop.permute.xlu0 %4505
    %4507 = vrot.lane.b32.xlu0 %v3705, 96
    %v4508 = vpop.permute.xlu0 %4507
    %4509 = vrot.lane.b32.xlu0 %v3802, 96
    %v4510 = vpop.permute.xlu0 %4509
    %4511 = vrot.lane.b32.xlu0 %v3708, 96
    %v4512 = vpop.permute.xlu0 %4511
    %4579 = vrot.lane.b32.xlu0 %v3806, 32
    %v4580 = vpop.permute.xlu0 %4579
    %4581 = vrot.lane.b32.xlu0 %v3932, 32
    %v4582 = vpop.permute.xlu0 %4581
    %4583 = vrot.lane.b32.xlu0 %v3804, 32
    %v4584 = vpop.permute.xlu0 %4583
    %4585 = vrot.lane.b32.xlu0 %v3931, 32
    %v4586 = vpop.permute.xlu0 %4585
    %4587 = vrot.lane.b32.xlu0 %v3808, 32
    %v4588 = vpop.permute.xlu0 %4587
    %4589 = vrot.lane.b32.xlu0 %v3933, 32
    %v4590 = vpop.permute.xlu0 %4589
    %4591 = vrot.lane.b32.xlu0 %v3810, 32
    %v4592 = vpop.permute.xlu0 %4591
    %4593 = vrot.lane.b32.xlu0 %v3934, 32
    %v4594 = vpop.permute.xlu0 %4593
    %4595 = vrot.lane.b32.xlu0 %v3812, 32
    %v4596 = vpop.permute.xlu0 %4595
    %4597 = vrot.lane.b32.xlu0 %v3935, 32
    %v4598 = vpop.permute.xlu0 %4597
    %4599 = vrot.lane.b32.xlu0 %v3814, 32
    %v4600 = vpop.permute.xlu0 %4599
    %4601 = vrot.lane.b32.xlu0 %v3936, 32
    %v4602 = vpop.permute.xlu0 %4601
    %4603 = vrot.lane.b32.xlu0 %v3816, 32
    %v4604 = vpop.permute.xlu0 %4603
    %4605 = vrot.lane.b32.xlu0 %v3937, 32
    %v4606 = vpop.permute.xlu0 %4605
    %4607 = vrot.lane.b32.xlu0 %v3818, 32
    %v4608 = vpop.permute.xlu0 %4607
    %4609 = vrot.lane.b32.xlu0 %v3938, 32
    %v4610 = vpop.permute.xlu0 %4609
    %4611 = vrot.lane.b32.xlu0 %v3820, 32
    %v4612 = vpop.permute.xlu0 %4611
    %4613 = vrot.lane.b32.xlu0 %v3939, 32
    %v4614 = vpop.permute.xlu0 %4613
    %4615 = vrot.lane.b32.xlu0 %v3822, 32
    %v4616 = vpop.permute.xlu0 %4615
    %4617 = vrot.lane.b32.xlu0 %v3940, 32
    %v4618 = vpop.permute.xlu0 %4617
    %4619 = vrot.lane.b32.xlu0 %v3824, 32
    %v4620 = vpop.permute.xlu0 %4619
    %4621 = vrot.lane.b32.xlu0 %v3941, 32
    %v4622 = vpop.permute.xlu0 %4621
    %4623 = vrot.lane.b32.xlu0 %v3826, 32
    %v4624 = vpop.permute.xlu0 %4623
    %4625 = vrot.lane.b32.xlu0 %v3942, 32
    %v4626 = vpop.permute.xlu0 %4625
    %4627 = vrot.lane.b32.xlu0 %v3828, 32
    %v4628 = vpop.permute.xlu0 %4627
    %4629 = vrot.lane.b32.xlu0 %v3943, 32
    %v4630 = vpop.permute.xlu0 %4629
    %4631 = vrot.lane.b32.xlu0 %v3830, 32
    %v4632 = vpop.permute.xlu0 %4631
    %4633 = vrot.lane.b32.xlu0 %v3944, 32
    %v4634 = vpop.permute.xlu0 %4633
    %4635 = vrot.lane.b32.xlu0 %v3832, 32
    %v4636 = vpop.permute.xlu0 %4635
    %4637 = vrot.lane.b32.xlu0 %v3945, 32
    %v4638 = vpop.permute.xlu0 %4637
    %4639 = vrot.lane.b32.xlu0 %v3834, 32
    %v4640 = vpop.permute.xlu0 %4639
    %4641 = vrot.lane.b32.xlu0 %v3946, 32
    %v4642 = vpop.permute.xlu0 %4641
    %4643 = vrot.lane.b32.xlu0 %v3838, 32
    %v4644 = vpop.permute.xlu0 %4643
    %4645 = vrot.lane.b32.xlu0 %v3948, 32
    %v4646 = vpop.permute.xlu0 %4645
    %4647 = vrot.lane.b32.xlu0 %v3836, 32
    %v4648 = vpop.permute.xlu0 %4647
    %4649 = vrot.lane.b32.xlu0 %v3947, 32
    %v4650 = vpop.permute.xlu0 %4649
    %4651 = vrot.lane.b32.xlu0 %v3840, 32
    %v4652 = vpop.permute.xlu0 %4651
    %4653 = vrot.lane.b32.xlu0 %v3949, 32
    %v4654 = vpop.permute.xlu0 %4653
    %4655 = vrot.lane.b32.xlu0 %v3842, 32
    %v4656 = vpop.permute.xlu0 %4655
    %4657 = vrot.lane.b32.xlu0 %v3950, 32
    %v4658 = vpop.permute.xlu0 %4657
    %4659 = vrot.lane.b32.xlu0 %v3844, 32
    %v4660 = vpop.permute.xlu0 %4659
    %4661 = vrot.lane.b32.xlu0 %v3951, 32
    %v4662 = vpop.permute.xlu0 %4661
    %4663 = vrot.lane.b32.xlu0 %v3846, 32
    %v4664 = vpop.permute.xlu0 %4663
    %4665 = vrot.lane.b32.xlu0 %v3952, 32
    %v4666 = vpop.permute.xlu0 %4665
    %4667 = vrot.lane.b32.xlu0 %v3848, 32
    %v4668 = vpop.permute.xlu0 %4667
    %4669 = vrot.lane.b32.xlu0 %v3953, 32
    %v4670 = vpop.permute.xlu0 %4669
    %4671 = vrot.lane.b32.xlu0 %v3850, 32
    %v4672 = vpop.permute.xlu0 %4671
    %4673 = vrot.lane.b32.xlu0 %v3954, 32
    %v4674 = vpop.permute.xlu0 %4673
    %4675 = vrot.lane.b32.xlu0 %v3852, 32
    %v4676 = vpop.permute.xlu0 %4675
    %4677 = vrot.lane.b32.xlu0 %v3955, 32
    %v4678 = vpop.permute.xlu0 %4677
    %4679 = vrot.lane.b32.xlu0 %v3854, 32
    %v4680 = vpop.permute.xlu0 %4679
    %4681 = vrot.lane.b32.xlu0 %v3956, 32
    %v4682 = vpop.permute.xlu0 %4681
    %4683 = vrot.lane.b32.xlu0 %v3856, 32
    %v4684 = vpop.permute.xlu0 %4683
    %4685 = vrot.lane.b32.xlu0 %v3957, 32
    %v4686 = vpop.permute.xlu0 %4685
    %4687 = vrot.lane.b32.xlu0 %v3858, 32
    %v4688 = vpop.permute.xlu0 %4687
    %4689 = vrot.lane.b32.xlu0 %v3958, 32
    %v4690 = vpop.permute.xlu0 %4689
    %4691 = vrot.lane.b32.xlu0 %v3860, 32
    %v4692 = vpop.permute.xlu0 %4691
    %4693 = vrot.lane.b32.xlu0 %v3959, 32
    %v4694 = vpop.permute.xlu0 %4693
    %4695 = vrot.lane.b32.xlu0 %v3862, 32
    %v4696 = vpop.permute.xlu0 %4695
    %4697 = vrot.lane.b32.xlu0 %v3960, 32
    %v4698 = vpop.permute.xlu0 %4697
    %4699 = vrot.lane.b32.xlu0 %v3864, 32
    %v4700 = vpop.permute.xlu0 %4699
    %4701 = vrot.lane.b32.xlu0 %v3961, 32
    %v4702 = vpop.permute.xlu0 %4701
    %4703 = vrot.lane.b32.xlu0 %v3866, 32
    %v4704 = vpop.permute.xlu0 %4703
    %4705 = vrot.lane.b32.xlu0 %v3962, 32
    %v4706 = vpop.permute.xlu0 %4705
    %4771 = vrot.lane.b32.xlu0 %v3771, 64
    %v4772 = vpop.permute.xlu0 %4771
    %4773 = vrot.lane.b32.xlu0 %v3615, 64
    %v4774 = vpop.permute.xlu0 %4773
    %4775 = vrot.lane.b32.xlu0 %v3773, 64
    %v4776 = vpop.permute.xlu0 %4775
    %4777 = vrot.lane.b32.xlu0 %v3621, 64
    %v4778 = vpop.permute.xlu0 %4777
    %4779 = vrot.lane.b32.xlu0 %v3774, 64
    %v4780 = vpop.permute.xlu0 %4779
    %4781 = vrot.lane.b32.xlu0 %v3624, 64
    %v4782 = vpop.permute.xlu0 %4781
    %4783 = vrot.lane.b32.xlu0 %v3775, 64
    %v4784 = vpop.permute.xlu0 %4783
    %4785 = vrot.lane.b32.xlu0 %v3627, 64
    %v4786 = vpop.permute.xlu0 %4785
    %4787 = vrot.lane.b32.xlu0 %v3776, 64
    %v4788 = vpop.permute.xlu0 %4787
    %4789 = vrot.lane.b32.xlu0 %v3630, 64
    %v4790 = vpop.permute.xlu0 %4789
    %4791 = vrot.lane.b32.xlu0 %v3777, 64
    %v4792 = vpop.permute.xlu0 %4791
    %4793 = vrot.lane.b32.xlu0 %v3633, 64
    %v4794 = vpop.permute.xlu0 %4793
    %4795 = vrot.lane.b32.xlu0 %v3778, 64
    %v4796 = vpop.permute.xlu0 %4795
    %4797 = vrot.lane.b32.xlu0 %v3636, 64
    %v4798 = vpop.permute.xlu0 %4797
    %4799 = vrot.lane.b32.xlu0 %v3779, 64
    %v4800 = vpop.permute.xlu0 %4799
    %4801 = vrot.lane.b32.xlu0 %v3639, 64
    %v4802 = vpop.permute.xlu0 %4801
    %4803 = vrot.lane.b32.xlu0 %v3780, 64
    %v4804 = vpop.permute.xlu0 %4803
    %4805 = vrot.lane.b32.xlu0 %v3642, 64
    %v4806 = vpop.permute.xlu0 %4805
    %4807 = vrot.lane.b32.xlu0 %v3781, 64
    %v4808 = vpop.permute.xlu0 %4807
    %4809 = vrot.lane.b32.xlu0 %v3645, 64
    %v4810 = vpop.permute.xlu0 %4809
    %4811 = vrot.lane.b32.xlu0 %v3782, 64
    %v4812 = vpop.permute.xlu0 %4811
    %4813 = vrot.lane.b32.xlu0 %v3648, 64
    %v4814 = vpop.permute.xlu0 %4813
    %4815 = vrot.lane.b32.xlu0 %v3783, 64
    %v4816 = vpop.permute.xlu0 %4815
    %4817 = vrot.lane.b32.xlu0 %v3651, 64
    %v4818 = vpop.permute.xlu0 %4817
    %4819 = vrot.lane.b32.xlu0 %v3784, 64
    %v4820 = vpop.permute.xlu0 %4819
    %4821 = vrot.lane.b32.xlu0 %v3654, 64
    %v4822 = vpop.permute.xlu0 %4821
    %4823 = vrot.lane.b32.xlu0 %v3785, 64
    %v4824 = vpop.permute.xlu0 %4823
    %4825 = vrot.lane.b32.xlu0 %v3657, 64
    %v4826 = vpop.permute.xlu0 %4825
    %4827 = vrot.lane.b32.xlu0 %v3786, 64
    %v4828 = vpop.permute.xlu0 %4827
    %4829 = vrot.lane.b32.xlu0 %v3660, 64
    %v4830 = vpop.permute.xlu0 %4829
    %4831 = vrot.lane.b32.xlu0 %v3787, 64
    %v4832 = vpop.permute.xlu0 %4831
    %4833 = vrot.lane.b32.xlu0 %v3663, 64
    %v4834 = vpop.permute.xlu0 %4833
    %4835 = vrot.lane.b32.xlu0 %v3789, 64
    %v4836 = vpop.permute.xlu0 %4835
    %4837 = vrot.lane.b32.xlu0 %v3669, 64
    %v4838 = vpop.permute.xlu0 %4837
    %4839 = vrot.lane.b32.xlu0 %v3790, 64
    %v4840 = vpop.permute.xlu0 %4839
    %4841 = vrot.lane.b32.xlu0 %v3672, 64
    %v4842 = vpop.permute.xlu0 %4841
    %4843 = vrot.lane.b32.xlu0 %v3791, 64
    %v4844 = vpop.permute.xlu0 %4843
    %4845 = vrot.lane.b32.xlu0 %v3675, 64
    %v4846 = vpop.permute.xlu0 %4845
    %4847 = vrot.lane.b32.xlu0 %v3792, 64
    %v4848 = vpop.permute.xlu0 %4847
    %4849 = vrot.lane.b32.xlu0 %v3678, 64
    %v4850 = vpop.permute.xlu0 %4849
    %4851 = vrot.lane.b32.xlu0 %v3793, 64
    %v4852 = vpop.permute.xlu0 %4851
    %4853 = vrot.lane.b32.xlu0 %v3681, 64
    %v4854 = vpop.permute.xlu0 %4853
    %4855 = vrot.lane.b32.xlu0 %v3794, 64
    %v4856 = vpop.permute.xlu0 %4855
    %4857 = vrot.lane.b32.xlu0 %v3684, 64
    %v4858 = vpop.permute.xlu0 %4857
    %4859 = vrot.lane.b32.xlu0 %v3795, 64
    %v4860 = vpop.permute.xlu0 %4859
    %4861 = vrot.lane.b32.xlu0 %v3687, 64
    %v4862 = vpop.permute.xlu0 %4861
    %4863 = vrot.lane.b32.xlu0 %v3796, 64
    %v4864 = vpop.permute.xlu0 %4863
    %4865 = vrot.lane.b32.xlu0 %v3690, 64
    %v4866 = vpop.permute.xlu0 %4865
    %4867 = vrot.lane.b32.xlu0 %v3797, 64
    %v4868 = vpop.permute.xlu0 %4867
    %4869 = vrot.lane.b32.xlu0 %v3693, 64
    %v4870 = vpop.permute.xlu0 %4869
    %4871 = vrot.lane.b32.xlu0 %v3798, 64
    %v4872 = vpop.permute.xlu0 %4871
    %4873 = vrot.lane.b32.xlu0 %v3696, 64
    %v4874 = vpop.permute.xlu0 %4873
    %4875 = vrot.lane.b32.xlu0 %v3799, 64
    %v4876 = vpop.permute.xlu0 %4875
    %4877 = vrot.lane.b32.xlu0 %v3699, 64
    %v4878 = vpop.permute.xlu0 %4877
    %4879 = vrot.lane.b32.xlu0 %v3800, 64
    %v4880 = vpop.permute.xlu0 %4879
    %4881 = vrot.lane.b32.xlu0 %v3702, 64
    %v4882 = vpop.permute.xlu0 %4881
    %4883 = vrot.lane.b32.xlu0 %v3801, 64
    %v4884 = vpop.permute.xlu0 %4883
    %4885 = vrot.lane.b32.xlu0 %v3705, 64
    %v4886 = vpop.permute.xlu0 %4885
    %4887 = vrot.lane.b32.xlu0 %v3802, 64
    %v4888 = vpop.permute.xlu0 %4887
    %4889 = vrot.lane.b32.xlu0 %v3708, 64
    %v4890 = vpop.permute.xlu0 %4889
    %4951 = vrot.lane.b32.xlu0 %v3387, 96
    %v4952 = vpop.permute.xlu0 %4951
    %4953 = vrot.lane.b32.xlu0 %v3388, 96
    %v4954 = vpop.permute.xlu0 %4953
    %4955 = vrot.lane.b32.xlu0 %v3389, 96
    %v4956 = vpop.permute.xlu0 %4955
    %4957 = vrot.lane.b32.xlu0 %v3390, 96
    %v4958 = vpop.permute.xlu0 %4957
    %4959 = vrot.lane.b32.xlu0 %v3391, 96
    %v4960 = vpop.permute.xlu0 %4959
    %4961 = vrot.lane.b32.xlu0 %v3392, 96
    %v4962 = vpop.permute.xlu0 %4961
    %4963 = vrot.lane.b32.xlu0 %v3393, 96
    %v4964 = vpop.permute.xlu0 %4963
    %4965 = vrot.lane.b32.xlu0 %v3394, 96
    %v4966 = vpop.permute.xlu0 %4965
    %4967 = vrot.lane.b32.xlu0 %v3395, 96
    %v4968 = vpop.permute.xlu0 %4967
    %4969 = vrot.lane.b32.xlu0 %v3396, 96
    %v4970 = vpop.permute.xlu0 %4969
    %4971 = vrot.lane.b32.xlu0 %v3397, 96
    %v4972 = vpop.permute.xlu0 %4971
    %4973 = vrot.lane.b32.xlu0 %v3398, 96
    %v4974 = vpop.permute.xlu0 %4973
    %4975 = vrot.lane.b32.xlu0 %v3399, 96
    %v4976 = vpop.permute.xlu0 %4975
    %4977 = vrot.lane.b32.xlu0 %v3400, 96
    %v4978 = vpop.permute.xlu0 %4977
    %4979 = vrot.lane.b32.xlu0 %v3401, 96
    %v4980 = vpop.permute.xlu0 %4979
    %4981 = vrot.lane.b32.xlu0 %v3402, 96
    %v4982 = vpop.permute.xlu0 %4981
    %4983 = vrot.lane.b32.xlu0 %v3403, 96
    %v4984 = vpop.permute.xlu0 %4983
    %4985 = vrot.lane.b32.xlu0 %v3404, 96
    %v4986 = vpop.permute.xlu0 %4985
    %4987 = vrot.lane.b32.xlu0 %v3405, 96
    %v4988 = vpop.permute.xlu0 %4987
    %4989 = vrot.lane.b32.xlu0 %v3406, 96
    %v4990 = vpop.permute.xlu0 %4989
    %4991 = vrot.lane.b32.xlu0 %v3407, 96
    %v4992 = vpop.permute.xlu0 %4991
    %4993 = vrot.lane.b32.xlu0 %v3408, 96
    %v4994 = vpop.permute.xlu0 %4993
    %4995 = vrot.lane.b32.xlu0 %v3409, 96
    %v4996 = vpop.permute.xlu0 %4995
    %4997 = vrot.lane.b32.xlu0 %v3410, 96
    %v4998 = vpop.permute.xlu0 %4997
    %4999 = vrot.lane.b32.xlu0 %v3411, 96
    %v5000 = vpop.permute.xlu0 %4999
    %5001 = vrot.lane.b32.xlu0 %v3412, 96
    %v5002 = vpop.permute.xlu0 %5001
    %5003 = vrot.lane.b32.xlu0 %v3413, 96
    %v5004 = vpop.permute.xlu0 %5003
    %5005 = vrot.lane.b32.xlu0 %v3414, 96
    %v5006 = vpop.permute.xlu0 %5005
    %5007 = vrot.lane.b32.xlu0 %v3415, 96
    %v5008 = vpop.permute.xlu0 %5007
    %5009 = vrot.lane.b32.xlu0 %v3416, 96
    %v5010 = vpop.permute.xlu0 %5009
    %5011 = vrot.lane.b32.xlu0 %v3419, 96
    %v5012 = vpop.permute.xlu0 %5011
    %5013 = vrot.lane.b32.xlu0 %v3420, 96
    %v5014 = vpop.permute.xlu0 %5013
    %5015 = vrot.lane.b32.xlu0 %v3421, 96
    %v5016 = vpop.permute.xlu0 %5015
    %5017 = vrot.lane.b32.xlu0 %v3422, 96
    %v5018 = vpop.permute.xlu0 %5017
    %5019 = vrot.lane.b32.xlu0 %v3423, 96
    %v5020 = vpop.permute.xlu0 %5019
    %5021 = vrot.lane.b32.xlu0 %v3424, 96
    %v5022 = vpop.permute.xlu0 %5021
    %5023 = vrot.lane.b32.xlu0 %v3425, 96
    %v5024 = vpop.permute.xlu0 %5023
    %5025 = vrot.lane.b32.xlu0 %v3426, 96
    %v5026 = vpop.permute.xlu0 %5025
    %5027 = vrot.lane.b32.xlu0 %v3427, 96
    %v5028 = vpop.permute.xlu0 %5027
    %5029 = vrot.lane.b32.xlu0 %v3428, 96
    %v5030 = vpop.permute.xlu0 %5029
    %5031 = vrot.lane.b32.xlu0 %v3429, 96
    %v5032 = vpop.permute.xlu0 %5031
    %5033 = vrot.lane.b32.xlu0 %v3430, 96
    %v5034 = vpop.permute.xlu0 %5033
    %5035 = vrot.lane.b32.xlu0 %v3431, 96
    %v5036 = vpop.permute.xlu0 %5035
    %5037 = vrot.lane.b32.xlu0 %v3432, 96
    %v5038 = vpop.permute.xlu0 %5037
    %5039 = vrot.lane.b32.xlu0 %v3433, 96
    %v5040 = vpop.permute.xlu0 %5039
    %5041 = vrot.lane.b32.xlu0 %v3434, 96
    %v5042 = vpop.permute.xlu0 %5041
    %5043 = vrot.lane.b32.xlu0 %v3435, 96
    %v5044 = vpop.permute.xlu0 %5043
    %5045 = vrot.lane.b32.xlu0 %v3436, 96
    %v5046 = vpop.permute.xlu0 %5045
    %5047 = vrot.lane.b32.xlu0 %v3437, 96
    %v5048 = vpop.permute.xlu0 %5047
    %5049 = vrot.lane.b32.xlu0 %v3438, 96
    %v5050 = vpop.permute.xlu0 %5049
    %5051 = vrot.lane.b32.xlu0 %v3439, 96
    %v5052 = vpop.permute.xlu0 %5051
    %5053 = vrot.lane.b32.xlu0 %v3440, 96
    %v5054 = vpop.permute.xlu0 %5053
    %5055 = vrot.lane.b32.xlu0 %v3441, 96
    %v5056 = vpop.permute.xlu0 %5055
    %5057 = vrot.lane.b32.xlu0 %v3442, 96
    %v5058 = vpop.permute.xlu0 %5057
    %5059 = vrot.lane.b32.xlu0 %v3443, 96
    %v5060 = vpop.permute.xlu0 %5059
    %5061 = vrot.lane.b32.xlu0 %v3444, 96
    %v5062 = vpop.permute.xlu0 %5061
    %5063 = vrot.lane.b32.xlu0 %v3445, 96
    %v5064 = vpop.permute.xlu0 %5063
    %5065 = vrot.lane.b32.xlu0 %v3446, 96
    %v5066 = vpop.permute.xlu0 %5065
    %5067 = vrot.lane.b32.xlu0 %v3447, 96
    %v5068 = vpop.permute.xlu0 %5067
    %5069 = vrot.lane.b32.xlu0 %v3448, 96
    %v5070 = vpop.permute.xlu0 %5069
    %v5131 = vsel %vm1775, %v3771, %v3964
    %v5132 = vsel %vm1775, %v3615, %v3966
    %v5133 = vsel %vm1775, %v3772, %v3968
    %v5134 = vsel %vm1775, %v3618, %v3970
    %v5135 = vsel %vm1775, %v3773, %v3972
    %v5136 = vsel %vm1775, %v3621, %v3974
    %v5137 = vsel %vm1775, %v3774, %v3976
    %v5138 = vsel %vm1775, %v3624, %v3978
    %v5139 = vsel %vm1775, %v3775, %v3980
    %v5140 = vsel %vm1775, %v3627, %v3982
    %v5141 = vsel %vm1775, %v3776, %v3984
    %v5142 = vsel %vm1775, %v3630, %v3986
    %v5143 = vsel %vm1775, %v3777, %v3988
    %v5144 = vsel %vm1775, %v3633, %v3990
    %v5145 = vsel %vm1775, %v3778, %v3992
    %v5146 = vsel %vm1775, %v3636, %v3994
    %v5147 = vsel %vm1775, %v3779, %v3996
    %v5148 = vsel %vm1775, %v3639, %v3998
    %v5149 = vsel %vm1775, %v3780, %v4000
    %v5150 = vsel %vm1775, %v3642, %v4002
    %v5151 = vsel %vm1775, %v3781, %v4004
    %v5152 = vsel %vm1775, %v3645, %v4006
    %v5153 = vsel %vm1775, %v3782, %v4008
    %v5154 = vsel %vm1775, %v3648, %v4010
    %v5155 = vsel %vm1775, %v3783, %v4012
    %v5156 = vsel %vm1775, %v3651, %v4014
    %v5157 = vsel %vm1775, %v3784, %v4016
    %v5158 = vsel %vm1775, %v3654, %v4018
    %v5159 = vsel %vm1775, %v3785, %v4020
    %v5160 = vsel %vm1775, %v3657, %v4022
    %v5161 = vsel %vm1775, %v3787, %v4024
    %v5162 = vsel %vm1775, %v3663, %v4026
    %v5163 = vsel %vm1775, %v3788, %v4028
    %v5164 = vsel %vm1775, %v3666, %v4030
    %v5165 = vsel %vm1775, %v3789, %v4032
    %v5166 = vsel %vm1775, %v3669, %v4034
    %v5167 = vsel %vm1775, %v3790, %v4036
    %v5168 = vsel %vm1775, %v3672, %v4038
    %v5169 = vsel %vm1775, %v3791, %v4040
    %v5170 = vsel %vm1775, %v3675, %v4042
    %v5171 = vsel %vm1775, %v3792, %v4044
    %v5172 = vsel %vm1775, %v3678, %v4046
    %v5173 = vsel %vm1775, %v3793, %v4048
    %v5174 = vsel %vm1775, %v3681, %v4050
    %v5175 = vsel %vm1775, %v3794, %v4052
    %v5176 = vsel %vm1775, %v3684, %v4054
    %v5177 = vsel %vm1775, %v3795, %v4056
    %v5178 = vsel %vm1775, %v3687, %v4058
    %v5179 = vsel %vm1775, %v3796, %v4060
    %v5180 = vsel %vm1775, %v3690, %v4062
    %v5181 = vsel %vm1775, %v3797, %v4064
    %v5182 = vsel %vm1775, %v3693, %v4066
    %v5183 = vsel %vm1775, %v3798, %v4068
    %v5184 = vsel %vm1775, %v3696, %v4070
    %v5185 = vsel %vm1775, %v3799, %v4072
    %v5186 = vsel %vm1775, %v3699, %v4074
    %v5187 = vsel %vm1775, %v3800, %v4076
    %v5188 = vsel %vm1775, %v3702, %v4078
    %v5189 = vsel %vm1775, %v3801, %v4080
    %v5190 = vsel %vm1775, %v3705, %v4082
    %v5191 = vsel %vm1836, %v5131, %v4174
    %v5192 = vsel %vm1836, %v5132, %v4176
    %v5193 = vsel %vm1836, %v5133, %v4178
    %v5194 = vsel %vm1836, %v5134, %v4180
    %v5195 = vsel %vm1836, %v5135, %v4182
    %v5196 = vsel %vm1836, %v5136, %v4184
    %v5197 = vsel %vm1836, %v5137, %v4186
    %v5198 = vsel %vm1836, %v5138, %v4188
    %v5199 = vsel %vm1836, %v5139, %v4190
    %v5200 = vsel %vm1836, %v5140, %v4192
    %v5201 = vsel %vm1836, %v5141, %v4194
    %v5202 = vsel %vm1836, %v5142, %v4196
    %v5203 = vsel %vm1836, %v5143, %v4198
    %v5204 = vsel %vm1836, %v5144, %v4200
    %v5205 = vsel %vm1836, %v5145, %v4202
    %v5206 = vsel %vm1836, %v5146, %v4204
    %v5207 = vsel %vm1836, %v5147, %v4206
    %v5208 = vsel %vm1836, %v5148, %v4208
    %v5209 = vsel %vm1836, %v5149, %v4210
    %v5210 = vsel %vm1836, %v5150, %v4212
    %v5211 = vsel %vm1836, %v5151, %v4214
    %v5212 = vsel %vm1836, %v5152, %v4216
    %v5213 = vsel %vm1836, %v5153, %v4218
    %v5214 = vsel %vm1836, %v5154, %v4220
    %v5215 = vsel %vm1836, %v5155, %v4222
    %v5216 = vsel %vm1836, %v5156, %v4224
    %v5217 = vsel %vm1836, %v5157, %v4226
    %v5218 = vsel %vm1836, %v5158, %v4228
    %v5219 = vsel %vm1836, %v5159, %v4230
    %v5220 = vsel %vm1836, %v5160, %v4232
    %v5221 = vsel %vm1836, %v5161, %v4234
    %v5222 = vsel %vm1836, %v5162, %v4236
    %v5223 = vsel %vm1836, %v5163, %v4238
    %v5224 = vsel %vm1836, %v5164, %v4240
    %v5225 = vsel %vm1836, %v5165, %v4242
    %v5226 = vsel %vm1836, %v5166, %v4244
    %v5227 = vsel %vm1836, %v5167, %v4246
    %v5228 = vsel %vm1836, %v5168, %v4248
    %v5229 = vsel %vm1836, %v5169, %v4250
    %v5230 = vsel %vm1836, %v5170, %v4252
    %v5231 = vsel %vm1836, %v5171, %v4254
    %v5232 = vsel %vm1836, %v5172, %v4256
    %v5233 = vsel %vm1836, %v5173, %v4258
    %v5234 = vsel %vm1836, %v5174, %v4260
    %v5235 = vsel %vm1836, %v5175, %v4262
    %v5236 = vsel %vm1836, %v5176, %v4264
    %v5237 = vsel %vm1836, %v5177, %v4266
    %v5238 = vsel %vm1836, %v5178, %v4268
    %v5239 = vsel %vm1836, %v5179, %v4270
    %v5240 = vsel %vm1836, %v5180, %v4272
    %v5241 = vsel %vm1836, %v5181, %v4274
    %v5242 = vsel %vm1836, %v5182, %v4276
    %v5243 = vsel %vm1836, %v5183, %v4278
    %v5244 = vsel %vm1836, %v5184, %v4280
    %v5245 = vsel %vm1836, %v5185, %v4282
    %v5246 = vsel %vm1836, %v5186, %v4284
    %v5247 = vsel %vm1836, %v5187, %v4286
    %v5248 = vsel %vm1836, %v5188, %v4288
    %v5249 = vsel %vm1836, %v5189, %v4290
    %v5250 = vsel %vm1836, %v5190, %v4292
    %v5251 = vsel %vm1897, %v5191, %v4386
    %v5252 = vsel %vm1897, %v5192, %v4388
    %v5253 = vsel %vm1897, %v5193, %v4390
    %v5254 = vsel %vm1897, %v5194, %v4392
    %v5255 = vsel %vm1897, %v5191, %v4394
    %v5256 = vsel %vm1897, %v5192, %v4396
    %v5257 = vsel %vm1897, %v5195, %v4398
    %v5258 = vsel %vm1897, %v5196, %v4400
    %v5259 = vsel %vm1897, %v5197, %v4402
    %v5260 = vsel %vm1897, %v5198, %v4404
    %v5261 = vsel %vm1897, %v5199, %v4406
    %v5262 = vsel %vm1897, %v5200, %v4408
    %v5263 = vsel %vm1897, %v5201, %v4410
    %v5264 = vsel %vm1897, %v5202, %v4412
    %v5265 = vsel %vm1897, %v5203, %v4414
    %v5266 = vsel %vm1897, %v5204, %v4416
    %v5267 = vsel %vm1897, %v5205, %v4418
    %v5268 = vsel %vm1897, %v5206, %v4420
    %v5269 = vsel %vm1897, %v5207, %v4422
    %v5270 = vsel %vm1897, %v5208, %v4424
    %v5271 = vsel %vm1897, %v5209, %v4426
    %v5272 = vsel %vm1897, %v5210, %v4428
    %v5273 = vsel %vm1897, %v5211, %v4430
    %v5274 = vsel %vm1897, %v5212, %v4432
    %v5275 = vsel %vm1897, %v5213, %v4434
    %v5276 = vsel %vm1897, %v5214, %v4436
    %v5277 = vsel %vm1897, %v5215, %v4438
    %v5278 = vsel %vm1897, %v5216, %v4440
    %v5279 = vsel %vm1897, %v5217, %v4442
    %v5280 = vsel %vm1897, %v5218, %v4444
    %v5281 = vsel %vm1897, %v5219, %v4446
    %v5282 = vsel %vm1897, %v5220, %v4448
    %v5283 = vsel %vm1897, %v5221, %v4450
    %v5284 = vsel %vm1897, %v5222, %v4452
    %v5285 = vsel %vm1897, %v5223, %v4454
    %v5286 = vsel %vm1897, %v5224, %v4456
    %v5287 = vsel %vm1897, %v5221, %v4458
    %v5288 = vsel %vm1897, %v5222, %v4460
    %v5289 = vsel %vm1897, %v5225, %v4462
    %v5290 = vsel %vm1897, %v5226, %v4464
    %v5291 = vsel %vm1897, %v5227, %v4466
    %v5292 = vsel %vm1897, %v5228, %v4468
    %v5293 = vsel %vm1897, %v5229, %v4470
    %v5294 = vsel %vm1897, %v5230, %v4472
    %v5295 = vsel %vm1897, %v5231, %v4474
    %v5296 = vsel %vm1897, %v5232, %v4476
    %v5297 = vsel %vm1897, %v5233, %v4478
    %v5298 = vsel %vm1897, %v5234, %v4480
    %v5299 = vsel %vm1897, %v5235, %v4482
    %v5300 = vsel %vm1897, %v5236, %v4484
    %v5301 = vsel %vm1897, %v5237, %v4486
    %v5302 = vsel %vm1897, %v5238, %v4488
    %v5303 = vsel %vm1897, %v5239, %v4490
    %v5304 = vsel %vm1897, %v5240, %v4492
    %v5305 = vsel %vm1897, %v5241, %v4494
    %v5306 = vsel %vm1897, %v5242, %v4496
    %v5307 = vsel %vm1897, %v5243, %v4498
    %v5308 = vsel %vm1897, %v5244, %v4500
    %v5309 = vsel %vm1897, %v5245, %v4502
    %v5310 = vsel %vm1897, %v5246, %v4504
    %v5311 = vsel %vm1897, %v5247, %v4506
    %v5312 = vsel %vm1897, %v5248, %v4508
    %v5313 = vsel %vm1897, %v5249, %v4510
    %v5314 = vsel %vm1897, %v5250, %v4512
    %v5315 = vsel %vm1775, %v3385, %v4580
    %v5316 = vsel %vm1775, %v3386, %v4582
    %v5317 = vsel %vm1775, %v3387, %v4584
    %v5318 = vsel %vm1775, %v3388, %v4586
    %v5319 = vsel %vm1775, %v3389, %v4588
    %v5320 = vsel %vm1775, %v3390, %v4590
    %v5321 = vsel %vm1775, %v3391, %v4592
    %v5322 = vsel %vm1775, %v3392, %v4594
    %v5323 = vsel %vm1775, %v3393, %v4596
    %v5324 = vsel %vm1775, %v3394, %v4598
    %v5325 = vsel %vm1775, %v3395, %v4600
    %v5326 = vsel %vm1775, %v3396, %v4602
    %v5327 = vsel %vm1775, %v3397, %v4604
    %v5328 = vsel %vm1775, %v3398, %v4606
    %v5329 = vsel %vm1775, %v3399, %v4608
    %v5330 = vsel %vm1775, %v3400, %v4610
    %v5331 = vsel %vm1775, %v3401, %v4612
    %v5332 = vsel %vm1775, %v3402, %v4614
    %v5333 = vsel %vm1775, %v3403, %v4616
    %v5334 = vsel %vm1775, %v3404, %v4618
    %v5335 = vsel %vm1775, %v3405, %v4620
    %v5336 = vsel %vm1775, %v3406, %v4622
    %v5337 = vsel %vm1775, %v3407, %v4624
    %v5338 = vsel %vm1775, %v3408, %v4626
    %v5339 = vsel %vm1775, %v3409, %v4628
    %v5340 = vsel %vm1775, %v3410, %v4630
    %v5341 = vsel %vm1775, %v3411, %v4632
    %v5342 = vsel %vm1775, %v3412, %v4634
    %v5343 = vsel %vm1775, %v3413, %v4636
    %v5344 = vsel %vm1775, %v3414, %v4638
    %v5345 = vsel %vm1775, %v3415, %v4640
    %v5346 = vsel %vm1775, %v3416, %v4642
    %v5347 = vsel %vm1775, %v3417, %v4644
    %v5348 = vsel %vm1775, %v3418, %v4646
    %v5349 = vsel %vm1775, %v3419, %v4648
    %v5350 = vsel %vm1775, %v3420, %v4650
    %v5351 = vsel %vm1775, %v3421, %v4652
    %v5352 = vsel %vm1775, %v3422, %v4654
    %v5353 = vsel %vm1775, %v3423, %v4656
    %v5354 = vsel %vm1775, %v3424, %v4658
    %v5355 = vsel %vm1775, %v3425, %v4660
    %v5356 = vsel %vm1775, %v3426, %v4662
    %v5357 = vsel %vm1775, %v3427, %v4664
    %v5358 = vsel %vm1775, %v3428, %v4666
    %v5359 = vsel %vm1775, %v3429, %v4668
    %v5360 = vsel %vm1775, %v3430, %v4670
    %v5361 = vsel %vm1775, %v3431, %v4672
    %v5362 = vsel %vm1775, %v3432, %v4674
    %v5363 = vsel %vm1775, %v3433, %v4676
    %v5364 = vsel %vm1775, %v3434, %v4678
    %v5365 = vsel %vm1775, %v3435, %v4680
    %v5366 = vsel %vm1775, %v3436, %v4682
    %v5367 = vsel %vm1775, %v3437, %v4684
    %v5368 = vsel %vm1775, %v3438, %v4686
    %v5369 = vsel %vm1775, %v3439, %v4688
    %v5370 = vsel %vm1775, %v3440, %v4690
    %v5371 = vsel %vm1775, %v3441, %v4692
    %v5372 = vsel %vm1775, %v3442, %v4694
    %v5373 = vsel %vm1775, %v3443, %v4696
    %v5374 = vsel %vm1775, %v3444, %v4698
    %v5375 = vsel %vm1775, %v3445, %v4700
    %v5376 = vsel %vm1775, %v3446, %v4702
    %v5377 = vsel %vm1775, %v3447, %v4704
    %v5378 = vsel %vm1775, %v3448, %v4706
    %v5379 = vsel %vm1836, %v5315, %v4772
    %v5380 = vsel %vm1836, %v5316, %v4774
    %v5381 = vsel %vm1836, %v5317, %v4776
    %v5382 = vsel %vm1836, %v5318, %v4778
    %v5383 = vsel %vm1836, %v5319, %v4780
    %v5384 = vsel %vm1836, %v5320, %v4782
    %v5385 = vsel %vm1836, %v5321, %v4784
    %v5386 = vsel %vm1836, %v5322, %v4786
    %v5387 = vsel %vm1836, %v5323, %v4788
    %v5388 = vsel %vm1836, %v5324, %v4790
    %v5389 = vsel %vm1836, %v5325, %v4792
    %v5390 = vsel %vm1836, %v5326, %v4794
    %v5391 = vsel %vm1836, %v5327, %v4796
    %v5392 = vsel %vm1836, %v5328, %v4798
    %v5393 = vsel %vm1836, %v5329, %v4800
    %v5394 = vsel %vm1836, %v5330, %v4802
    %v5395 = vsel %vm1836, %v5331, %v4804
    %v5396 = vsel %vm1836, %v5332, %v4806
    %v5397 = vsel %vm1836, %v5333, %v4808
    %v5398 = vsel %vm1836, %v5334, %v4810
    %v5399 = vsel %vm1836, %v5335, %v4812
    %v5400 = vsel %vm1836, %v5336, %v4814
    %v5401 = vsel %vm1836, %v5337, %v4816
    %v5402 = vsel %vm1836, %v5338, %v4818
    %v5403 = vsel %vm1836, %v5339, %v4820
    %v5404 = vsel %vm1836, %v5340, %v4822
    %v5405 = vsel %vm1836, %v5341, %v4824
    %v5406 = vsel %vm1836, %v5342, %v4826
    %v5407 = vsel %vm1836, %v5343, %v4828
    %v5408 = vsel %vm1836, %v5344, %v4830
    %v5409 = vsel %vm1836, %v5345, %v4824
    %v5410 = vsel %vm1836, %v5346, %v4826
    %v5411 = vsel %vm1836, %v5347, %v4832
    %v5412 = vsel %vm1836, %v5348, %v4834
    %v5413 = vsel %vm1836, %v5349, %v4836
    %v5414 = vsel %vm1836, %v5350, %v4838
    %v5415 = vsel %vm1836, %v5351, %v4840
    %v5416 = vsel %vm1836, %v5352, %v4842
    %v5417 = vsel %vm1836, %v5353, %v4844
    %v5418 = vsel %vm1836, %v5354, %v4846
    %v5419 = vsel %vm1836, %v5355, %v4848
    %v5420 = vsel %vm1836, %v5356, %v4850
    %v5421 = vsel %vm1836, %v5357, %v4852
    %v5422 = vsel %vm1836, %v5358, %v4854
    %v5423 = vsel %vm1836, %v5359, %v4856
    %v5424 = vsel %vm1836, %v5360, %v4858
    %v5425 = vsel %vm1836, %v5361, %v4860
    %v5426 = vsel %vm1836, %v5362, %v4862
    %v5427 = vsel %vm1836, %v5363, %v4864
    %v5428 = vsel %vm1836, %v5364, %v4866
    %v5429 = vsel %vm1836, %v5365, %v4868
    %v5430 = vsel %vm1836, %v5366, %v4870
    %v5431 = vsel %vm1836, %v5367, %v4872
    %v5432 = vsel %vm1836, %v5368, %v4874
    %v5433 = vsel %vm1836, %v5369, %v4876
    %v5434 = vsel %vm1836, %v5370, %v4878
    %v5435 = vsel %vm1836, %v5371, %v4880
    %v5436 = vsel %vm1836, %v5372, %v4882
    %v5437 = vsel %vm1836, %v5373, %v4884
    %v5438 = vsel %vm1836, %v5374, %v4886
    %v5439 = vsel %vm1836, %v5375, %v4888
    %v5440 = vsel %vm1836, %v5376, %v4890
    %v5441 = vsel %vm1836, %v5377, %v4884
    %v5442 = vsel %vm1836, %v5378, %v4886
    %v5443 = vsel %vm1897, %v5379, %v4952
    %v5444 = vsel %vm1897, %v5380, %v4954
    %v5445 = vsel %vm1897, %v5381, %v4956
    %v5446 = vsel %vm1897, %v5382, %v4958
    %v5447 = vsel %vm1897, %v5383, %v4960
    %v5448 = vsel %vm1897, %v5384, %v4962
    %v5449 = vsel %vm1897, %v5385, %v4964
    %v5450 = vsel %vm1897, %v5386, %v4966
    %v5451 = vsel %vm1897, %v5387, %v4968
    %v5452 = vsel %vm1897, %v5388, %v4970
    %v5453 = vsel %vm1897, %v5389, %v4972
    %v5454 = vsel %vm1897, %v5390, %v4974
    %v5455 = vsel %vm1897, %v5391, %v4976
    %v5456 = vsel %vm1897, %v5392, %v4978
    %v5457 = vsel %vm1897, %v5393, %v4980
    %v5458 = vsel %vm1897, %v5394, %v4982
    %v5459 = vsel %vm1897, %v5395, %v4984
    %v5460 = vsel %vm1897, %v5396, %v4986
    %v5461 = vsel %vm1897, %v5397, %v4988
    %v5462 = vsel %vm1897, %v5398, %v4990
    %v5463 = vsel %vm1897, %v5399, %v4992
    %v5464 = vsel %vm1897, %v5400, %v4994
    %v5465 = vsel %vm1897, %v5401, %v4996
    %v5466 = vsel %vm1897, %v5402, %v4998
    %v5467 = vsel %vm1897, %v5403, %v5000
    %v5468 = vsel %vm1897, %v5404, %v5002
    %v5469 = vsel %vm1897, %v5405, %v5004
    %v5470 = vsel %vm1897, %v5406, %v5006
    %v5471 = vsel %vm1897, %v5407, %v5008
    %v5472 = vsel %vm1897, %v5408, %v5010
    %v5473 = vsel %vm1897, %v5409, %v5004
    %v5474 = vsel %vm1897, %v5410, %v5006
    %v5475 = vsel %vm1897, %v5411, %v5012
    %v5476 = vsel %vm1897, %v5412, %v5014
    %v5477 = vsel %vm1897, %v5413, %v5016
    %v5478 = vsel %vm1897, %v5414, %v5018
    %v5479 = vsel %vm1897, %v5415, %v5020
    %v5480 = vsel %vm1897, %v5416, %v5022
    %v5481 = vsel %vm1897, %v5417, %v5024
    %v5482 = vsel %vm1897, %v5418, %v5026
    %v5483 = vsel %vm1897, %v5419, %v5028
    %v5484 = vsel %vm1897, %v5420, %v5030
    %v5485 = vsel %vm1897, %v5421, %v5032
    %v5486 = vsel %vm1897, %v5422, %v5034
    %v5487 = vsel %vm1897, %v5423, %v5036
    %v5488 = vsel %vm1897, %v5424, %v5038
    %v5489 = vsel %vm1897, %v5425, %v5040
    %v5490 = vsel %vm1897, %v5426, %v5042
    %v5491 = vsel %vm1897, %v5427, %v5044
    %v5492 = vsel %vm1897, %v5428, %v5046
    %v5493 = vsel %vm1897, %v5429, %v5048
    %v5494 = vsel %vm1897, %v5430, %v5050
    %v5495 = vsel %vm1897, %v5431, %v5052
    %v5496 = vsel %vm1897, %v5432, %v5054
    %v5497 = vsel %vm1897, %v5433, %v5056
    %v5498 = vsel %vm1897, %v5434, %v5058
    %v5499 = vsel %vm1897, %v5435, %v5060
    %v5500 = vsel %vm1897, %v5436, %v5062
    %v5501 = vsel %vm1897, %v5437, %v5064
    %v5502 = vsel %vm1897, %v5438, %v5066
    %v5503 = vsel %vm1897, %v5439, %v5068
    %v5504 = vsel %vm1897, %v5440, %v5070
    %v5505 = vsel %vm1897, %v5441, %v5064
    %v5506 = vsel %vm1897, %v5442, %v5066
    %v5507 = vsel %vm1775, %v3804, 0
    %v5509 = vsel %vm1775, %v3931, 0
    %v5511 = vsel %vm1775, %v3808, 0
    %v5513 = vsel %vm1775, %v3933, 0
    %v5515 = vsel %vm1775, %v3810, 0
    %v5517 = vsel %vm1775, %v3934, 0
    %v5519 = vsel %vm1775, %v3812, 0
    %v5521 = vsel %vm1775, %v3935, 0
    %v5523 = vsel %vm1775, %v3814, 0
    %v5525 = vsel %vm1775, %v3936, 0
    %v5527 = vsel %vm1775, %v3816, 0
    %v5529 = vsel %vm1775, %v3937, 0
    %v5531 = vsel %vm1775, %v3818, 0
    %v5533 = vsel %vm1775, %v3938, 0
    %v5535 = vsel %vm1775, %v3820, 0
    %v5537 = vsel %vm1775, %v3939, 0
    %v5539 = vsel %vm1775, %v3822, 0
    %v5541 = vsel %vm1775, %v3940, 0
    %v5543 = vsel %vm1775, %v3824, 0
    %v5545 = vsel %vm1775, %v3941, 0
    %v5547 = vsel %vm1775, %v3826, 0
    %v5549 = vsel %vm1775, %v3942, 0
    %v5551 = vsel %vm1775, %v3828, 0
    %v5553 = vsel %vm1775, %v3943, 0
    %v5555 = vsel %vm1775, %v3830, 0
    %v5557 = vsel %vm1775, %v3944, 0
    %v5559 = vsel %vm1775, %v3832, 0
    %v5561 = vsel %vm1775, %v3945, 0
    %v5563 = vsel %vm1775, %v3834, 0
    %v5565 = vsel %vm1775, %v3946, 0
    %v5567 = vsel %vm1775, %v3836, 0
    %v5569 = vsel %vm1775, %v3947, 0
    %v5571 = vsel %vm1775, %v3840, 0
    %v5573 = vsel %vm1775, %v3949, 0
    %v5575 = vsel %vm1775, %v3842, 0
    %v5577 = vsel %vm1775, %v3950, 0
    %v5579 = vsel %vm1775, %v3844, 0
    %v5581 = vsel %vm1775, %v3951, 0
    %v5583 = vsel %vm1775, %v3846, 0
    %v5585 = vsel %vm1775, %v3952, 0
    %v5587 = vsel %vm1775, %v3848, 0
    %v5589 = vsel %vm1775, %v3953, 0
    %v5591 = vsel %vm1775, %v3850, 0
    %v5593 = vsel %vm1775, %v3954, 0
    %v5595 = vsel %vm1775, %v3852, 0
    %v5597 = vsel %vm1775, %v3955, 0
    %v5599 = vsel %vm1775, %v3854, 0
    %v5601 = vsel %vm1775, %v3956, 0
    %v5603 = vsel %vm1775, %v3856, 0
    %v5605 = vsel %vm1775, %v3957, 0
    %v5607 = vsel %vm1775, %v3858, 0
    %v5609 = vsel %vm1775, %v3958, 0
    %v5611 = vsel %vm1775, %v3860, 0
    %v5613 = vsel %vm1775, %v3959, 0
    %v5615 = vsel %vm1775, %v3862, 0
    %v5617 = vsel %vm1775, %v3960, 0
    %v5619 = vsel %vm1775, %v3864, 0
    %v5621 = vsel %vm1775, %v3961, 0
    %v5623 = vsel %vm1775, %v3866, 0
    %v5625 = vsel %vm1775, %v3962, 0
    %5627 = vmatpush.msra.mxu0 %v3464
    %5628 = vmatpush.msra.mxu0 %v3463
    %5629 = vmatpush.msra.mxu0 %v3462
    %5630 = vmatpush.msra.mxu0 %v3461
    %5631 = vmatpush.msra.mxu0 %v3460
    %5632 = vmatpush.msra.mxu0 %v3459
    %5633 = vmatpush.msra.mxu0 %v3458
    %5634 = vmatpush.msra.mxu0 %v3457
    %5635 = vmatpush.msra.mxu0 %v3456
    %5636 = vmatpush.msra.mxu0 %v3455
    %5637 = vmatpush.msra.mxu0 %v3454
    %5638 = vmatpush.msra.mxu0 %v3453
    %5639 = vmatpush.msra.mxu0 %v3452
    %5640 = vmatpush.msra.mxu0 %v3451
    %5641 = vmatpush.msra.mxu0 %v3450
    %5642 = vmatpush.msra.mxu0 %v3449
    %5643 = vmatmul.f32.gmra.mxu0 %v5251
    %v5644 = vpop.f32.mrf.mxu0
    %v5645 = vadd.f32 0.0, %v5644
    %5646 = vmatmul.f32.gmra.mxu0 %v5252
    %v5647 = vpop.f32.mrf.mxu0
    %v5648 = vadd.f32 0.0, %v5647
    %5649 = vmatmul.f32.gmra.mxu0 %v5253
    %v5650 = vpop.f32.mrf.mxu0
    %v5651 = vadd.f32 0.0, %v5650
    %5652 = vmatmul.f32.gmra.mxu0 %v5254
    %v5653 = vpop.f32.mrf.mxu0
    %v5654 = vadd.f32 0.0, %v5653
    %5655 = vmatmul.f32.gmra.mxu0 %v5255
    %v5656 = vpop.f32.mrf.mxu0
    %v5657 = vadd.f32 0.0, %v5656
    %5658 = vmatmul.f32.gmra.mxu0 %v5256
    %v5659 = vpop.f32.mrf.mxu0
    %v5660 = vadd.f32 0.0, %v5659
    %5661 = vmatmul.f32.gmra.mxu0 %v5257
    %v5662 = vpop.f32.mrf.mxu0
    %v5663 = vadd.f32 0.0, %v5662
    %5664 = vmatmul.f32.gmra.mxu0 %v5258
    %v5665 = vpop.f32.mrf.mxu0
    %v5666 = vadd.f32 0.0, %v5665
    %5667 = vmatmul.f32.gmra.mxu0 %v5259
    %v5668 = vpop.f32.mrf.mxu0
    %v5669 = vadd.f32 0.0, %v5668
    %5670 = vmatmul.f32.gmra.mxu0 %v5260
    %v5671 = vpop.f32.mrf.mxu0
    %v5672 = vadd.f32 0.0, %v5671
    %5673 = vmatmul.f32.gmra.mxu0 %v5261
    %v5674 = vpop.f32.mrf.mxu0
    %v5675 = vadd.f32 0.0, %v5674
    %5676 = vmatmul.f32.gmra.mxu0 %v5262
    %v5677 = vpop.f32.mrf.mxu0
    %v5678 = vadd.f32 0.0, %v5677
    %5679 = vmatmul.f32.gmra.mxu0 %v5263
    %v5680 = vpop.f32.mrf.mxu0
    %v5681 = vadd.f32 0.0, %v5680
    %5682 = vmatmul.f32.gmra.mxu0 %v5264
    %v5683 = vpop.f32.mrf.mxu0
    %v5684 = vadd.f32 0.0, %v5683
    %5685 = vmatmul.f32.gmra.mxu0 %v5265
    %v5686 = vpop.f32.mrf.mxu0
    %v5687 = vadd.f32 0.0, %v5686
    %5688 = vmatmul.f32.gmra.mxu0 %v5266
    %v5689 = vpop.f32.mrf.mxu0
    %v5690 = vadd.f32 0.0, %v5689
    %5691 = vmatmul.f32.gmra.mxu0 %v5267
    %v5692 = vpop.f32.mrf.mxu0
    %v5693 = vadd.f32 0.0, %v5692
    %5694 = vmatmul.f32.gmra.mxu0 %v5268
    %v5695 = vpop.f32.mrf.mxu0
    %v5696 = vadd.f32 0.0, %v5695
    %5697 = vmatmul.f32.gmra.mxu0 %v5269
    %v5698 = vpop.f32.mrf.mxu0
    %v5699 = vadd.f32 0.0, %v5698
    %5700 = vmatmul.f32.gmra.mxu0 %v5270
    %v5701 = vpop.f32.mrf.mxu0
    %v5702 = vadd.f32 0.0, %v5701
    %5703 = vmatmul.f32.gmra.mxu0 %v5271
    %v5704 = vpop.f32.mrf.mxu0
    %v5705 = vadd.f32 0.0, %v5704
    %5706 = vmatmul.f32.gmra.mxu0 %v5272
    %v5707 = vpop.f32.mrf.mxu0
    %v5708 = vadd.f32 0.0, %v5707
    %5709 = vmatmul.f32.gmra.mxu0 %v5273
    %v5710 = vpop.f32.mrf.mxu0
    %v5711 = vadd.f32 0.0, %v5710
    %5712 = vmatmul.f32.gmra.mxu0 %v5274
    %v5713 = vpop.f32.mrf.mxu0
    %v5714 = vadd.f32 0.0, %v5713
    %5715 = vmatmul.f32.gmra.mxu0 %v5275
    %v5716 = vpop.f32.mrf.mxu0
    %v5717 = vadd.f32 0.0, %v5716
    %5718 = vmatmul.f32.gmra.mxu0 %v5276
    %v5719 = vpop.f32.mrf.mxu0
    %v5720 = vadd.f32 0.0, %v5719
    %5721 = vmatmul.f32.gmra.mxu0 %v5277
    %v5722 = vpop.f32.mrf.mxu0
    %v5723 = vadd.f32 0.0, %v5722
    %5724 = vmatmul.f32.gmra.mxu0 %v5278
    %v5725 = vpop.f32.mrf.mxu0
    %v5726 = vadd.f32 0.0, %v5725
    %5727 = vmatmul.f32.gmra.mxu0 %v5279
    %v5728 = vpop.f32.mrf.mxu0
    %v5729 = vadd.f32 0.0, %v5728
    %5730 = vmatmul.f32.gmra.mxu0 %v5280
    %v5731 = vpop.f32.mrf.mxu0
    %v5732 = vadd.f32 0.0, %v5731
    %5733 = vmatmul.f32.gmra.mxu0 %v5281
    %v5734 = vpop.f32.mrf.mxu0
    %v5735 = vadd.f32 0.0, %v5734
    %5736 = vmatmul.f32.gmra.mxu0 %v5282
    %v5737 = vpop.f32.mrf.mxu0
    %v5738 = vadd.f32 0.0, %v5737
    %5739 = vmatmul.f32.gmra.mxu0 %v5283
    %v5740 = vpop.f32.mrf.mxu0
    %v5741 = vadd.f32 0.0, %v5740
    %5742 = vmatmul.f32.gmra.mxu0 %v5284
    %v5743 = vpop.f32.mrf.mxu0
    %v5744 = vadd.f32 0.0, %v5743
    %5745 = vmatmul.f32.gmra.mxu0 %v5285
    %v5746 = vpop.f32.mrf.mxu0
    %v5747 = vadd.f32 0.0, %v5746
    %5748 = vmatmul.f32.gmra.mxu0 %v5286
    %v5749 = vpop.f32.mrf.mxu0
    %v5750 = vadd.f32 0.0, %v5749
    %5751 = vmatmul.f32.gmra.mxu0 %v5287
    %v5752 = vpop.f32.mrf.mxu0
    %v5753 = vadd.f32 0.0, %v5752
    %5754 = vmatmul.f32.gmra.mxu0 %v5288
    %v5755 = vpop.f32.mrf.mxu0
    %v5756 = vadd.f32 0.0, %v5755
    %5757 = vmatmul.f32.gmra.mxu0 %v5289
    %v5758 = vpop.f32.mrf.mxu0
    %v5759 = vadd.f32 0.0, %v5758
    %5760 = vmatmul.f32.gmra.mxu0 %v5290
    %v5761 = vpop.f32.mrf.mxu0
    %v5762 = vadd.f32 0.0, %v5761
    %5763 = vmatmul.f32.gmra.mxu0 %v5291
    %v5764 = vpop.f32.mrf.mxu0
    %v5765 = vadd.f32 0.0, %v5764
    %5766 = vmatmul.f32.gmra.mxu0 %v5292
    %v5767 = vpop.f32.mrf.mxu0
    %v5768 = vadd.f32 0.0, %v5767
    %5769 = vmatmul.f32.gmra.mxu0 %v5293
    %v5770 = vpop.f32.mrf.mxu0
    %v5771 = vadd.f32 0.0, %v5770
    %5772 = vmatmul.f32.gmra.mxu0 %v5294
    %v5773 = vpop.f32.mrf.mxu0
    %v5774 = vadd.f32 0.0, %v5773
    %5775 = vmatmul.f32.gmra.mxu0 %v5295
    %v5776 = vpop.f32.mrf.mxu0
    %v5777 = vadd.f32 0.0, %v5776
    %5778 = vmatmul.f32.gmra.mxu0 %v5296
    %v5779 = vpop.f32.mrf.mxu0
    %v5780 = vadd.f32 0.0, %v5779
    %5781 = vmatmul.f32.gmra.mxu0 %v5297
    %v5782 = vpop.f32.mrf.mxu0
    %v5783 = vadd.f32 0.0, %v5782
    %5784 = vmatmul.f32.gmra.mxu0 %v5298
    %v5785 = vpop.f32.mrf.mxu0
    %v5786 = vadd.f32 0.0, %v5785
    %5787 = vmatmul.f32.gmra.mxu0 %v5299
    %v5788 = vpop.f32.mrf.mxu0
    %v5789 = vadd.f32 0.0, %v5788
    %5790 = vmatmul.f32.gmra.mxu0 %v5300
    %v5791 = vpop.f32.mrf.mxu0
    %v5792 = vadd.f32 0.0, %v5791
    %5793 = vmatmul.f32.gmra.mxu0 %v5301
    %v5794 = vpop.f32.mrf.mxu0
    %v5795 = vadd.f32 0.0, %v5794
    %5796 = vmatmul.f32.gmra.mxu0 %v5302
    %v5797 = vpop.f32.mrf.mxu0
    %v5798 = vadd.f32 0.0, %v5797
    %5799 = vmatmul.f32.gmra.mxu0 %v5303
    %v5800 = vpop.f32.mrf.mxu0
    %v5801 = vadd.f32 0.0, %v5800
    %5802 = vmatmul.f32.gmra.mxu0 %v5304
    %v5803 = vpop.f32.mrf.mxu0
    %v5804 = vadd.f32 0.0, %v5803
    %5805 = vmatmul.f32.gmra.mxu0 %v5305
    %v5806 = vpop.f32.mrf.mxu0
    %v5807 = vadd.f32 0.0, %v5806
    %5808 = vmatmul.f32.gmra.mxu0 %v5306
    %v5809 = vpop.f32.mrf.mxu0
    %v5810 = vadd.f32 0.0, %v5809
    %5811 = vmatmul.f32.gmra.mxu0 %v5307
    %v5812 = vpop.f32.mrf.mxu0
    %v5813 = vadd.f32 0.0, %v5812
    %5814 = vmatmul.f32.gmra.mxu0 %v5308
    %v5815 = vpop.f32.mrf.mxu0
    %v5816 = vadd.f32 0.0, %v5815
    %5817 = vmatmul.f32.gmra.mxu0 %v5309
    %v5818 = vpop.f32.mrf.mxu0
    %v5819 = vadd.f32 0.0, %v5818
    %5820 = vmatmul.f32.gmra.mxu0 %v5310
    %v5821 = vpop.f32.mrf.mxu0
    %v5822 = vadd.f32 0.0, %v5821
    %5823 = vmatmul.f32.gmra.mxu0 %v5311
    %v5824 = vpop.f32.mrf.mxu0
    %v5825 = vadd.f32 0.0, %v5824
    %5826 = vmatmul.f32.gmra.mxu0 %v5312
    %v5827 = vpop.f32.mrf.mxu0
    %v5828 = vadd.f32 0.0, %v5827
    %5829 = vmatmul.f32.gmra.mxu0 %v5313
    %v5830 = vpop.f32.mrf.mxu0
    %v5831 = vadd.f32 0.0, %v5830
    %5832 = vmatmul.f32.gmra.mxu0 %v5314
    %v5833 = vpop.f32.mrf.mxu0
    %v5834 = vadd.f32 0.0, %v5833
    %5835 = vdwg.mxu0
    %5836 = vmatpush.msra.mxu0 %v3480
    %5837 = vmatpush.msra.mxu0 %v3479
    %5838 = vmatpush.msra.mxu0 %v3478
    %5839 = vmatpush.msra.mxu0 %v3477
    %5840 = vmatpush.msra.mxu0 %v3476
    %5841 = vmatpush.msra.mxu0 %v3475
    %5842 = vmatpush.msra.mxu0 %v3474
    %5843 = vmatpush.msra.mxu0 %v3473
    %5844 = vmatpush.msra.mxu0 %v3472
    %5845 = vmatpush.msra.mxu0 %v3471
    %5846 = vmatpush.msra.mxu0 %v3470
    %5847 = vmatpush.msra.mxu0 %v3469
    %5848 = vmatpush.msra.mxu0 %v3468
    %5849 = vmatpush.msra.mxu0 %v3467
    %5850 = vmatpush.msra.mxu0 %v3466
    %5851 = vmatpush.msra.mxu0 %v3465
    %5852 = vmatmul.f32.gmra.mxu0 %v5443
    %v5853 = vpop.f32.mrf.mxu0
    %v5854 = vadd.f32 %v5645, %v5853
    %5855 = vmatmul.f32.gmra.mxu0 %v5444
    %v5856 = vpop.f32.mrf.mxu0
    %v5857 = vadd.f32 %v5648, %v5856
    %5858 = vmatmul.f32.gmra.mxu0 %v5445
    %v5859 = vpop.f32.mrf.mxu0
    %v5860 = vadd.f32 %v5651, %v5859
    %5861 = vmatmul.f32.gmra.mxu0 %v5446
    %v5862 = vpop.f32.mrf.mxu0
    %v5863 = vadd.f32 %v5654, %v5862
    %5864 = vmatmul.f32.gmra.mxu0 %v5447
    %v5865 = vpop.f32.mrf.mxu0
    %v5866 = vadd.f32 %v5657, %v5865
    %5867 = vmatmul.f32.gmra.mxu0 %v5448
    %v5868 = vpop.f32.mrf.mxu0
    %v5869 = vadd.f32 %v5660, %v5868
    %5870 = vmatmul.f32.gmra.mxu0 %v5449
    %v5871 = vpop.f32.mrf.mxu0
    %v5872 = vadd.f32 %v5663, %v5871
    %5873 = vmatmul.f32.gmra.mxu0 %v5450
    %v5874 = vpop.f32.mrf.mxu0
    %v5875 = vadd.f32 %v5666, %v5874
    %5876 = vmatmul.f32.gmra.mxu0 %v5451
    %v5877 = vpop.f32.mrf.mxu0
    %v5878 = vadd.f32 %v5669, %v5877
    %5879 = vmatmul.f32.gmra.mxu0 %v5452
    %v5880 = vpop.f32.mrf.mxu0
    %v5881 = vadd.f32 %v5672, %v5880
    %5882 = vmatmul.f32.gmra.mxu0 %v5453
    %v5883 = vpop.f32.mrf.mxu0
    %v5884 = vadd.f32 %v5675, %v5883
    %5885 = vmatmul.f32.gmra.mxu0 %v5454
    %v5886 = vpop.f32.mrf.mxu0
    %v5887 = vadd.f32 %v5678, %v5886
    %5888 = vmatmul.f32.gmra.mxu0 %v5455
    %v5889 = vpop.f32.mrf.mxu0
    %v5890 = vadd.f32 %v5681, %v5889
    %5891 = vmatmul.f32.gmra.mxu0 %v5456
    %v5892 = vpop.f32.mrf.mxu0
    %v5893 = vadd.f32 %v5684, %v5892
    %5894 = vmatmul.f32.gmra.mxu0 %v5457
    %v5895 = vpop.f32.mrf.mxu0
    %v5896 = vadd.f32 %v5687, %v5895
    %5897 = vmatmul.f32.gmra.mxu0 %v5458
    %v5898 = vpop.f32.mrf.mxu0
    %v5899 = vadd.f32 %v5690, %v5898
    %5900 = vmatmul.f32.gmra.mxu0 %v5459
    %v5901 = vpop.f32.mrf.mxu0
    %v5902 = vadd.f32 %v5693, %v5901
    %5903 = vmatmul.f32.gmra.mxu0 %v5460
    %v5904 = vpop.f32.mrf.mxu0
    %v5905 = vadd.f32 %v5696, %v5904
    %5906 = vmatmul.f32.gmra.mxu0 %v5461
    %v5907 = vpop.f32.mrf.mxu0
    %v5908 = vadd.f32 %v5699, %v5907
    %5909 = vmatmul.f32.gmra.mxu0 %v5462
    %v5910 = vpop.f32.mrf.mxu0
    %v5911 = vadd.f32 %v5702, %v5910
    %5912 = vmatmul.f32.gmra.mxu0 %v5463
    %v5913 = vpop.f32.mrf.mxu0
    %v5914 = vadd.f32 %v5705, %v5913
    %5915 = vmatmul.f32.gmra.mxu0 %v5464
    %v5916 = vpop.f32.mrf.mxu0
    %v5917 = vadd.f32 %v5708, %v5916
    %5918 = vmatmul.f32.gmra.mxu0 %v5465
    %v5919 = vpop.f32.mrf.mxu0
    %v5920 = vadd.f32 %v5711, %v5919
    %5921 = vmatmul.f32.gmra.mxu0 %v5466
    %v5922 = vpop.f32.mrf.mxu0
    %v5923 = vadd.f32 %v5714, %v5922
    %5924 = vmatmul.f32.gmra.mxu0 %v5467
    %v5925 = vpop.f32.mrf.mxu0
    %v5926 = vadd.f32 %v5717, %v5925
    %5927 = vmatmul.f32.gmra.mxu0 %v5468
    %v5928 = vpop.f32.mrf.mxu0
    %v5929 = vadd.f32 %v5720, %v5928
    %5930 = vmatmul.f32.gmra.mxu0 %v5469
    %v5931 = vpop.f32.mrf.mxu0
    %v5932 = vadd.f32 %v5723, %v5931
    %5933 = vmatmul.f32.gmra.mxu0 %v5470
    %v5934 = vpop.f32.mrf.mxu0
    %v5935 = vadd.f32 %v5726, %v5934
    %5936 = vmatmul.f32.gmra.mxu0 %v5471
    %v5937 = vpop.f32.mrf.mxu0
    %v5938 = vadd.f32 %v5729, %v5937
    %5939 = vmatmul.f32.gmra.mxu0 %v5472
    %v5940 = vpop.f32.mrf.mxu0
    %v5941 = vadd.f32 %v5732, %v5940
    %5942 = vmatmul.f32.gmra.mxu0 %v5473
    %v5943 = vpop.f32.mrf.mxu0
    %v5944 = vadd.f32 %v5735, %v5943
    %5945 = vmatmul.f32.gmra.mxu0 %v5474
    %v5946 = vpop.f32.mrf.mxu0
    %v5947 = vadd.f32 %v5738, %v5946
    %5948 = vmatmul.f32.gmra.mxu0 %v5475
    %v5949 = vpop.f32.mrf.mxu0
    %v5950 = vadd.f32 %v5741, %v5949
    %5951 = vmatmul.f32.gmra.mxu0 %v5476
    %v5952 = vpop.f32.mrf.mxu0
    %v5953 = vadd.f32 %v5744, %v5952
    %5954 = vmatmul.f32.gmra.mxu0 %v5477
    %v5955 = vpop.f32.mrf.mxu0
    %v5956 = vadd.f32 %v5747, %v5955
    %5957 = vmatmul.f32.gmra.mxu0 %v5478
    %v5958 = vpop.f32.mrf.mxu0
    %v5959 = vadd.f32 %v5750, %v5958
    %5960 = vmatmul.f32.gmra.mxu0 %v5479
    %v5961 = vpop.f32.mrf.mxu0
    %v5962 = vadd.f32 %v5753, %v5961
    %5963 = vmatmul.f32.gmra.mxu0 %v5480
    %v5964 = vpop.f32.mrf.mxu0
    %v5965 = vadd.f32 %v5756, %v5964
    %5966 = vmatmul.f32.gmra.mxu0 %v5481
    %v5967 = vpop.f32.mrf.mxu0
    %v5968 = vadd.f32 %v5759, %v5967
    %5969 = vmatmul.f32.gmra.mxu0 %v5482
    %v5970 = vpop.f32.mrf.mxu0
    %v5971 = vadd.f32 %v5762, %v5970
    %5972 = vmatmul.f32.gmra.mxu0 %v5483
    %v5973 = vpop.f32.mrf.mxu0
    %v5974 = vadd.f32 %v5765, %v5973
    %5975 = vmatmul.f32.gmra.mxu0 %v5484
    %v5976 = vpop.f32.mrf.mxu0
    %v5977 = vadd.f32 %v5768, %v5976
    %5978 = vmatmul.f32.gmra.mxu0 %v5485
    %v5979 = vpop.f32.mrf.mxu0
    %v5980 = vadd.f32 %v5771, %v5979
    %5981 = vmatmul.f32.gmra.mxu0 %v5486
    %v5982 = vpop.f32.mrf.mxu0
    %v5983 = vadd.f32 %v5774, %v5982
    %5984 = vmatmul.f32.gmra.mxu0 %v5487
    %v5985 = vpop.f32.mrf.mxu0
    %v5986 = vadd.f32 %v5777, %v5985
    %5987 = vmatmul.f32.gmra.mxu0 %v5488
    %v5988 = vpop.f32.mrf.mxu0
    %v5989 = vadd.f32 %v5780, %v5988
    %5990 = vmatmul.f32.gmra.mxu0 %v5489
    %v5991 = vpop.f32.mrf.mxu0
    %v5992 = vadd.f32 %v5783, %v5991
    %5993 = vmatmul.f32.gmra.mxu0 %v5490
    %v5994 = vpop.f32.mrf.mxu0
    %v5995 = vadd.f32 %v5786, %v5994
    %5996 = vmatmul.f32.gmra.mxu0 %v5491
    %v5997 = vpop.f32.mrf.mxu0
    %v5998 = vadd.f32 %v5789, %v5997
    %5999 = vmatmul.f32.gmra.mxu0 %v5492
    %v6000 = vpop.f32.mrf.mxu0
    %v6001 = vadd.f32 %v5792, %v6000
    %6002 = vmatmul.f32.gmra.mxu0 %v5493
    %v6003 = vpop.f32.mrf.mxu0
    %v6004 = vadd.f32 %v5795, %v6003
    %6005 = vmatmul.f32.gmra.mxu0 %v5494
    %v6006 = vpop.f32.mrf.mxu0
    %v6007 = vadd.f32 %v5798, %v6006
    %6008 = vmatmul.f32.gmra.mxu0 %v5495
    %v6009 = vpop.f32.mrf.mxu0
    %v6010 = vadd.f32 %v5801, %v6009
    %6011 = vmatmul.f32.gmra.mxu0 %v5496
    %v6012 = vpop.f32.mrf.mxu0
    %v6013 = vadd.f32 %v5804, %v6012
    %6014 = vmatmul.f32.gmra.mxu0 %v5497
    %v6015 = vpop.f32.mrf.mxu0
    %v6016 = vadd.f32 %v5807, %v6015
    %6017 = vmatmul.f32.gmra.mxu0 %v5498
    %v6018 = vpop.f32.mrf.mxu0
    %v6019 = vadd.f32 %v5810, %v6018
    %6020 = vmatmul.f32.gmra.mxu0 %v5499
    %v6021 = vpop.f32.mrf.mxu0
    %v6022 = vadd.f32 %v5813, %v6021
    %6023 = vmatmul.f32.gmra.mxu0 %v5500
    %v6024 = vpop.f32.mrf.mxu0
    %v6025 = vadd.f32 %v5816, %v6024
    %6026 = vmatmul.f32.gmra.mxu0 %v5501
    %v6027 = vpop.f32.mrf.mxu0
    %v6028 = vadd.f32 %v5819, %v6027
    %6029 = vmatmul.f32.gmra.mxu0 %v5502
    %v6030 = vpop.f32.mrf.mxu0
    %v6031 = vadd.f32 %v5822, %v6030
    %6032 = vmatmul.f32.gmra.mxu0 %v5503
    %v6033 = vpop.f32.mrf.mxu0
    %v6034 = vadd.f32 %v5825, %v6033
    %6035 = vmatmul.f32.gmra.mxu0 %v5504
    %v6036 = vpop.f32.mrf.mxu0
    %v6037 = vadd.f32 %v5828, %v6036
    %6038 = vmatmul.f32.gmra.mxu0 %v5505
    %v6039 = vpop.f32.mrf.mxu0
    %v6040 = vadd.f32 %v5831, %v6039
    %6041 = vmatmul.f32.gmra.mxu0 %v5506
    %v6042 = vpop.f32.mrf.mxu0
    %v6043 = vadd.f32 %v5834, %v6042
    %6044 = vdwg.mxu0
    %6045 = vmatpush.msra.mxu0 0.0
    %6046 = vmatpush.msra.mxu0 0.0
    %6047 = vmatpush.msra.mxu0 0.0
    %6048 = vmatpush.msra.mxu0 0.0
    %6049 = vmatpush.msra.mxu0 0.0
    %6050 = vmatpush.msra.mxu0 0.0
    %6051 = vmatpush.msra.mxu0 0.0
    %6052 = vmatpush.msra.mxu0 0.0
    %6053 = vmatpush.msra.mxu0 0.0
    %6054 = vmatpush.msra.mxu0 0.0
    %6055 = vmatpush.msra.mxu0 0.0
    %6056 = vmatpush.msra.mxu0 0.0
    %6057 = vmatpush.msra.mxu0 %v3484
    %6058 = vmatpush.msra.mxu0 %v3483
    %6059 = vmatpush.msra.mxu0 %v3482
    %6060 = vmatpush.msra.mxu0 %v3481
    %6061 = vmatmul.f32.gmra.mxu0 %v5507
    %v6062 = vpop.f32.mrf.mxu0
    %v6063 = vadd.f32 %v5854, %v6062
    %6064 = vmatmul.f32.gmra.mxu0 %v5509
    %v6065 = vpop.f32.mrf.mxu0
    %v6066 = vadd.f32 %v5857, %v6065
    %6067 = vmatmul.f32.gmra.mxu0 %v5511
    %v6068 = vpop.f32.mrf.mxu0
    %v6069 = vadd.f32 %v5860, %v6068
    %6070 = vmatmul.f32.gmra.mxu0 %v5513
    %v6071 = vpop.f32.mrf.mxu0
    %v6072 = vadd.f32 %v5863, %v6071
    %6073 = vmatmul.f32.gmra.mxu0 %v5515
    %v6074 = vpop.f32.mrf.mxu0
    %v6075 = vadd.f32 %v5866, %v6074
    %6076 = vmatmul.f32.gmra.mxu0 %v5517
    %v6077 = vpop.f32.mrf.mxu0
    %v6078 = vadd.f32 %v5869, %v6077
    %6079 = vmatmul.f32.gmra.mxu0 %v5519
    %v6080 = vpop.f32.mrf.mxu0
    %v6081 = vadd.f32 %v5872, %v6080
    %6082 = vmatmul.f32.gmra.mxu0 %v5521
    %v6083 = vpop.f32.mrf.mxu0
    %v6084 = vadd.f32 %v5875, %v6083
    %6085 = vmatmul.f32.gmra.mxu0 %v5523
    %v6086 = vpop.f32.mrf.mxu0
    %v6087 = vadd.f32 %v5878, %v6086
    %6088 = vmatmul.f32.gmra.mxu0 %v5525
    %v6089 = vpop.f32.mrf.mxu0
    %v6090 = vadd.f32 %v5881, %v6089
    %6091 = vmatmul.f32.gmra.mxu0 %v5527
    %v6092 = vpop.f32.mrf.mxu0
    %v6093 = vadd.f32 %v5884, %v6092
    %6094 = vmatmul.f32.gmra.mxu0 %v5529
    %v6095 = vpop.f32.mrf.mxu0
    %v6096 = vadd.f32 %v5887, %v6095
    %6097 = vmatmul.f32.gmra.mxu0 %v5531
    %v6098 = vpop.f32.mrf.mxu0
    %v6099 = vadd.f32 %v5890, %v6098
    %6100 = vmatmul.f32.gmra.mxu0 %v5533
    %v6101 = vpop.f32.mrf.mxu0
    %v6102 = vadd.f32 %v5893, %v6101
    %6103 = vmatmul.f32.gmra.mxu0 %v5535
    %v6104 = vpop.f32.mrf.mxu0
    %v6105 = vadd.f32 %v5896, %v6104
    %6106 = vmatmul.f32.gmra.mxu0 %v5537
    %v6107 = vpop.f32.mrf.mxu0
    %v6108 = vadd.f32 %v5899, %v6107
    %6109 = vmatmul.f32.gmra.mxu0 %v5539
    %v6110 = vpop.f32.mrf.mxu0
    %v6111 = vadd.f32 %v5902, %v6110
    %6112 = vmatmul.f32.gmra.mxu0 %v5541
    %v6113 = vpop.f32.mrf.mxu0
    %v6114 = vadd.f32 %v5905, %v6113
    %6115 = vmatmul.f32.gmra.mxu0 %v5543
    %v6116 = vpop.f32.mrf.mxu0
    %v6117 = vadd.f32 %v5908, %v6116
    %6118 = vmatmul.f32.gmra.mxu0 %v5545
    %v6119 = vpop.f32.mrf.mxu0
    %v6120 = vadd.f32 %v5911, %v6119
    %6121 = vmatmul.f32.gmra.mxu0 %v5547
    %v6122 = vpop.f32.mrf.mxu0
    %v6123 = vadd.f32 %v5914, %v6122
    %6124 = vmatmul.f32.gmra.mxu0 %v5549
    %v6125 = vpop.f32.mrf.mxu0
    %v6126 = vadd.f32 %v5917, %v6125
    %6127 = vmatmul.f32.gmra.mxu0 %v5551
    %v6128 = vpop.f32.mrf.mxu0
    %v6129 = vadd.f32 %v5920, %v6128
    %6130 = vmatmul.f32.gmra.mxu0 %v5553
    %v6131 = vpop.f32.mrf.mxu0
    %v6132 = vadd.f32 %v5923, %v6131
    %6133 = vmatmul.f32.gmra.mxu0 %v5555
    %v6134 = vpop.f32.mrf.mxu0
    %v6135 = vadd.f32 %v5926, %v6134
    %6136 = vmatmul.f32.gmra.mxu0 %v5557
    %v6137 = vpop.f32.mrf.mxu0
    %v6138 = vadd.f32 %v5929, %v6137
    %6139 = vmatmul.f32.gmra.mxu0 %v5559
    %v6140 = vpop.f32.mrf.mxu0
    %v6141 = vadd.f32 %v5932, %v6140
    %6142 = vmatmul.f32.gmra.mxu0 %v5561
    %v6143 = vpop.f32.mrf.mxu0
    %v6144 = vadd.f32 %v5935, %v6143
    %6145 = vmatmul.f32.gmra.mxu0 %v5563
    %v6146 = vpop.f32.mrf.mxu0
    %v6147 = vadd.f32 %v5938, %v6146
    %6148 = vmatmul.f32.gmra.mxu0 %v5565
    %v6149 = vpop.f32.mrf.mxu0
    %v6150 = vadd.f32 %v5941, %v6149
    %6151 = vmatmul.f32.gmra.mxu0 %v5559
    %v6152 = vpop.f32.mrf.mxu0
    %v6153 = vadd.f32 %v5944, %v6152
    %6154 = vmatmul.f32.gmra.mxu0 %v5561
    %v6155 = vpop.f32.mrf.mxu0
    %v6156 = vadd.f32 %v5947, %v6155
    %6157 = vmatmul.f32.gmra.mxu0 %v5567
    %v6158 = vpop.f32.mrf.mxu0
    %v6159 = vadd.f32 %v5950, %v6158
    %6160 = vmatmul.f32.gmra.mxu0 %v5569
    %v6161 = vpop.f32.mrf.mxu0
    %v6162 = vadd.f32 %v5953, %v6161
    %6163 = vmatmul.f32.gmra.mxu0 %v5571
    %v6164 = vpop.f32.mrf.mxu0
    %v6165 = vadd.f32 %v5956, %v6164
    %6166 = vmatmul.f32.gmra.mxu0 %v5573
    %v6167 = vpop.f32.mrf.mxu0
    %v6168 = vadd.f32 %v5959, %v6167
    %6169 = vmatmul.f32.gmra.mxu0 %v5575
    %v6170 = vpop.f32.mrf.mxu0
    %v6171 = vadd.f32 %v5962, %v6170
    %6172 = vmatmul.f32.gmra.mxu0 %v5577
    %v6173 = vpop.f32.mrf.mxu0
    %v6174 = vadd.f32 %v5965, %v6173
    %6175 = vmatmul.f32.gmra.mxu0 %v5579
    %v6176 = vpop.f32.mrf.mxu0
    %v6177 = vadd.f32 %v5968, %v6176
    %6178 = vmatmul.f32.gmra.mxu0 %v5581
    %v6179 = vpop.f32.mrf.mxu0
    %v6180 = vadd.f32 %v5971, %v6179
    %6181 = vmatmul.f32.gmra.mxu0 %v5583
    %v6182 = vpop.f32.mrf.mxu0
    %v6183 = vadd.f32 %v5974, %v6182
    %6184 = vmatmul.f32.gmra.mxu0 %v5585
    %v6185 = vpop.f32.mrf.mxu0
    %v6186 = vadd.f32 %v5977, %v6185
    %6187 = vmatmul.f32.gmra.mxu0 %v5587
    %v6188 = vpop.f32.mrf.mxu0
    %v6189 = vadd.f32 %v5980, %v6188
    %6190 = vmatmul.f32.gmra.mxu0 %v5589
    %v6191 = vpop.f32.mrf.mxu0
    %v6192 = vadd.f32 %v5983, %v6191
    %6193 = vmatmul.f32.gmra.mxu0 %v5591
    %v6194 = vpop.f32.mrf.mxu0
    %v6195 = vadd.f32 %v5986, %v6194
    %6196 = vmatmul.f32.gmra.mxu0 %v5593
    %v6197 = vpop.f32.mrf.mxu0
    %v6198 = vadd.f32 %v5989, %v6197
    %6199 = vmatmul.f32.gmra.mxu0 %v5595
    %v6200 = vpop.f32.mrf.mxu0
    %v6201 = vadd.f32 %v5992, %v6200
    %6202 = vmatmul.f32.gmra.mxu0 %v5597
    %v6203 = vpop.f32.mrf.mxu0
    %v6204 = vadd.f32 %v5995, %v6203
    %6205 = vmatmul.f32.gmra.mxu0 %v5599
    %v6206 = vpop.f32.mrf.mxu0
    %v6207 = vadd.f32 %v5998, %v6206
    %6208 = vmatmul.f32.gmra.mxu0 %v5601
    %v6209 = vpop.f32.mrf.mxu0
    %v6210 = vadd.f32 %v6001, %v6209
    %6211 = vmatmul.f32.gmra.mxu0 %v5603
    %v6212 = vpop.f32.mrf.mxu0
    %v6213 = vadd.f32 %v6004, %v6212
    %6214 = vmatmul.f32.gmra.mxu0 %v5605
    %v6215 = vpop.f32.mrf.mxu0
    %v6216 = vadd.f32 %v6007, %v6215
    %6217 = vmatmul.f32.gmra.mxu0 %v5607
    %v6218 = vpop.f32.mrf.mxu0
    %v6219 = vadd.f32 %v6010, %v6218
    %6220 = vmatmul.f32.gmra.mxu0 %v5609
    %v6221 = vpop.f32.mrf.mxu0
    %v6222 = vadd.f32 %v6013, %v6221
    %6223 = vmatmul.f32.gmra.mxu0 %v5611
    %v6224 = vpop.f32.mrf.mxu0
    %v6225 = vadd.f32 %v6016, %v6224
    %6226 = vmatmul.f32.gmra.mxu0 %v5613
    %v6227 = vpop.f32.mrf.mxu0
    %v6228 = vadd.f32 %v6019, %v6227
    %6229 = vmatmul.f32.gmra.mxu0 %v5615
    %v6230 = vpop.f32.mrf.mxu0
    %v6231 = vadd.f32 %v6022, %v6230
    %6232 = vmatmul.f32.gmra.mxu0 %v5617
    %v6233 = vpop.f32.mrf.mxu0
    %v6234 = vadd.f32 %v6025, %v6233
    %6235 = vmatmul.f32.gmra.mxu0 %v5619
    %v6236 = vpop.f32.mrf.mxu0
    %v6237 = vadd.f32 %v6028, %v6236
    %6238 = vmatmul.f32.gmra.mxu0 %v5621
    %v6239 = vpop.f32.mrf.mxu0
    %v6240 = vadd.f32 %v6031, %v6239
    %6241 = vmatmul.f32.gmra.mxu0 %v5623
    %v6242 = vpop.f32.mrf.mxu0
    %v6243 = vadd.f32 %v6034, %v6242
    %6244 = vmatmul.f32.gmra.mxu0 %v5625
    %v6245 = vpop.f32.mrf.mxu0
    %v6246 = vadd.f32 %v6037, %v6245
    %6247 = vmatmul.f32.gmra.mxu0 %v5619
    %v6248 = vpop.f32.mrf.mxu0
    %v6249 = vadd.f32 %v6040, %v6248
    %6250 = vmatmul.f32.gmra.mxu0 %v5621
    %v6251 = vpop.f32.mrf.mxu0
    %v6252 = vadd.f32 %v6043, %v6251
    %6253 = vdwg.mxu0
    %v6254 = vld [vmem:[%s5] sm:$0x1]
    %v6255 = vld [vmem:[%s6] sm:$0x1]
    %v6256 = vsel %vm1775, %v6063, 0.0
    %v6257 = vsel %vm1775, %v6066, 0.0
    %v6258 = vadd.f32 %v6256, %v6257
    %v6259 = vsel %vm1775, %v6069, 0.0
    %v6260 = vadd.f32 %v6258, %v6259
    %v6261 = vsel %vm1775, %v6072, 0.0
    %v6262 = vadd.f32 %v6260, %v6261
    %v6263 = vsel %vm1775, %v6075, 0.0
    %v6264 = vadd.f32 %v6262, %v6263
    %v6265 = vsel %vm1775, %v6078, 0.0
    %v6266 = vadd.f32 %v6264, %v6265
    %v6267 = vsel %vm1775, %v6081, 0.0
    %v6268 = vadd.f32 %v6266, %v6267
    %v6269 = vsel %vm1775, %v6084, 0.0
    %v6270 = vadd.f32 %v6268, %v6269
    %v6271 = vsel %vm1775, %v6087, 0.0
    %v6272 = vadd.f32 %v6270, %v6271
    %v6273 = vsel %vm1775, %v6090, 0.0
    %v6274 = vadd.f32 %v6272, %v6273
    %v6275 = vsel %vm1775, %v6093, 0.0
    %v6276 = vadd.f32 %v6274, %v6275
    %v6277 = vsel %vm1775, %v6096, 0.0
    %v6278 = vadd.f32 %v6276, %v6277
    %v6279 = vsel %vm1775, %v6099, 0.0
    %v6280 = vadd.f32 %v6278, %v6279
    %v6281 = vsel %vm1775, %v6102, 0.0
    %v6282 = vadd.f32 %v6280, %v6281
    %v6283 = vsel %vm1775, %v6105, 0.0
    %v6284 = vadd.f32 %v6282, %v6283
    %v6285 = vsel %vm1775, %v6108, 0.0
    %v6286 = vadd.f32 %v6284, %v6285
    %v6287 = vsel %vm1775, %v6111, 0.0
    %v6288 = vadd.f32 %v6286, %v6287
    %v6289 = vsel %vm1775, %v6114, 0.0
    %v6290 = vadd.f32 %v6288, %v6289
    %v6291 = vsel %vm1775, %v6117, 0.0
    %v6292 = vadd.f32 %v6290, %v6291
    %v6293 = vsel %vm1775, %v6120, 0.0
    %v6294 = vadd.f32 %v6292, %v6293
    %v6295 = vsel %vm1775, %v6123, 0.0
    %v6296 = vadd.f32 %v6294, %v6295
    %v6297 = vsel %vm1775, %v6126, 0.0
    %v6298 = vadd.f32 %v6296, %v6297
    %v6299 = vsel %vm1775, %v6129, 0.0
    %v6300 = vadd.f32 %v6298, %v6299
    %v6301 = vsel %vm1775, %v6132, 0.0
    %v6302 = vadd.f32 %v6300, %v6301
    %v6303 = vsel %vm1775, %v6135, 0.0
    %v6304 = vadd.f32 %v6302, %v6303
    %v6305 = vsel %vm1775, %v6138, 0.0
    %v6306 = vadd.f32 %v6304, %v6305
    %v6307 = vsel %vm1775, %v6141, 0.0
    %v6308 = vadd.f32 %v6306, %v6307
    %v6309 = vsel %vm1775, %v6144, 0.0
    %v6310 = vadd.f32 %v6308, %v6309
    %v6311 = vsel %vm1775, %v6147, 0.0
    %v6312 = vadd.f32 %v6310, %v6311
    %v6313 = vsel %vm1775, %v6150, 0.0
    %v6314 = vadd.f32 %v6312, %v6313
    %v6315 = vsel %vm1775, %v6153, 0.0
    %v6316 = vadd.f32 %v6314, %v6315
    %v6317 = vsel %vm1775, %v6156, 0.0
    %v6318 = vadd.f32 %v6316, %v6317
    %v6319 = vsel %vm1775, %v6159, 0.0
    %v6320 = vadd.f32 %v6318, %v6319
    %v6321 = vsel %vm1775, %v6162, 0.0
    %v6322 = vadd.f32 %v6320, %v6321
    %v6323 = vsel %vm1775, %v6165, 0.0
    %v6324 = vadd.f32 %v6322, %v6323
    %v6325 = vsel %vm1775, %v6168, 0.0
    %v6326 = vadd.f32 %v6324, %v6325
    %v6327 = vsel %vm1775, %v6171, 0.0
    %v6328 = vadd.f32 %v6326, %v6327
    %v6329 = vsel %vm1775, %v6174, 0.0
    %v6330 = vadd.f32 %v6328, %v6329
    %v6331 = vsel %vm1775, %v6177, 0.0
    %v6332 = vadd.f32 %v6330, %v6331
    %v6333 = vsel %vm1775, %v6180, 0.0
    %v6334 = vadd.f32 %v6332, %v6333
    %v6335 = vsel %vm1775, %v6183, 0.0
    %v6336 = vadd.f32 %v6334, %v6335
    %v6337 = vsel %vm1775, %v6186, 0.0
    %v6338 = vadd.f32 %v6336, %v6337
    %v6339 = vsel %vm1775, %v6189, 0.0
    %v6340 = vadd.f32 %v6338, %v6339
    %v6341 = vsel %vm1775, %v6192, 0.0
    %v6342 = vadd.f32 %v6340, %v6341
    %v6343 = vsel %vm1775, %v6195, 0.0
    %v6344 = vadd.f32 %v6342, %v6343
    %v6345 = vsel %vm1775, %v6198, 0.0
    %v6346 = vadd.f32 %v6344, %v6345
    %v6347 = vsel %vm1775, %v6201, 0.0
    %v6348 = vadd.f32 %v6346, %v6347
    %v6349 = vsel %vm1775, %v6204, 0.0
    %v6350 = vadd.f32 %v6348, %v6349
    %v6351 = vsel %vm1775, %v6207, 0.0
    %v6352 = vadd.f32 %v6350, %v6351
    %v6353 = vsel %vm1775, %v6210, 0.0
    %v6354 = vadd.f32 %v6352, %v6353
    %v6355 = vsel %vm1775, %v6213, 0.0
    %v6356 = vadd.f32 %v6354, %v6355
    %v6357 = vsel %vm1775, %v6216, 0.0
    %v6358 = vadd.f32 %v6356, %v6357
    %v6359 = vsel %vm1775, %v6219, 0.0
    %v6360 = vadd.f32 %v6358, %v6359
    %v6361 = vsel %vm1775, %v6222, 0.0
    %v6362 = vadd.f32 %v6360, %v6361
    %v6363 = vsel %vm1775, %v6225, 0.0
    %v6364 = vadd.f32 %v6362, %v6363
    %v6365 = vsel %vm1775, %v6228, 0.0
    %v6366 = vadd.f32 %v6364, %v6365
    %v6367 = vsel %vm1775, %v6231, 0.0
    %v6368 = vadd.f32 %v6366, %v6367
    %v6369 = vsel %vm1775, %v6234, 0.0
    %v6370 = vadd.f32 %v6368, %v6369
    %v6371 = vsel %vm1775, %v6237, 0.0
    %v6372 = vadd.f32 %v6370, %v6371
    %v6373 = vsel %vm1775, %v6240, 0.0
    %v6374 = vadd.f32 %v6372, %v6373
    %v6375 = vsel %vm1775, %v6243, 0.0
    %v6376 = vadd.f32 %v6374, %v6375
    %v6377 = vsel %vm1775, %v6246, 0.0
    %v6378 = vadd.f32 %v6376, %v6377
    %v6379 = vsel %vm1775, %v6249, 0.0
    %v6380 = vadd.f32 %v6378, %v6379
    %v6381 = vsel %vm1775, %v6252, 0.0
    %v6382 = vadd.f32 %v6380, %v6381
    %v6383 = vrot.slane %v6382, 4
    %v6384 = vadd.f32 %v6382, %v6383
    %v6385 = vrot.slane %v6384, 2
    %v6386 = vadd.f32 %v6384, %v6385
    %v6387 = vrot.slane %v6386, 1
    %v6388 = vadd.f32 %v6386, %v6387
    %v6389 = vmul.f32 %v6388, 0.001953125
    %v6390 = vmul.f32 %v6063, %v6063
    %v6391 = vmul.f32 %v6066, %v6066
    %v6392 = vmul.f32 %v6069, %v6069
    %v6393 = vmul.f32 %v6072, %v6072
    %v6394 = vmul.f32 %v6075, %v6075
    %v6395 = vmul.f32 %v6078, %v6078
    %v6396 = vmul.f32 %v6081, %v6081
    %v6397 = vmul.f32 %v6084, %v6084
    %v6398 = vmul.f32 %v6087, %v6087
    %v6399 = vmul.f32 %v6090, %v6090
    %v6400 = vmul.f32 %v6093, %v6093
    %v6401 = vmul.f32 %v6096, %v6096
    %v6402 = vmul.f32 %v6099, %v6099
    %v6403 = vmul.f32 %v6102, %v6102
    %v6404 = vmul.f32 %v6105, %v6105
    %v6405 = vmul.f32 %v6108, %v6108
    %v6406 = vmul.f32 %v6111, %v6111
    %v6407 = vmul.f32 %v6114, %v6114
    %v6408 = vmul.f32 %v6117, %v6117
    %v6409 = vmul.f32 %v6120, %v6120
    %v6410 = vmul.f32 %v6123, %v6123
    %v6411 = vmul.f32 %v6126, %v6126
    %v6412 = vmul.f32 %v6129, %v6129
    %v6413 = vmul.f32 %v6132, %v6132
    %v6414 = vmul.f32 %v6135, %v6135
    %v6415 = vmul.f32 %v6138, %v6138
    %v6416 = vmul.f32 %v6141, %v6141
    %v6417 = vmul.f32 %v6144, %v6144
    %v6418 = vmul.f32 %v6147, %v6147
    %v6419 = vmul.f32 %v6150, %v6150
    %v6420 = vmul.f32 %v6153, %v6153
    %v6421 = vmul.f32 %v6156, %v6156
    %v6422 = vmul.f32 %v6159, %v6159
    %v6423 = vmul.f32 %v6162, %v6162
    %v6424 = vmul.f32 %v6165, %v6165
    %v6425 = vmul.f32 %v6168, %v6168
    %v6426 = vmul.f32 %v6171, %v6171
    %v6427 = vmul.f32 %v6174, %v6174
    %v6428 = vmul.f32 %v6177, %v6177
    %v6429 = vmul.f32 %v6180, %v6180
    %v6430 = vmul.f32 %v6183, %v6183
    %v6431 = vmul.f32 %v6186, %v6186
    %v6432 = vmul.f32 %v6189, %v6189
    %v6433 = vmul.f32 %v6192, %v6192
    %v6434 = vmul.f32 %v6195, %v6195
    %v6435 = vmul.f32 %v6198, %v6198
    %v6436 = vmul.f32 %v6201, %v6201
    %v6437 = vmul.f32 %v6204, %v6204
    %v6438 = vmul.f32 %v6207, %v6207
    %v6439 = vmul.f32 %v6210, %v6210
    %v6440 = vmul.f32 %v6213, %v6213
    %v6441 = vmul.f32 %v6216, %v6216
    %v6442 = vmul.f32 %v6219, %v6219
    %v6443 = vmul.f32 %v6222, %v6222
    %v6444 = vmul.f32 %v6225, %v6225
    %v6445 = vmul.f32 %v6228, %v6228
    %v6446 = vmul.f32 %v6231, %v6231
    %v6447 = vmul.f32 %v6234, %v6234
    %v6448 = vmul.f32 %v6237, %v6237
    %v6449 = vmul.f32 %v6240, %v6240
    %v6450 = vmul.f32 %v6243, %v6243
    %v6451 = vmul.f32 %v6246, %v6246
    %v6452 = vmul.f32 %v6249, %v6249
    %v6453 = vmul.f32 %v6252, %v6252
    %v6454 = vsel %vm1775, %v6390, 0.0
    %v6455 = vsel %vm1775, %v6391, 0.0
    %v6456 = vadd.f32 %v6454, %v6455
    %v6457 = vsel %vm1775, %v6392, 0.0
    %v6458 = vadd.f32 %v6456, %v6457
    %v6459 = vsel %vm1775, %v6393, 0.0
    %v6460 = vadd.f32 %v6458, %v6459
    %v6461 = vsel %vm1775, %v6394, 0.0
    %v6462 = vadd.f32 %v6460, %v6461
    %v6463 = vsel %vm1775, %v6395, 0.0
    %v6464 = vadd.f32 %v6462, %v6463
    %v6465 = vsel %vm1775, %v6396, 0.0
    %v6466 = vadd.f32 %v6464, %v6465
    %v6467 = vsel %vm1775, %v6397, 0.0
    %v6468 = vadd.f32 %v6466, %v6467
    %v6469 = vsel %vm1775, %v6398, 0.0
    %v6470 = vadd.f32 %v6468, %v6469
    %v6471 = vsel %vm1775, %v6399, 0.0
    %v6472 = vadd.f32 %v6470, %v6471
    %v6473 = vsel %vm1775, %v6400, 0.0
    %v6474 = vadd.f32 %v6472, %v6473
    %v6475 = vsel %vm1775, %v6401, 0.0
    %v6476 = vadd.f32 %v6474, %v6475
    %v6477 = vsel %vm1775, %v6402, 0.0
    %v6478 = vadd.f32 %v6476, %v6477
    %v6479 = vsel %vm1775, %v6403, 0.0
    %v6480 = vadd.f32 %v6478, %v6479
    %v6481 = vsel %vm1775, %v6404, 0.0
    %v6482 = vadd.f32 %v6480, %v6481
    %v6483 = vsel %vm1775, %v6405, 0.0
    %v6484 = vadd.f32 %v6482, %v6483
    %v6485 = vsel %vm1775, %v6406, 0.0
    %v6486 = vadd.f32 %v6484, %v6485
    %v6487 = vsel %vm1775, %v6407, 0.0
    %v6488 = vadd.f32 %v6486, %v6487
    %v6489 = vsel %vm1775, %v6408, 0.0
    %v6490 = vadd.f32 %v6488, %v6489
    %v6491 = vsel %vm1775, %v6409, 0.0
    %v6492 = vadd.f32 %v6490, %v6491
    %v6493 = vsel %vm1775, %v6410, 0.0
    %v6494 = vadd.f32 %v6492, %v6493
    %v6495 = vsel %vm1775, %v6411, 0.0
    %v6496 = vadd.f32 %v6494, %v6495
    %v6497 = vsel %vm1775, %v6412, 0.0
    %v6498 = vadd.f32 %v6496, %v6497
    %v6499 = vsel %vm1775, %v6413, 0.0
    %v6500 = vadd.f32 %v6498, %v6499
    %v6501 = vsel %vm1775, %v6414, 0.0
    %v6502 = vadd.f32 %v6500, %v6501
    %v6503 = vsel %vm1775, %v6415, 0.0
    %v6504 = vadd.f32 %v6502, %v6503
    %v6505 = vsel %vm1775, %v6416, 0.0
    %v6506 = vadd.f32 %v6504, %v6505
    %v6507 = vsel %vm1775, %v6417, 0.0
    %v6508 = vadd.f32 %v6506, %v6507
    %v6509 = vsel %vm1775, %v6418, 0.0
    %v6510 = vadd.f32 %v6508, %v6509
    %v6511 = vsel %vm1775, %v6419, 0.0
    %v6512 = vadd.f32 %v6510, %v6511
    %v6513 = vsel %vm1775, %v6420, 0.0
    %v6514 = vadd.f32 %v6512, %v6513
    %v6515 = vsel %vm1775, %v6421, 0.0
    %v6516 = vadd.f32 %v6514, %v6515
    %v6517 = vsel %vm1775, %v6422, 0.0
    %v6518 = vadd.f32 %v6516, %v6517
    %v6519 = vsel %vm1775, %v6423, 0.0
    %v6520 = vadd.f32 %v6518, %v6519
    %v6521 = vsel %vm1775, %v6424, 0.0
    %v6522 = vadd.f32 %v6520, %v6521
    %v6523 = vsel %vm1775, %v6425, 0.0
    %v6524 = vadd.f32 %v6522, %v6523
    %v6525 = vsel %vm1775, %v6426, 0.0
    %v6526 = vadd.f32 %v6524, %v6525
    %v6527 = vsel %vm1775, %v6427, 0.0
    %v6528 = vadd.f32 %v6526, %v6527
    %v6529 = vsel %vm1775, %v6428, 0.0
    %v6530 = vadd.f32 %v6528, %v6529
    %v6531 = vsel %vm1775, %v6429, 0.0
    %v6532 = vadd.f32 %v6530, %v6531
    %v6533 = vsel %vm1775, %v6430, 0.0
    %v6534 = vadd.f32 %v6532, %v6533
    %v6535 = vsel %vm1775, %v6431, 0.0
    %v6536 = vadd.f32 %v6534, %v6535
    %v6537 = vsel %vm1775, %v6432, 0.0
    %v6538 = vadd.f32 %v6536, %v6537
    %v6539 = vsel %vm1775, %v6433, 0.0
    %v6540 = vadd.f32 %v6538, %v6539
    %v6541 = vsel %vm1775, %v6434, 0.0
    %v6542 = vadd.f32 %v6540, %v6541
    %v6543 = vsel %vm1775, %v6435, 0.0
    %v6544 = vadd.f32 %v6542, %v6543
    %v6545 = vsel %vm1775, %v6436, 0.0
    %v6546 = vadd.f32 %v6544, %v6545
    %v6547 = vsel %vm1775, %v6437, 0.0
    %v6548 = vadd.f32 %v6546, %v6547
    %v6549 = vsel %vm1775, %v6438, 0.0
    %v6550 = vadd.f32 %v6548, %v6549
    %v6551 = vsel %vm1775, %v6439, 0.0
    %v6552 = vadd.f32 %v6550, %v6551
    %v6553 = vsel %vm1775, %v6440, 0.0
    %v6554 = vadd.f32 %v6552, %v6553
    %v6555 = vsel %vm1775, %v6441, 0.0
    %v6556 = vadd.f32 %v6554, %v6555
    %v6557 = vsel %vm1775, %v6442, 0.0
    %v6558 = vadd.f32 %v6556, %v6557
    %v6559 = vsel %vm1775, %v6443, 0.0
    %v6560 = vadd.f32 %v6558, %v6559
    %v6561 = vsel %vm1775, %v6444, 0.0
    %v6562 = vadd.f32 %v6560, %v6561
    %v6563 = vsel %vm1775, %v6445, 0.0
    %v6564 = vadd.f32 %v6562, %v6563
    %v6565 = vsel %vm1775, %v6446, 0.0
    %v6566 = vadd.f32 %v6564, %v6565
    %v6567 = vsel %vm1775, %v6447, 0.0
    %v6568 = vadd.f32 %v6566, %v6567
    %v6569 = vsel %vm1775, %v6448, 0.0
    %v6570 = vadd.f32 %v6568, %v6569
    %v6571 = vsel %vm1775, %v6449, 0.0
    %v6572 = vadd.f32 %v6570, %v6571
    %v6573 = vsel %vm1775, %v6450, 0.0
    %v6574 = vadd.f32 %v6572, %v6573
    %v6575 = vsel %vm1775, %v6451, 0.0
    %v6576 = vadd.f32 %v6574, %v6575
    %v6577 = vsel %vm1775, %v6452, 0.0
    %v6578 = vadd.f32 %v6576, %v6577
    %v6579 = vsel %vm1775, %v6453, 0.0
    %v6580 = vadd.f32 %v6578, %v6579
    %v6581 = vrot.slane %v6580, 4
    %v6582 = vadd.f32 %v6580, %v6581
    %v6583 = vrot.slane %v6582, 2
    %v6584 = vadd.f32 %v6582, %v6583
    %v6585 = vrot.slane %v6584, 1
    %v6586 = vadd.f32 %v6584, %v6585
    %v6587 = vmul.f32 %v6586, 0.001953125
    %v6588 = vmul.f32 %v6389, %v6389
    %v6589 = vsub.f32 %v6587, %v6588
    %v6590 = vadd.f32 %v6589, 1e-05
    %v6591 = vrsqrt.pop %v6590
    %v6592 = vmul.f32 %v6591, %v6590
    %v6593 = vmul.f32 %v6592, %v6591
    %v6594 = vmul.f32 0.5, %v6593
    %v6595 = vsub.f32 1.5, %v6594
    %v6596 = vmul.f32 %v6591, %v6595
    %vm6597 = vweird.f32 %v6590
    %vm6598 = vweird.f32 %v6591
    %vm6599 = vmor %vm6597, %vm6598
    %v6600 = vsel %vm6599, %v6591, %v6596
    %v6601 = vmul.f32 %v6254, %v6600
    %v6602 = vmul.f32 %v6389, %v6601
    %v6603 = vsub.f32 %v6255, %v6602
    %v6605 = vperm.slane %v6601, 0
    %v6607 = vmul.f32 %v6063, %v6605
    %v6608 = vmul.f32 %v6066, %v6605
    %v6609 = vmul.f32 %v6069, %v6605
    %v6610 = vmul.f32 %v6072, %v6605
    %v6611 = vmul.f32 %v6075, %v6605
    %v6612 = vmul.f32 %v6078, %v6605
    %v6613 = vmul.f32 %v6081, %v6605
    %v6614 = vmul.f32 %v6084, %v6605
    %v6615 = vmul.f32 %v6087, %v6605
    %v6616 = vmul.f32 %v6090, %v6605
    %v6617 = vmul.f32 %v6093, %v6605
    %v6618 = vmul.f32 %v6096, %v6605
    %v6619 = vmul.f32 %v6099, %v6605
    %v6620 = vmul.f32 %v6102, %v6605
    %v6621 = vmul.f32 %v6105, %v6605
    %v6622 = vmul.f32 %v6108, %v6605
    %v6623 = vmul.f32 %v6111, %v6605
    %v6624 = vmul.f32 %v6114, %v6605
    %v6625 = vmul.f32 %v6117, %v6605
    %v6626 = vmul.f32 %v6120, %v6605
    %v6627 = vmul.f32 %v6123, %v6605
    %v6628 = vmul.f32 %v6126, %v6605
    %v6629 = vmul.f32 %v6129, %v6605
    %v6630 = vmul.f32 %v6132, %v6605
    %v6631 = vmul.f32 %v6135, %v6605
    %v6632 = vmul.f32 %v6138, %v6605
    %v6633 = vmul.f32 %v6141, %v6605
    %v6634 = vmul.f32 %v6144, %v6605
    %v6635 = vmul.f32 %v6147, %v6605
    %v6636 = vmul.f32 %v6150, %v6605
    %v6637 = vmul.f32 %v6153, %v6605
    %v6638 = vmul.f32 %v6156, %v6605
    %v6639 = vmul.f32 %v6159, %v6605
    %v6640 = vmul.f32 %v6162, %v6605
    %v6641 = vmul.f32 %v6165, %v6605
    %v6642 = vmul.f32 %v6168, %v6605
    %v6643 = vmul.f32 %v6171, %v6605
    %v6644 = vmul.f32 %v6174, %v6605
    %v6645 = vmul.f32 %v6177, %v6605
    %v6646 = vmul.f32 %v6180, %v6605
    %v6647 = vmul.f32 %v6183, %v6605
    %v6648 = vmul.f32 %v6186, %v6605
    %v6649 = vmul.f32 %v6189, %v6605
    %v6650 = vmul.f32 %v6192, %v6605
    %v6651 = vmul.f32 %v6195, %v6605
    %v6652 = vmul.f32 %v6198, %v6605
    %v6653 = vmul.f32 %v6201, %v6605
    %v6654 = vmul.f32 %v6204, %v6605
    %v6655 = vmul.f32 %v6207, %v6605
    %v6656 = vmul.f32 %v6210, %v6605
    %v6657 = vmul.f32 %v6213, %v6605
    %v6658 = vmul.f32 %v6216, %v6605
    %v6659 = vmul.f32 %v6219, %v6605
    %v6660 = vmul.f32 %v6222, %v6605
    %v6661 = vmul.f32 %v6225, %v6605
    %v6662 = vmul.f32 %v6228, %v6605
    %v6663 = vmul.f32 %v6231, %v6605
    %v6664 = vmul.f32 %v6234, %v6605
    %v6665 = vmul.f32 %v6237, %v6605
    %v6666 = vmul.f32 %v6240, %v6605
    %v6667 = vmul.f32 %v6243, %v6605
    %v6668 = vmul.f32 %v6246, %v6605
    %v6669 = vmul.f32 %v6249, %v6605
    %v6670 = vmul.f32 %v6252, %v6605
    %v6672 = vperm.slane %v6603, 0
    %v6674 = vadd.f32 %v6607, %v6672
    %v6675 = vadd.f32 %v6608, %v6672
    %v6676 = vadd.f32 %v6609, %v6672
    %v6677 = vadd.f32 %v6610, %v6672
    %v6678 = vadd.f32 %v6611, %v6672
    %v6679 = vadd.f32 %v6612, %v6672
    %v6680 = vadd.f32 %v6613, %v6672
    %v6681 = vadd.f32 %v6614, %v6672
    %v6682 = vadd.f32 %v6615, %v6672
    %v6683 = vadd.f32 %v6616, %v6672
    %v6684 = vadd.f32 %v6617, %v6672
    %v6685 = vadd.f32 %v6618, %v6672
    %v6686 = vadd.f32 %v6619, %v6672
    %v6687 = vadd.f32 %v6620, %v6672
    %v6688 = vadd.f32 %v6621, %v6672
    %v6689 = vadd.f32 %v6622, %v6672
    %v6690 = vadd.f32 %v6623, %v6672
    %v6691 = vadd.f32 %v6624, %v6672
    %v6692 = vadd.f32 %v6625, %v6672
    %v6693 = vadd.f32 %v6626, %v6672
    %v6694 = vadd.f32 %v6627, %v6672
    %v6695 = vadd.f32 %v6628, %v6672
    %v6696 = vadd.f32 %v6629, %v6672
    %v6697 = vadd.f32 %v6630, %v6672
    %v6698 = vadd.f32 %v6631, %v6672
    %v6699 = vadd.f32 %v6632, %v6672
    %v6700 = vadd.f32 %v6633, %v6672
    %v6701 = vadd.f32 %v6634, %v6672
    %v6702 = vadd.f32 %v6635, %v6672
    %v6703 = vadd.f32 %v6636, %v6672
    %v6704 = vadd.f32 %v6637, %v6672
    %v6705 = vadd.f32 %v6638, %v6672
    %v6706 = vadd.f32 %v6639, %v6672
    %v6707 = vadd.f32 %v6640, %v6672
    %v6708 = vadd.f32 %v6641, %v6672
    %v6709 = vadd.f32 %v6642, %v6672
    %v6710 = vadd.f32 %v6643, %v6672
    %v6711 = vadd.f32 %v6644, %v6672
    %v6712 = vadd.f32 %v6645, %v6672
    %v6713 = vadd.f32 %v6646, %v6672
    %v6714 = vadd.f32 %v6647, %v6672
    %v6715 = vadd.f32 %v6648, %v6672
    %v6716 = vadd.f32 %v6649, %v6672
    %v6717 = vadd.f32 %v6650, %v6672
    %v6718 = vadd.f32 %v6651, %v6672
    %v6719 = vadd.f32 %v6652, %v6672
    %v6720 = vadd.f32 %v6653, %v6672
    %v6721 = vadd.f32 %v6654, %v6672
    %v6722 = vadd.f32 %v6655, %v6672
    %v6723 = vadd.f32 %v6656, %v6672
    %v6724 = vadd.f32 %v6657, %v6672
    %v6725 = vadd.f32 %v6658, %v6672
    %v6726 = vadd.f32 %v6659, %v6672
    %v6727 = vadd.f32 %v6660, %v6672
    %v6728 = vadd.f32 %v6661, %v6672
    %v6729 = vadd.f32 %v6662, %v6672
    %v6730 = vadd.f32 %v6663, %v6672
    %v6731 = vadd.f32 %v6664, %v6672
    %v6732 = vadd.f32 %v6665, %v6672
    %v6733 = vadd.f32 %v6666, %v6672
    %v6734 = vadd.f32 %v6667, %v6672
    %v6735 = vadd.f32 %v6668, %v6672
    %v6736 = vadd.f32 %v6669, %v6672
    %v6737 = vadd.f32 %v6670, %v6672
    %v6738 = vadd.f32 %v27, %v6674
    %v6739 = vadd.f32 %v28, %v6675
    %v6740 = vadd.f32 %v29, %v6676
    %v6741 = vadd.f32 %v30, %v6677
    %v6742 = vadd.f32 %v31, %v6678
    %v6743 = vadd.f32 %v32, %v6679
    %v6744 = vadd.f32 %v33, %v6680
    %v6745 = vadd.f32 %v34, %v6681
    %v6746 = vadd.f32 %v35, %v6682
    %v6747 = vadd.f32 %v36, %v6683
    %v6748 = vadd.f32 %v37, %v6684
    %v6749 = vadd.f32 %v38, %v6685
    %v6750 = vadd.f32 %v39, %v6686
    %v6751 = vadd.f32 %v40, %v6687
    %v6752 = vadd.f32 %v41, %v6688
    %v6753 = vadd.f32 %v42, %v6689
    %v6754 = vadd.f32 %v43, %v6690
    %v6755 = vadd.f32 %v44, %v6691
    %v6756 = vadd.f32 %v45, %v6692
    %v6757 = vadd.f32 %v46, %v6693
    %v6758 = vadd.f32 %v47, %v6694
    %v6759 = vadd.f32 %v48, %v6695
    %v6760 = vadd.f32 %v49, %v6696
    %v6761 = vadd.f32 %v50, %v6697
    %v6762 = vadd.f32 %v51, %v6698
    %v6763 = vadd.f32 %v52, %v6699
    %v6764 = vadd.f32 %v53, %v6700
    %v6765 = vadd.f32 %v54, %v6701
    %v6766 = vadd.f32 %v55, %v6702
    %v6767 = vadd.f32 %v56, %v6703
    %v6768 = vadd.f32 %v57, %v6704
    %v6769 = vadd.f32 %v58, %v6705
    %v6770 = vadd.f32 %v59, %v6706
    %v6771 = vadd.f32 %v60, %v6707
    %v6772 = vadd.f32 %v61, %v6708
    %v6773 = vadd.f32 %v62, %v6709
    %v6774 = vadd.f32 %v63, %v6710
    %v6775 = vadd.f32 %v64, %v6711
    %v6776 = vadd.f32 %v65, %v6712
    %v6777 = vadd.f32 %v66, %v6713
    %v6778 = vadd.f32 %v67, %v6714
    %v6779 = vadd.f32 %v68, %v6715
    %v6780 = vadd.f32 %v69, %v6716
    %v6781 = vadd.f32 %v70, %v6717
    %v6782 = vadd.f32 %v71, %v6718
    %v6783 = vadd.f32 %v72, %v6719
    %v6784 = vadd.f32 %v73, %v6720
    %v6785 = vadd.f32 %v74, %v6721
    %v6786 = vadd.f32 %v75, %v6722
    %v6787 = vadd.f32 %v76, %v6723
    %v6788 = vadd.f32 %v77, %v6724
    %v6789 = vadd.f32 %v78, %v6725
    %v6790 = vadd.f32 %v79, %v6726
    %v6791 = vadd.f32 %v80, %v6727
    %v6792 = vadd.f32 %v81, %v6728
    %v6793 = vadd.f32 %v82, %v6729
    %v6794 = vadd.f32 %v83, %v6730
    %v6795 = vadd.f32 %v84, %v6731
    %v6796 = vadd.f32 %v85, %v6732
    %v6797 = vadd.f32 %v86, %v6733
    %v6798 = vadd.f32 %v87, %v6734
    %v6799 = vadd.f32 %v88, %v6735
    %v6800 = vadd.f32 %v89, %v6736
    %v6801 = vadd.f32 %v90, %v6737
    %6802 = vst.msk [vmem:[#allocation2] sm:$0xff] %vm1775, %v6738
    %6803 = vst.msk [vmem:[#allocation2 + $0x8] sm:$0xff] %vm1775, %v6739
    %6804 = vst.msk [vmem:[#allocation2 + $0x10] sm:$0xff] %vm1775, %v6740
    %6805 = vst.msk [vmem:[#allocation2 + $0x18] sm:$0xff] %vm1775, %v6741
    %6806 = vst.msk [vmem:[#allocation2 + $0x20] sm:$0xff] %vm1775, %v6742
    %6807 = vst.msk [vmem:[#allocation2 + $0x28] sm:$0xff] %vm1775, %v6743
    %6808 = vst.msk [vmem:[#allocation2 + $0x30] sm:$0xff] %vm1775, %v6744
    %6809 = vst.msk [vmem:[#allocation2 + $0x38] sm:$0xff] %vm1775, %v6745
    %6810 = vst.msk [vmem:[#allocation2 + $0x40] sm:$0xff] %vm1775, %v6746
    %6811 = vst.msk [vmem:[#allocation2 + $0x48] sm:$0xff] %vm1775, %v6747
    %6812 = vst.msk [vmem:[#allocation2 + $0x50] sm:$0xff] %vm1775, %v6748
    %6813 = vst.msk [vmem:[#allocation2 + $0x58] sm:$0xff] %vm1775, %v6749
    %6814 = vst.msk [vmem:[#allocation2 + $0x60] sm:$0xff] %vm1775, %v6750
    %6815 = vst.msk [vmem:[#allocation2 + $0x68] sm:$0xff] %vm1775, %v6751
    %6816 = vst.msk [vmem:[#allocation2 + $0x70] sm:$0xff] %vm1775, %v6752
    %6817 = vst.msk [vmem:[#allocation2 + $0x78] sm:$0xff] %vm1775, %v6753
    %6818 = vst.msk [vmem:[#allocation2 + $0x80] sm:$0xff] %vm1775, %v6754
    %6819 = vst.msk [vmem:[#allocation2 + $0x88] sm:$0xff] %vm1775, %v6755
    %6820 = vst.msk [vmem:[#allocation2 + $0x90] sm:$0xff] %vm1775, %v6756
    %6821 = vst.msk [vmem:[#allocation2 + $0x98] sm:$0xff] %vm1775, %v6757
    %6822 = vst.msk [vmem:[#allocation2 + $0xa0] sm:$0xff] %vm1775, %v6758
    %6823 = vst.msk [vmem:[#allocation2 + $0xa8] sm:$0xff] %vm1775, %v6759
    %6824 = vst.msk [vmem:[#allocation2 + $0xb0] sm:$0xff] %vm1775, %v6760
    %6825 = vst.msk [vmem:[#allocation2 + $0xb8] sm:$0xff] %vm1775, %v6761
    %6826 = vst.msk [vmem:[#allocation2 + $0xc0] sm:$0xff] %vm1775, %v6762
    %6827 = vst.msk [vmem:[#allocation2 + $0xc8] sm:$0xff] %vm1775, %v6763
    %6828 = vst.msk [vmem:[#allocation2 + $0xd0] sm:$0xff] %vm1775, %v6764
    %6829 = vst.msk [vmem:[#allocation2 + $0xd8] sm:$0xff] %vm1775, %v6765
    %6830 = vst.msk [vmem:[#allocation2 + $0xe0] sm:$0xff] %vm1775, %v6766
    %6831 = vst.msk [vmem:[#allocation2 + $0xe8] sm:$0xff] %vm1775, %v6767
    %6832 = vst.msk [vmem:[#allocation2 + $0xf0] sm:$0xff] %vm1775, %v6768
    %6833 = vst.msk [vmem:[#allocation2 + $0xf8] sm:$0xff] %vm1775, %v6769
    %6834 = vst.msk [vmem:[#allocation2 + $0x100] sm:$0xff] %vm1775, %v6770
    %6835 = vst.msk [vmem:[#allocation2 + $0x108] sm:$0xff] %vm1775, %v6771
    %6836 = vst.msk [vmem:[#allocation2 + $0x110] sm:$0xff] %vm1775, %v6772
    %6837 = vst.msk [vmem:[#allocation2 + $0x118] sm:$0xff] %vm1775, %v6773
    %6838 = vst.msk [vmem:[#allocation2 + $0x120] sm:$0xff] %vm1775, %v6774
    %6839 = vst.msk [vmem:[#allocation2 + $0x128] sm:$0xff] %vm1775, %v6775
    %6840 = vst.msk [vmem:[#allocation2 + $0x130] sm:$0xff] %vm1775, %v6776
    %6841 = vst.msk [vmem:[#allocation2 + $0x138] sm:$0xff] %vm1775, %v6777
    %6842 = vst.msk [vmem:[#allocation2 + $0x140] sm:$0xff] %vm1775, %v6778
    %6843 = vst.msk [vmem:[#allocation2 + $0x148] sm:$0xff] %vm1775, %v6779
    %6844 = vst.msk [vmem:[#allocation2 + $0x150] sm:$0xff] %vm1775, %v6780
    %6845 = vst.msk [vmem:[#allocation2 + $0x158] sm:$0xff] %vm1775, %v6781
    %6846 = vst.msk [vmem:[#allocation2 + $0x160] sm:$0xff] %vm1775, %v6782
    %6847 = vst.msk [vmem:[#allocation2 + $0x168] sm:$0xff] %vm1775, %v6783
    %6848 = vst.msk [vmem:[#allocation2 + $0x170] sm:$0xff] %vm1775, %v6784
    %6849 = vst.msk [vmem:[#allocation2 + $0x178] sm:$0xff] %vm1775, %v6785
    %6850 = vst.msk [vmem:[#allocation2 + $0x180] sm:$0xff] %vm1775, %v6786
    %6851 = vst.msk [vmem:[#allocation2 + $0x188] sm:$0xff] %vm1775, %v6787
    %6852 = vst.msk [vmem:[#allocation2 + $0x190] sm:$0xff] %vm1775, %v6788
    %6853 = vst.msk [vmem:[#allocation2 + $0x198] sm:$0xff] %vm1775, %v6789
    %6854 = vst.msk [vmem:[#allocation2 + $0x1a0] sm:$0xff] %vm1775, %v6790
    %6855 = vst.msk [vmem:[#allocation2 + $0x1a8] sm:$0xff] %vm1775, %v6791
    %6856 = vst.msk [vmem:[#allocation2 + $0x1b0] sm:$0xff] %vm1775, %v6792
    %6857 = vst.msk [vmem:[#allocation2 + $0x1b8] sm:$0xff] %vm1775, %v6793
    %6858 = vst.msk [vmem:[#allocation2 + $0x1c0] sm:$0xff] %vm1775, %v6794
    %6859 = vst.msk [vmem:[#allocation2 + $0x1c8] sm:$0xff] %vm1775, %v6795
    %6860 = vst.msk [vmem:[#allocation2 + $0x1d0] sm:$0xff] %vm1775, %v6796
    %6861 = vst.msk [vmem:[#allocation2 + $0x1d8] sm:$0xff] %vm1775, %v6797
    %6862 = vst.msk [vmem:[#allocation2 + $0x1e0] sm:$0xff] %vm1775, %v6798
    %6863 = vst.msk [vmem:[#allocation2 + $0x1e8] sm:$0xff] %vm1775, %v6799
    %6864 = vst.msk [vmem:[#allocation2 + $0x1f0] sm:$0xff] %vm1775, %v6800
    %6865 = vst.msk [vmem:[#allocation2 + $0x1f8] sm:$0xff] %vm1775, %v6801
    // Predicated region
    $region30: #{resnet_block_forward.1} parent=1 // pred_check
      _
    $region31: #{resnet_block_forward.1} parent=1 // pred_check_branch
      %6867 = sbr.rel (0) target = $region33
    $region32: #{resnet_block_forward.1} parent=1 // pred_region
      %6869 = vsyncadd [#allocation3], 0
      %s6870 = sshll.u32 [#allocation2], 4
      %s6871 = int_to_ptr.vmem [resolvable:$true] %s6870
      %s6872 = sshll.u32 %s7, 4
      %s6873 = int_to_ptr.hbm [resolvable:$true] %s6872
      %6878 = dma.vmem_to_hbm [thread:$0]  %s6871, 8192, %s6873, [#allocation3], 128, 128, 8
    $region33: #{resnet_block_forward.1} parent=1 // pred_fallthru
      _
    // Predicated region
    $region34: #{resnet_block_forward.1} parent=1 // pred_check
      _
    $region35: #{resnet_block_forward.1} parent=1 // pred_check_branch
      %6880 = sbr.rel (0) target = $region37
    $region36: #{resnet_block_forward.1} parent=1 // pred_region
      %6882 = dma.done [#allocation3], 8192
    $region37: #{resnet_block_forward.1} parent=1 // pred_fallthru
      _
    %6883 = vsyncpa [#allocation3], 1

</llo_original>
